<compile_context>
chip_gen: v6e
topology: v6e:2x2x1
jax: 0.10.0
libtpu: 0.0.40
codegen_flags: <defaults>
</compile_context>

<pallas_src>
import jax
import jax.numpy as jnp
from jax import lax
from jax.experimental import pallas as pl
from jax.experimental.pallas import tpu as pltpu

V_THRESHOLD = 0.5   # IFNode firing threshold (BrainCog default)
DECAY = 0.99        # pre-synaptic (tracein) decay
DECAY2 = 0.99       # post-synaptic (traceout) decay


def _drive(x1_seq, x2_seq, w1, w2):
    """State-free synaptic drive i_t = x1_t @ W1^T + x2_t @ W2^T, full f32."""
    hi = lax.Precision.HIGHEST
    return (jnp.einsum("tbd,nd->tbn", x1_seq, w1, precision=hi)
            + jnp.einsum("tbd,nd->tbn", x2_seq, w2, precision=hi))


def full_stdp_kernel(x1_ref, x2_ref, i_ref, tin1_0_ref, tin2_0_ref, tout0_ref,  # inputs
                     s_ref, dw2a_ref, dw2b_ref, dw1a_ref, dw1b_ref,              # streamed outs
                     tin1_ref, tin2_ref, tout_ref,                               # resident outs
                     mem_ref):                                                   # scratch
    g = pl.program_id(0)
    tb = x1_ref.shape[0]
    bf16 = jnp.bfloat16
    f32 = jnp.float32

    # Initialize the VMEM-resident carried state at the start of the sequence.
    @pl.when(g == 0)
    def _init():
        tin1_ref[...] = tin1_0_ref[...]
        tin2_ref[...] = tin2_0_ref[...]
        tout_ref[...] = tout0_ref[...]
        mem_ref[...] = jnp.zeros_like(mem_ref)   # node freshly reset before the sequence

    def step(k, carry):
        x1 = x1_ref[k]          # (B, D1) f32 spikes
        x2 = x2_ref[k]          # (B, D2) f32 spikes
        drive = i_ref[k]        # (B, N)  f32, precomputed x @ W^T (both connections)

        # Stateful IF node: integrate, strict-threshold spike, hard reset.
        mem = mem_ref[...] + drive
        s = (mem > V_THRESHOLD).astype(f32)
        mem_ref[...] = mem * (1.0 - s)

        # cal_traceout returns the decayed OLD trace (before adding s).
        tout_pre = tout_ref[...] * DECAY2

        # dw1_k = traceout_pre^T @ x_k  (contract batch) -> (N, D_k); bf16 MXU, f32 acc.
        tp_bf = tout_pre.astype(bf16)
        dw1a_ref[k] = lax.dot_general(tp_bf, x1.astype(bf16),
                                      (((0,), (0,)), ((), ())),
                                      preferred_element_type=f32)
        dw1b_ref[k] = lax.dot_general(tp_bf, x2.astype(bf16),
                                      (((0,), (0,)), ((), ())),
                                      preferred_element_type=f32)

        # cal_tracein: f32 state update (x is exact 0/1, casts below are lossless).
        tin1 = tin1_ref[...] * DECAY + x1
        tin2 = tin2_ref[...] * DECAY + x2

        # dw2_k = s^T @ tracein_k -> (N, D_k); bf16 MXU operands, f32 accumulation.
        s_bf = s.astype(bf16)
        dw2a_ref[k] = lax.dot_general(s_bf, tin1.astype(bf16),
                                      (((0,), (0,)), ((), ())),
                                      preferred_element_type=f32)
        dw2b_ref[k] = lax.dot_general(s_bf, tin2.astype(bf16),
                                      (((0,), (0,)), ((), ())),
                                      preferred_element_type=f32)

        # Per-step output + updated module state (resident; flushed once at the end).
        s_ref[k] = s
        tin1_ref[...] = tin1
        tin2_ref[...] = tin2
        tout_ref[...] = tout_pre + s
        return carry

    lax.fori_loop(0, tb, step, 0, unroll=True)


def full_stdp_forward(x1_seq, x2_seq, w1, w2, tin1, tin2, tout, *, block_t=None):
    """Run FullSTDP.forward over T timesteps in one kernel launch.

    x1_seq, x2_seq : [T, B, D1], [T, B, D2]  input spikes per connection/timestep (f32)
    w1, w2         : [N, D1], [N, D2]        nn.Linear weights ([out, in], f32, no bias)
    tin1, tin2     : [B, D1], [B, D2]        pre-synaptic trace state (f32)
    tout           : [B, N]                  post-synaptic trace state (f32)
    Returns (s_seq, (dw2_1, dw2_2), (dw1_1, dw1_2), (tin1', tin2'), tout').
    Pass zero traces to reproduce a freshly constructed module.  For a true in-place
    state update, donate tin1/tin2/tout at the jit boundary (they are I/O-aliased).
    """
    T, B, D1 = x1_seq.shape
    D2 = x2_seq.shape[-1]
    N = w1.shape[0]
    f32 = jnp.float32

    if block_t is None:
        block_t = next(tb for tb in (4, 8, 2, 1) if T % tb == 0)
    tb = block_t
    assert T % tb == 0, "block_t must divide T"

    # Hoist the state-free drive matmul out of the sequential kernel (amortizes the
    # weight over all T*B rows; the kernel no longer touches W at all).
    i_seq = _drive(x1_seq, x2_seq, w1, w2)                       # [T, B, N] f32

    out_shapes = (
        jax.ShapeDtypeStruct((T, B, N), f32),     # s per step
        jax.ShapeDtypeStruct((T, N, D1), f32),    # dw2 (connection 1)
        jax.ShapeDtypeStruct((T, N, D2), f32),    # dw2 (connection 2)
        jax.ShapeDtypeStruct((T, N, D1), f32),    # dw1 (connection 1)
        jax.ShapeDtypeStruct((T, N, D2), f32),    # dw1 (connection 2)
        jax.ShapeDtypeStruct((B, D1), f32),       # tin1'  (aliases input)
        jax.ShapeDtypeStruct((B, D2), f32),       # tin2'  (aliases input)
        jax.ShapeDtypeStruct((B, N), f32),        # tout'  (aliases input)
    )
    in_specs = [
        pl.BlockSpec((tb, B, D1), lambda g: (g, 0, 0)),   # x1 block, streamed
        pl.BlockSpec((tb, B, D2), lambda g: (g, 0, 0)),   # x2 block, streamed
        pl.BlockSpec((tb, B, N), lambda g: (g, 0, 0)),    # drive block, streamed
        pl.BlockSpec((B, D1), lambda g: (0, 0)),          # initial tin1 (read once)
        pl.BlockSpec((B, D2), lambda g: (0, 0)),          # initial tin2 (read once)
        pl.BlockSpec((B, N), lambda g: (0, 0)),           # initial tout (read once)
    ]
    out_specs = (
        pl.BlockSpec((tb, B, N), lambda g: (g, 0, 0)),
        pl.BlockSpec((tb, N, D1), lambda g: (g, 0, 0)),
        pl.BlockSpec((tb, N, D2), lambda g: (g, 0, 0)),
        pl.BlockSpec((tb, N, D1), lambda g: (g, 0, 0)),
        pl.BlockSpec((tb, N, D2), lambda g: (g, 0, 0)),
        pl.BlockSpec((B, D1), lambda g: (0, 0)),          # resident across T
        pl.BlockSpec((B, D2), lambda g: (0, 0)),          # resident across T
        pl.BlockSpec((B, N), lambda g: (0, 0)),           # resident across T
    )

    # Rough VMEM budget (double-buffered streams + resident state), with headroom;
    # keep the limit <= v7x's 64 MiB physical VMEM.
    vmem_bytes = 4 * (2 * tb * B * (D1 + D2 + 2 * N)
                      + 2 * tb * 2 * N * (D1 + D2)
                      + 6 * B * (D1 + D2 + N))
    vmem_limit = int(min(max(2 * vmem_bytes, 32 << 20), 64 << 20))

    flops = 4 * T * B * N * (D1 + D2)                      # the in-kernel dw outer products
    bytes_accessed = 4 * (T * B * (D1 + D2 + 2 * N)        # x1, x2, drive in + s out
                          + 2 * T * N * (D1 + D2)          # dw1 + dw2 out
                          + 2 * B * (D1 + D2 + N))         # traces in/out

    outs = pl.pallas_call(
        full_stdp_kernel,
        out_shape=out_shapes,
        grid=(T // tb,),
        in_specs=in_specs,
        out_specs=out_specs,
        scratch_shapes=[pltpu.VMEM((B, N), f32)],          # IF membrane, carried over T
        input_output_aliases={3: 5, 4: 6, 5: 7},           # tin1, tin2, tout updated in place
        compiler_params=pltpu.CompilerParams(
            dimension_semantics=("arbitrary",),
            vmem_limit_bytes=vmem_limit),
        cost_estimate=pl.CostEstimate(flops=flops, transcendentals=0,
                                      bytes_accessed=bytes_accessed),
    )(x1_seq, x2_seq, i_seq, tin1, tin2, tout)

    s_seq, dw2a, dw2b, dw1a, dw1b, tin1_new, tin2_new, tout_new = outs
    return s_seq, (dw2a, dw2b), (dw1a, dw1b), (tin1_new, tin2_new), tout_new


def _reference(x1_seq, x2_seq, w1, w2, tin1_0, tin2_0, tout0):
    """Pure-JAX reference stepping the module forward T times; mirrors the kernel's
    mixed precision (f32 drive/state, bf16 MXU operands for the dw outer products)."""
    T = x1_seq.shape[0]
    bf16, f32 = jnp.bfloat16, jnp.float32
    i_seq = _drive(x1_seq, x2_seq, w1, w2)
    tin1, tin2, tout = tin1_0, tin2_0, tout0
    mem = jnp.zeros_like(tout0)
    s_l, dw2a_l, dw2b_l, dw1a_l, dw1b_l = [], [], [], [], []
    for t in range(T):
        x1, x2, drive = x1_seq[t], x2_seq[t], i_seq[t]
        mem = mem + drive
        s = (mem > V_THRESHOLD).astype(f32)
        mem = mem * (1.0 - s)
        tout_pre = DECAY2 * tout
        dw1a = jnp.dot(tout_pre.astype(bf16).T, x1.astype(bf16), preferred_element_type=f32)
        dw1b = jnp.dot(tout_pre.astype(bf16).T, x2.astype(bf16), preferred_element_type=f32)
        tin1 = DECAY * tin1 + x1
        tin2 = DECAY * tin2 + x2
        dw2a = jnp.dot(s.astype(bf16).T, tin1.astype(bf16), preferred_element_type=f32)
        dw2b = jnp.dot(s.astype(bf16).T, tin2.astype(bf16), preferred_element_type=f32)
        tout = tout_pre + s
        s_l.append(s); dw2a_l.append(dw2a); dw2b_l.append(dw2b)
        dw1a_l.append(dw1a); dw1b_l.append(dw1b)
    return (jnp.stack(s_l),
            (jnp.stack(dw2a_l), jnp.stack(dw2b_l)),
            (jnp.stack(dw1a_l), jnp.stack(dw1b_l)),
            (tin1, tin2), tout)


if __name__ == "__main__":
    key = jax.random.PRNGKey(0)
    kx1, kx2, kw1, kw2, kt1, kt2, kt3 = jax.random.split(key, 7)

    # Two Linear connections (D1 -> N) and (D2 -> N), T timesteps.
    # 128-multiples keep every store lane-dense (unmasked vst) on all generations.
    T, B, D1, D2, N = 8, 8, 128, 128, 128

    # Binary spike trains (typical STDP inputs), float32.
    x1_seq = (jax.random.uniform(kx1, (T, B, D1)) > 0.7).astype(jnp.float32)
    x2_seq = (jax.random.uniform(kx2, (T, B, D2)) > 0.7).astype(jnp.float32)

    # nn.Linear weights ([out, in]) and pre-existing trace state.
    w1 = 0.1 * jax.random.normal(kw1, (N, D1), dtype=jnp.float32)
    w2 = 0.1 * jax.random.normal(kw2, (N, D2), dtype=jnp.float32)
    tin1_0 = jax.random.uniform(kt1, (B, D1), dtype=jnp.float32)
    tin2_0 = jax.random.uniform(kt2, (B, D2), dtype=jnp.float32)
    tout_0 = jax.random.uniform(kt3, (B, N), dtype=jnp.float32)

    refs = _reference(x1_seq, x2_seq, w1, w2, tin1_0, tin2_0, tout_0)

    fwd = jax.jit(full_stdp_forward)
    outs = jax.block_until_ready(fwd(x1_seq, x2_seq, w1, w2, tin1_0, tin2_0, tout_0))

    got_flat = jax.tree_util.tree_leaves(outs)
    want_flat = jax.tree_util.tree_leaves(refs)
    assert len(got_flat) == len(want_flat)
    for got, want in zip(got_flat, want_flat):
        assert got.shape == want.shape and got.dtype == want.dtype
        tol = 2e-3 * (1.0 + float(jnp.max(jnp.abs(want))))
        assert float(jnp.max(jnp.abs(got - want))) < tol, float(jnp.max(jnp.abs(got - want)))

    print("KERNEL_OK")
</pallas_src>

<mosaic_0001>
module attributes {stable_mosaic.version = 11 : i64} {
  func.func @full_stdp_kernel(%arg0: i32, %arg1: memref<4x8x128xf32, #tpu.memory_space<vmem>>, %arg2: memref<4x8x128xf32, #tpu.memory_space<vmem>>, %arg3: memref<4x8x128xf32, #tpu.memory_space<vmem>>, %arg4: memref<8x128xf32, #tpu.memory_space<vmem>>, %arg5: memref<8x128xf32, #tpu.memory_space<vmem>>, %arg6: memref<8x128xf32, #tpu.memory_space<vmem>>, %arg7: memref<4x8x128xf32, #tpu.memory_space<vmem>>, %arg8: memref<4x128x128xf32, #tpu.memory_space<vmem>>, %arg9: memref<4x128x128xf32, #tpu.memory_space<vmem>>, %arg10: memref<4x128x128xf32, #tpu.memory_space<vmem>>, %arg11: memref<4x128x128xf32, #tpu.memory_space<vmem>>, %arg12: memref<8x128xf32, #tpu.memory_space<vmem>>, %arg13: memref<8x128xf32, #tpu.memory_space<vmem>>, %arg14: memref<8x128xf32, #tpu.memory_space<vmem>>, %arg15: memref<8x128xf32, #tpu.memory_space<vmem>>) attributes {dimension_semantics = [#tpu.dimension_semantics<arbitrary>], iteration_bounds = array<i64: 2>, scalar_prefetch = 0 : i64, scratch_operands = 1 : i64, tpu.core_type = #tpu.core_type<tc>, window_params = [{transform_indices = @transform_0, window_bounds = array<i64: 4, 8, 128>}, {transform_indices = @transform_1, window_bounds = array<i64: 4, 8, 128>}, {transform_indices = @transform_2, window_bounds = array<i64: 4, 8, 128>}, {pipeline_mode = #tpu.pipeline_mode<synchronous>, transform_indices = @transform_3, window_bounds = array<i64: 8, 128>}, {pipeline_mode = #tpu.pipeline_mode<synchronous>, transform_indices = @transform_4, window_bounds = array<i64: 8, 128>}, {pipeline_mode = #tpu.pipeline_mode<synchronous>, transform_indices = @transform_5, window_bounds = array<i64: 8, 128>}, {transform_indices = @transform_6, window_bounds = array<i64: 4, 8, 128>}, {transform_indices = @transform_7, window_bounds = array<i64: 4, 128, 128>}, {transform_indices = @transform_8, window_bounds = array<i64: 4, 128, 128>}, {transform_indices = @transform_9, window_bounds = array<i64: 4, 128, 128>}, {transform_indices = @transform_10, window_bounds = array<i64: 4, 128, 128>}, {pipeline_mode = #tpu.pipeline_mode<synchronous>, transform_indices = @transform_11, window_bounds = array<i64: 8, 128>}, {pipeline_mode = #tpu.pipeline_mode<synchronous>, transform_indices = @transform_12, window_bounds = array<i64: 8, 128>}, {pipeline_mode = #tpu.pipeline_mode<synchronous>, transform_indices = @transform_13, window_bounds = array<i64: 8, 128>}]} {
    %c0_i32 = arith.constant 0 : i32
    %0 = arith.cmpi eq, %arg0, %c0_i32 : i32
    %1 = arith.extui %0 : i1 to i32
    %c0_i32_0 = arith.constant 0 : i32
    %2 = arith.cmpi ne, %1, %c0_i32_0 : i32
    scf.if %2 {
      %c0_164 = arith.constant 0 : index
      %c0_165 = arith.constant 0 : index
      %259 = vector.load %arg4[%c0_164, %c0_165] : memref<8x128xf32, #tpu.memory_space<vmem>>, vector<8x128xf32>
      %c0_166 = arith.constant 0 : index
      %c0_167 = arith.constant 0 : index
      %260 = vector.load %arg12[%c0_166, %c0_167] : memref<8x128xf32, #tpu.memory_space<vmem>>, vector<8x128xf32>
      tpu.vector_store %arg12[%c0_166, %c0_167], %259 {strides = array<i32>} : memref<8x128xf32, #tpu.memory_space<vmem>>, vector<8x128xf32>,
      %c0_168 = arith.constant 0 : index
      %c0_169 = arith.constant 0 : index
      %261 = vector.load %arg5[%c0_168, %c0_169] : memref<8x128xf32, #tpu.memory_space<vmem>>, vector<8x128xf32>
      %c0_170 = arith.constant 0 : index
      %c0_171 = arith.constant 0 : index
      %262 = vector.load %arg13[%c0_170, %c0_171] : memref<8x128xf32, #tpu.memory_space<vmem>>, vector<8x128xf32>
      tpu.vector_store %arg13[%c0_170, %c0_171], %261 {strides = array<i32>} : memref<8x128xf32, #tpu.memory_space<vmem>>, vector<8x128xf32>,
      %c0_172 = arith.constant 0 : index
      %c0_173 = arith.constant 0 : index
      %263 = vector.load %arg6[%c0_172, %c0_173] : memref<8x128xf32, #tpu.memory_space<vmem>>, vector<8x128xf32>
      %c0_174 = arith.constant 0 : index
      %c0_175 = arith.constant 0 : index
      %264 = vector.load %arg14[%c0_174, %c0_175] : memref<8x128xf32, #tpu.memory_space<vmem>>, vector<8x128xf32>
      tpu.vector_store %arg14[%c0_174, %c0_175], %263 {strides = array<i32>} : memref<8x128xf32, #tpu.memory_space<vmem>>, vector<8x128xf32>,
      %cst_176 = arith.constant 0.000000e+00 : f32
      %265 = vector.broadcast %cst_176 : f32 to vector<8x128xf32>
      %c0_177 = arith.constant 0 : index
      %c0_178 = arith.constant 0 : index
      %266 = vector.load %arg15[%c0_177, %c0_178] : memref<8x128xf32, #tpu.memory_space<vmem>>, vector<8x128xf32>
      tpu.vector_store %arg15[%c0_177, %c0_178], %265 {strides = array<i32>} : memref<8x128xf32, #tpu.memory_space<vmem>>, vector<8x128xf32>,
    } else {
    }
    %c0_i32_1 = arith.constant 0 : i32
    %3 = arith.index_cast %c0_i32_1 : i32 to index
    %c0 = arith.constant 0 : index
    %c0_2 = arith.constant 0 : index
    %4 = vector.load %arg1[%3, %c0, %c0_2] : memref<4x8x128xf32, #tpu.memory_space<vmem>>, vector<1x8x128xf32>
    %5 = vector.shape_cast %4 : vector<1x8x128xf32> to vector<8x128xf32>
    %6 = arith.index_cast %c0_i32_1 : i32 to index
    %c0_3 = arith.constant 0 : index
    %c0_4 = arith.constant 0 : index
    %7 = vector.load %arg2[%6, %c0_3, %c0_4] : memref<4x8x128xf32, #tpu.memory_space<vmem>>, vector<1x8x128xf32>
    %8 = vector.shape_cast %7 : vector<1x8x128xf32> to vector<8x128xf32>
    %9 = arith.index_cast %c0_i32_1 : i32 to index
    %c0_5 = arith.constant 0 : index
    %c0_6 = arith.constant 0 : index
    %10 = vector.load %arg3[%9, %c0_5, %c0_6] : memref<4x8x128xf32, #tpu.memory_space<vmem>>, vector<1x8x128xf32>
    %11 = vector.shape_cast %10 : vector<1x8x128xf32> to vector<8x128xf32>
    %c0_7 = arith.constant 0 : index
    %c0_8 = arith.constant 0 : index
    %12 = vector.load %arg15[%c0_7, %c0_8] : memref<8x128xf32, #tpu.memory_space<vmem>>, vector<8x128xf32>
    %13 = arith.addf %12, %11 : vector<8x128xf32>
    %cst = arith.constant 5.000000e-01 : f32
    %14 = vector.broadcast %cst : f32 to vector<8x128xf32>
    %15 = arith.cmpf ogt, %13, %14 : vector<8x128xf32>
    %16 = arith.extui %15 : vector<8x128xi1> to vector<8x128xi32>
    %17 = arith.sitofp %16 : vector<8x128xi32> to vector<8x128xf32>
    %cst_9 = arith.constant 1.000000e+00 : f32
    %18 = vector.broadcast %cst_9 : f32 to vector<8x128xf32>
    %19 = arith.subf %18, %17 : vector<8x128xf32>
    %20 = arith.mulf %13, %19 : vector<8x128xf32>
    %c0_10 = arith.constant 0 : index
    %c0_11 = arith.constant 0 : index
    %21 = vector.load %arg15[%c0_10, %c0_11] : memref<8x128xf32, #tpu.memory_space<vmem>>, vector<8x128xf32>
    tpu.vector_store %arg15[%c0_10, %c0_11], %20 {strides = array<i32>} : memref<8x128xf32, #tpu.memory_space<vmem>>, vector<8x128xf32>,
    %c0_12 = arith.constant 0 : index
    %c0_13 = arith.constant 0 : index
    %22 = vector.load %arg14[%c0_12, %c0_13] : memref<8x128xf32, #tpu.memory_space<vmem>>, vector<8x128xf32>
    %cst_14 = arith.constant 9.900000e-01 : f32
    %23 = vector.broadcast %cst_14 : f32 to vector<8x128xf32>
    %24 = arith.mulf %22, %23 : vector<8x128xf32>
    %25 = arith.truncf %24 : vector<8x128xf32> to vector<8x128xbf16>
    %26 = arith.truncf %5 : vector<8x128xf32> to vector<8x128xbf16>
    %cst_15 = arith.constant dense<0.000000e+00> : vector<128x128xf32>
    %27 = tpu.matmul %25, %26, %cst_15 {dimension_numbers = #tpu.dot_dimension_numbers<[0], [0], [1], [1], [0, 1, 1, 1], [], []>} : vector<8x128xbf16>, vector<8x128xbf16>, vector<128x128xf32> -> vector<128x128xf32>
    %28 = arith.index_cast %c0_i32_1 : i32 to index
    %c0_16 = arith.constant 0 : index
    %c0_17 = arith.constant 0 : index
    %29 = vector.load %arg10[%28, %c0_16, %c0_17] : memref<4x128x128xf32, #tpu.memory_space<vmem>>, vector<1x128x128xf32>
    %30 = vector.shape_cast %29 : vector<1x128x128xf32> to vector<128x128xf32>
    %31 = vector.shape_cast %27 : vector<128x128xf32> to vector<1x128x128xf32>
    tpu.vector_store %arg10[%28, %c0_16, %c0_17], %31 {strides = array<i32>} : memref<4x128x128xf32, #tpu.memory_space<vmem>>, vector<1x128x128xf32>,
    %32 = arith.truncf %8 : vector<8x128xf32> to vector<8x128xbf16>
    %cst_18 = arith.constant dense<0.000000e+00> : vector<128x128xf32>
    %33 = tpu.matmul %25, %32, %cst_18 {dimension_numbers = #tpu.dot_dimension_numbers<[0], [0], [1], [1], [0, 1, 1, 1], [], []>} : vector<8x128xbf16>, vector<8x128xbf16>, vector<128x128xf32> -> vector<128x128xf32>
    %34 = arith.index_cast %c0_i32_1 : i32 to index
    %c0_19 = arith.constant 0 : index
    %c0_20 = arith.constant 0 : index
    %35 = vector.load %arg11[%34, %c0_19, %c0_20] : memref<4x128x128xf32, #tpu.memory_space<vmem>>, vector<1x128x128xf32>
    %36 = vector.shape_cast %35 : vector<1x128x128xf32> to vector<128x128xf32>
    %37 = vector.shape_cast %33 : vector<128x128xf32> to vector<1x128x128xf32>
    tpu.vector_store %arg11[%34, %c0_19, %c0_20], %37 {strides = array<i32>} : memref<4x128x128xf32, #tpu.memory_space<vmem>>, vector<1x128x128xf32>,
    %c0_21 = arith.constant 0 : index
    %c0_22 = arith.constant 0 : index
    %38 = vector.load %arg12[%c0_21, %c0_22] : memref<8x128xf32, #tpu.memory_space<vmem>>, vector<8x128xf32>
    %cst_23 = arith.constant 9.900000e-01 : f32
    %39 = vector.broadcast %cst_23 : f32 to vector<8x128xf32>
    %40 = arith.mulf %38, %39 : vector<8x128xf32>
    %41 = arith.addf %40, %5 : vector<8x128xf32>
    %c0_24 = arith.constant 0 : index
    %c0_25 = arith.constant 0 : index
    %42 = vector.load %arg13[%c0_24, %c0_25] : memref<8x128xf32, #tpu.memory_space<vmem>>, vector<8x128xf32>
    %cst_26 = arith.constant 9.900000e-01 : f32
    %43 = vector.broadcast %cst_26 : f32 to vector<8x128xf32>
    %44 = arith.mulf %42, %43 : vector<8x128xf32>
    %45 = arith.addf %44, %8 : vector<8x128xf32>
    %46 = arith.truncf %17 : vector<8x128xf32> to vector<8x128xbf16>
    %47 = arith.truncf %41 : vector<8x128xf32> to vector<8x128xbf16>
    %cst_27 = arith.constant dense<0.000000e+00> : vector<128x128xf32>
    %48 = tpu.matmul %46, %47, %cst_27 {dimension_numbers = #tpu.dot_dimension_numbers<[0], [0], [1], [1], [0, 1, 1, 1], [], []>} : vector<8x128xbf16>, vector<8x128xbf16>, vector<128x128xf32> -> vector<128x128xf32>
    %49 = arith.index_cast %c0_i32_1 : i32 to index
    %c0_28 = arith.constant 0 : index
    %c0_29 = arith.constant 0 : index
    %50 = vector.load %arg8[%49, %c0_28, %c0_29] : memref<4x128x128xf32, #tpu.memory_space<vmem>>, vector<1x128x128xf32>
    %51 = vector.shape_cast %50 : vector<1x128x128xf32> to vector<128x128xf32>
    %52 = vector.shape_cast %48 : vector<128x128xf32> to vector<1x128x128xf32>
    tpu.vector_store %arg8[%49, %c0_28, %c0_29], %52 {strides = array<i32>} : memref<4x128x128xf32, #tpu.memory_space<vmem>>, vector<1x128x128xf32>,
    %53 = arith.truncf %45 : vector<8x128xf32> to vector<8x128xbf16>
    %cst_30 = arith.constant dense<0.000000e+00> : vector<128x128xf32>
    %54 = tpu.matmul %46, %53, %cst_30 {dimension_numbers = #tpu.dot_dimension_numbers<[0], [0], [1], [1], [0, 1, 1, 1], [], []>} : vector<8x128xbf16>, vector<8x128xbf16>, vector<128x128xf32> -> vector<128x128xf32>
    %55 = arith.index_cast %c0_i32_1 : i32 to index
    %c0_31 = arith.constant 0 : index
    %c0_32 = arith.constant 0 : index
    %56 = vector.load %arg9[%55, %c0_31, %c0_32] : memref<4x128x128xf32, #tpu.memory_space<vmem>>, vector<1x128x128xf32>
    %57 = vector.shape_cast %56 : vector<1x128x128xf32> to vector<128x128xf32>
    %58 = vector.shape_cast %54 : vector<128x128xf32> to vector<1x128x128xf32>
    tpu.vector_store %arg9[%55, %c0_31, %c0_32], %58 {strides = array<i32>} : memref<4x128x128xf32, #tpu.memory_space<vmem>>, vector<1x128x128xf32>,
    %59 = arith.index_cast %c0_i32_1 : i32 to index
    %c0_33 = arith.constant 0 : index
    %c0_34 = arith.constant 0 : index
    %60 = vector.load %arg7[%59, %c0_33, %c0_34] : memref<4x8x128xf32, #tpu.memory_space<vmem>>, vector<1x8x128xf32>
    %61 = vector.shape_cast %60 : vector<1x8x128xf32> to vector<8x128xf32>
    %62 = vector.shape_cast %17 : vector<8x128xf32> to vector<1x8x128xf32>
    tpu.vector_store %arg7[%59, %c0_33, %c0_34], %62 {strides = array<i32>} : memref<4x8x128xf32, #tpu.memory_space<vmem>>, vector<1x8x128xf32>,
    %c0_35 = arith.constant 0 : index
    %c0_36 = arith.constant 0 : index
    %63 = vector.load %arg12[%c0_35, %c0_36] : memref<8x128xf32, #tpu.memory_space<vmem>>, vector<8x128xf32>
    tpu.vector_store %arg12[%c0_35, %c0_36], %41 {strides = array<i32>} : memref<8x128xf32, #tpu.memory_space<vmem>>, vector<8x128xf32>,
    %c0_37 = arith.constant 0 : index
    %c0_38 = arith.constant 0 : index
    %64 = vector.load %arg13[%c0_37, %c0_38] : memref<8x128xf32, #tpu.memory_space<vmem>>, vector<8x128xf32>
    tpu.vector_store %arg13[%c0_37, %c0_38], %45 {strides = array<i32>} : memref<8x128xf32, #tpu.memory_space<vmem>>, vector<8x128xf32>,
    %65 = arith.addf %24, %17 : vector<8x128xf32>
    %c0_39 = arith.constant 0 : index
    %c0_40 = arith.constant 0 : index
    %66 = vector.load %arg14[%c0_39, %c0_40] : memref<8x128xf32, #tpu.memory_space<vmem>>, vector<8x128xf32>
    tpu.vector_store %arg14[%c0_39, %c0_40], %65 {strides = array<i32>} : memref<8x128xf32, #tpu.memory_space<vmem>>, vector<8x128xf32>,
    %c1_i32 = arith.constant 1 : i32
    %67 = arith.index_cast %c1_i32 : i32 to index
    %c0_41 = arith.constant 0 : index
    %c0_42 = arith.constant 0 : index
    %68 = vector.load %arg1[%67, %c0_41, %c0_42] : memref<4x8x128xf32, #tpu.memory_space<vmem>>, vector<1x8x128xf32>
    %69 = vector.shape_cast %68 : vector<1x8x128xf32> to vector<8x128xf32>
    %70 = arith.index_cast %c1_i32 : i32 to index
    %c0_43 = arith.constant 0 : index
    %c0_44 = arith.constant 0 : index
    %71 = vector.load %arg2[%70, %c0_43, %c0_44] : memref<4x8x128xf32, #tpu.memory_space<vmem>>, vector<1x8x128xf32>
    %72 = vector.shape_cast %71 : vector<1x8x128xf32> to vector<8x128xf32>
    %73 = arith.index_cast %c1_i32 : i32 to index
    %c0_45 = arith.constant 0 : index
    %c0_46 = arith.constant 0 : index
    %74 = vector.load %arg3[%73, %c0_45, %c0_46] : memref<4x8x128xf32, #tpu.memory_space<vmem>>, vector<1x8x128xf32>
    %75 = vector.shape_cast %74 : vector<1x8x128xf32> to vector<8x128xf32>
    %c0_47 = arith.constant 0 : index
    %c0_48 = arith.constant 0 : index
    %76 = vector.load %arg15[%c0_47, %c0_48] : memref<8x128xf32, #tpu.memory_space<vmem>>, vector<8x128xf32>
    %77 = arith.addf %76, %75 : vector<8x128xf32>
    %cst_49 = arith.constant 5.000000e-01 : f32
    %78 = vector.broadcast %cst_49 : f32 to vector<8x128xf32>
    %79 = arith.cmpf ogt, %77, %78 : vector<8x128xf32>
    %80 = arith.extui %79 : vector<8x128xi1> to vector<8x128xi32>
    %81 = arith.sitofp %80 : vector<8x128xi32> to vector<8x128xf32>
    %cst_50 = arith.constant 1.000000e+00 : f32
    %82 = vector.broadcast %cst_50 : f32 to vector<8x128xf32>
    %83 = arith.subf %82, %81 : vector<8x128xf32>
    %84 = arith.mulf %77, %83 : vector<8x128xf32>
    %c0_51 = arith.constant 0 : index
    %c0_52 = arith.constant 0 : index
    %85 = vector.load %arg15[%c0_51, %c0_52] : memref<8x128xf32, #tpu.memory_space<vmem>>, vector<8x128xf32>
    tpu.vector_store %arg15[%c0_51, %c0_52], %84 {strides = array<i32>} : memref<8x128xf32, #tpu.memory_space<vmem>>, vector<8x128xf32>,
    %c0_53 = arith.constant 0 : index
    %c0_54 = arith.constant 0 : index
    %86 = vector.load %arg14[%c0_53, %c0_54] : memref<8x128xf32, #tpu.memory_space<vmem>>, vector<8x128xf32>
    %cst_55 = arith.constant 9.900000e-01 : f32
    %87 = vector.broadcast %cst_55 : f32 to vector<8x128xf32>
    %88 = arith.mulf %86, %87 : vector<8x128xf32>
    %89 = arith.truncf %88 : vector<8x128xf32> to vector<8x128xbf16>
    %90 = arith.truncf %69 : vector<8x128xf32> to vector<8x128xbf16>
    %cst_56 = arith.constant dense<0.000000e+00> : vector<128x128xf32>
    %91 = tpu.matmul %89, %90, %cst_56 {dimension_numbers = #tpu.dot_dimension_numbers<[0], [0], [1], [1], [0, 1, 1, 1], [], []>} : vector<8x128xbf16>, vector<8x128xbf16>, vector<128x128xf32> -> vector<128x128xf32>
    %92 = arith.index_cast %c1_i32 : i32 to index
    %c0_57 = arith.constant 0 : index
    %c0_58 = arith.constant 0 : index
    %93 = vector.load %arg10[%92, %c0_57, %c0_58] : memref<4x128x128xf32, #tpu.memory_space<vmem>>, vector<1x128x128xf32>
    %94 = vector.shape_cast %93 : vector<1x128x128xf32> to vector<128x128xf32>
    %95 = vector.shape_cast %91 : vector<128x128xf32> to vector<1x128x128xf32>
    tpu.vector_store %arg10[%92, %c0_57, %c0_58], %95 {strides = array<i32>} : memref<4x128x128xf32, #tpu.memory_space<vmem>>, vector<1x128x128xf32>,
    %96 = arith.truncf %72 : vector<8x128xf32> to vector<8x128xbf16>
    %cst_59 = arith.constant dense<0.000000e+00> : vector<128x128xf32>
    %97 = tpu.matmul %89, %96, %cst_59 {dimension_numbers = #tpu.dot_dimension_numbers<[0], [0], [1], [1], [0, 1, 1, 1], [], []>} : vector<8x128xbf16>, vector<8x128xbf16>, vector<128x128xf32> -> vector<128x128xf32>
    %98 = arith.index_cast %c1_i32 : i32 to index
    %c0_60 = arith.constant 0 : index
    %c0_61 = arith.constant 0 : index
    %99 = vector.load %arg11[%98, %c0_60, %c0_61] : memref<4x128x128xf32, #tpu.memory_space<vmem>>, vector<1x128x128xf32>
    %100 = vector.shape_cast %99 : vector<1x128x128xf32> to vector<128x128xf32>
    %101 = vector.shape_cast %97 : vector<128x128xf32> to vector<1x128x128xf32>
    tpu.vector_store %arg11[%98, %c0_60, %c0_61], %101 {strides = array<i32>} : memref<4x128x128xf32, #tpu.memory_space<vmem>>, vector<1x128x128xf32>,
    %c0_62 = arith.constant 0 : index
    %c0_63 = arith.constant 0 : index
    %102 = vector.load %arg12[%c0_62, %c0_63] : memref<8x128xf32, #tpu.memory_space<vmem>>, vector<8x128xf32>
    %cst_64 = arith.constant 9.900000e-01 : f32
    %103 = vector.broadcast %cst_64 : f32 to vector<8x128xf32>
    %104 = arith.mulf %102, %103 : vector<8x128xf32>
    %105 = arith.addf %104, %69 : vector<8x128xf32>
    %c0_65 = arith.constant 0 : index
    %c0_66 = arith.constant 0 : index
    %106 = vector.load %arg13[%c0_65, %c0_66] : memref<8x128xf32, #tpu.memory_space<vmem>>, vector<8x128xf32>
    %cst_67 = arith.constant 9.900000e-01 : f32
    %107 = vector.broadcast %cst_67 : f32 to vector<8x128xf32>
    %108 = arith.mulf %106, %107 : vector<8x128xf32>
    %109 = arith.addf %108, %72 : vector<8x128xf32>
    %110 = arith.truncf %81 : vector<8x128xf32> to vector<8x128xbf16>
    %111 = arith.truncf %105 : vector<8x128xf32> to vector<8x128xbf16>
    %cst_68 = arith.constant dense<0.000000e+00> : vector<128x128xf32>
    %112 = tpu.matmul %110, %111, %cst_68 {dimension_numbers = #tpu.dot_dimension_numbers<[0], [0], [1], [1], [0, 1, 1, 1], [], []>} : vector<8x128xbf16>, vector<8x128xbf16>, vector<128x128xf32> -> vector<128x128xf32>
    %113 = arith.index_cast %c1_i32 : i32 to index
    %c0_69 = arith.constant 0 : index
    %c0_70 = arith.constant 0 : index
    %114 = vector.load %arg8[%113, %c0_69, %c0_70] : memref<4x128x128xf32, #tpu.memory_space<vmem>>, vector<1x128x128xf32>
    %115 = vector.shape_cast %114 : vector<1x128x128xf32> to vector<128x128xf32>
    %116 = vector.shape_cast %112 : vector<128x128xf32> to vector<1x128x128xf32>
    tpu.vector_store %arg8[%113, %c0_69, %c0_70], %116 {strides = array<i32>} : memref<4x128x128xf32, #tpu.memory_space<vmem>>, vector<1x128x128xf32>,
    %117 = arith.truncf %109 : vector<8x128xf32> to vector<8x128xbf16>
    %cst_71 = arith.constant dense<0.000000e+00> : vector<128x128xf32>
    %118 = tpu.matmul %110, %117, %cst_71 {dimension_numbers = #tpu.dot_dimension_numbers<[0], [0], [1], [1], [0, 1, 1, 1], [], []>} : vector<8x128xbf16>, vector<8x128xbf16>, vector<128x128xf32> -> vector<128x128xf32>
    %119 = arith.index_cast %c1_i32 : i32 to index
    %c0_72 = arith.constant 0 : index
    %c0_73 = arith.constant 0 : index
    %120 = vector.load %arg9[%119, %c0_72, %c0_73] : memref<4x128x128xf32, #tpu.memory_space<vmem>>, vector<1x128x128xf32>
    %121 = vector.shape_cast %120 : vector<1x128x128xf32> to vector<128x128xf32>
    %122 = vector.shape_cast %118 : vector<128x128xf32> to vector<1x128x128xf32>
    tpu.vector_store %arg9[%119, %c0_72, %c0_73], %122 {strides = array<i32>} : memref<4x128x128xf32, #tpu.memory_space<vmem>>, vector<1x128x128xf32>,
    %123 = arith.index_cast %c1_i32 : i32 to index
    %c0_74 = arith.constant 0 : index
    %c0_75 = arith.constant 0 : index
    %124 = vector.load %arg7[%123, %c0_74, %c0_75] : memref<4x8x128xf32, #tpu.memory_space<vmem>>, vector<1x8x128xf32>
    %125 = vector.shape_cast %124 : vector<1x8x128xf32> to vector<8x128xf32>
    %126 = vector.shape_cast %81 : vector<8x128xf32> to vector<1x8x128xf32>
    tpu.vector_store %arg7[%123, %c0_74, %c0_75], %126 {strides = array<i32>} : memref<4x8x128xf32, #tpu.memory_space<vmem>>, vector<1x8x128xf32>,
    %c0_76 = arith.constant 0 : index
    %c0_77 = arith.constant 0 : index
    %127 = vector.load %arg12[%c0_76, %c0_77] : memref<8x128xf32, #tpu.memory_space<vmem>>, vector<8x128xf32>
    tpu.vector_store %arg12[%c0_76, %c0_77], %105 {strides = array<i32>} : memref<8x128xf32, #tpu.memory_space<vmem>>, vector<8x128xf32>,
    %c0_78 = arith.constant 0 : index
    %c0_79 = arith.constant 0 : index
    %128 = vector.load %arg13[%c0_78, %c0_79] : memref<8x128xf32, #tpu.memory_space<vmem>>, vector<8x128xf32>
    tpu.vector_store %arg13[%c0_78, %c0_79], %109 {strides = array<i32>} : memref<8x128xf32, #tpu.memory_space<vmem>>, vector<8x128xf32>,
    %129 = arith.addf %88, %81 : vector<8x128xf32>
    %c0_80 = arith.constant 0 : index
    %c0_81 = arith.constant 0 : index
    %130 = vector.load %arg14[%c0_80, %c0_81] : memref<8x128xf32, #tpu.memory_space<vmem>>, vector<8x128xf32>
    tpu.vector_store %arg14[%c0_80, %c0_81], %129 {strides = array<i32>} : memref<8x128xf32, #tpu.memory_space<vmem>>, vector<8x128xf32>,
    %c2_i32 = arith.constant 2 : i32
    %131 = arith.index_cast %c2_i32 : i32 to index
    %c0_82 = arith.constant 0 : index
    %c0_83 = arith.constant 0 : index
    %132 = vector.load %arg1[%131, %c0_82, %c0_83] : memref<4x8x128xf32, #tpu.memory_space<vmem>>, vector<1x8x128xf32>
    %133 = vector.shape_cast %132 : vector<1x8x128xf32> to vector<8x128xf32>
    %134 = arith.index_cast %c2_i32 : i32 to index
    %c0_84 = arith.constant 0 : index
    %c0_85 = arith.constant 0 : index
    %135 = vector.load %arg2[%134, %c0_84, %c0_85] : memref<4x8x128xf32, #tpu.memory_space<vmem>>, vector<1x8x128xf32>
    %136 = vector.shape_cast %135 : vector<1x8x128xf32> to vector<8x128xf32>
    %137 = arith.index_cast %c2_i32 : i32 to index
    %c0_86 = arith.constant 0 : index
    %c0_87 = arith.constant 0 : index
    %138 = vector.load %arg3[%137, %c0_86, %c0_87] : memref<4x8x128xf32, #tpu.memory_space<vmem>>, vector<1x8x128xf32>
    %139 = vector.shape_cast %138 : vector<1x8x128xf32> to vector<8x128xf32>
    %c0_88 = arith.constant 0 : index
    %c0_89 = arith.constant 0 : index
    %140 = vector.load %arg15[%c0_88, %c0_89] : memref<8x128xf32, #tpu.memory_space<vmem>>, vector<8x128xf32>
    %141 = arith.addf %140, %139 : vector<8x128xf32>
    %cst_90 = arith.constant 5.000000e-01 : f32
    %142 = vector.broadcast %cst_90 : f32 to vector<8x128xf32>
    %143 = arith.cmpf ogt, %141, %142 : vector<8x128xf32>
    %144 = arith.extui %143 : vector<8x128xi1> to vector<8x128xi32>
    %145 = arith.sitofp %144 : vector<8x128xi32> to vector<8x128xf32>
    %cst_91 = arith.constant 1.000000e+00 : f32
    %146 = vector.broadcast %cst_91 : f32 to vector<8x128xf32>
    %147 = arith.subf %146, %145 : vector<8x128xf32>
    %148 = arith.mulf %141, %147 : vector<8x128xf32>
    %c0_92 = arith.constant 0 : index
    %c0_93 = arith.constant 0 : index
    %149 = vector.load %arg15[%c0_92, %c0_93] : memref<8x128xf32, #tpu.memory_space<vmem>>, vector<8x128xf32>
    tpu.vector_store %arg15[%c0_92, %c0_93], %148 {strides = array<i32>} : memref<8x128xf32, #tpu.memory_space<vmem>>, vector<8x128xf32>,
    %c0_94 = arith.constant 0 : index
    %c0_95 = arith.constant 0 : index
    %150 = vector.load %arg14[%c0_94, %c0_95] : memref<8x128xf32, #tpu.memory_space<vmem>>, vector<8x128xf32>
    %cst_96 = arith.constant 9.900000e-01 : f32
    %151 = vector.broadcast %cst_96 : f32 to vector<8x128xf32>
    %152 = arith.mulf %150, %151 : vector<8x128xf32>
    %153 = arith.truncf %152 : vector<8x128xf32> to vector<8x128xbf16>
    %154 = arith.truncf %133 : vector<8x128xf32> to vector<8x128xbf16>
    %cst_97 = arith.constant dense<0.000000e+00> : vector<128x128xf32>
    %155 = tpu.matmul %153, %154, %cst_97 {dimension_numbers = #tpu.dot_dimension_numbers<[0], [0], [1], [1], [0, 1, 1, 1], [], []>} : vector<8x128xbf16>, vector<8x128xbf16>, vector<128x128xf32> -> vector<128x128xf32>
    %156 = arith.index_cast %c2_i32 : i32 to index
    %c0_98 = arith.constant 0 : index
    %c0_99 = arith.constant 0 : index
    %157 = vector.load %arg10[%156, %c0_98, %c0_99] : memref<4x128x128xf32, #tpu.memory_space<vmem>>, vector<1x128x128xf32>
    %158 = vector.shape_cast %157 : vector<1x128x128xf32> to vector<128x128xf32>
    %159 = vector.shape_cast %155 : vector<128x128xf32> to vector<1x128x128xf32>
    tpu.vector_store %arg10[%156, %c0_98, %c0_99], %159 {strides = array<i32>} : memref<4x128x128xf32, #tpu.memory_space<vmem>>, vector<1x128x128xf32>,
    %160 = arith.truncf %136 : vector<8x128xf32> to vector<8x128xbf16>
    %cst_100 = arith.constant dense<0.000000e+00> : vector<128x128xf32>
    %161 = tpu.matmul %153, %160, %cst_100 {dimension_numbers = #tpu.dot_dimension_numbers<[0], [0], [1], [1], [0, 1, 1, 1], [], []>} : vector<8x128xbf16>, vector<8x128xbf16>, vector<128x128xf32> -> vector<128x128xf32>
    %162 = arith.index_cast %c2_i32 : i32 to index
    %c0_101 = arith.constant 0 : index
    %c0_102 = arith.constant 0 : index
    %163 = vector.load %arg11[%162, %c0_101, %c0_102] : memref<4x128x128xf32, #tpu.memory_space<vmem>>, vector<1x128x128xf32>
    %164 = vector.shape_cast %163 : vector<1x128x128xf32> to vector<128x128xf32>
    %165 = vector.shape_cast %161 : vector<128x128xf32> to vector<1x128x128xf32>
    tpu.vector_store %arg11[%162, %c0_101, %c0_102], %165 {strides = array<i32>} : memref<4x128x128xf32, #tpu.memory_space<vmem>>, vector<1x128x128xf32>,
    %c0_103 = arith.constant 0 : index
    %c0_104 = arith.constant 0 : index
    %166 = vector.load %arg12[%c0_103, %c0_104] : memref<8x128xf32, #tpu.memory_space<vmem>>, vector<8x128xf32>
    %cst_105 = arith.constant 9.900000e-01 : f32
    %167 = vector.broadcast %cst_105 : f32 to vector<8x128xf32>
    %168 = arith.mulf %166, %167 : vector<8x128xf32>
    %169 = arith.addf %168, %133 : vector<8x128xf32>
    %c0_106 = arith.constant 0 : index
    %c0_107 = arith.constant 0 : index
    %170 = vector.load %arg13[%c0_106, %c0_107] : memref<8x128xf32, #tpu.memory_space<vmem>>, vector<8x128xf32>
    %cst_108 = arith.constant 9.900000e-01 : f32
    %171 = vector.broadcast %cst_108 : f32 to vector<8x128xf32>
    %172 = arith.mulf %170, %171 : vector<8x128xf32>
    %173 = arith.addf %172, %136 : vector<8x128xf32>
    %174 = arith.truncf %145 : vector<8x128xf32> to vector<8x128xbf16>
    %175 = arith.truncf %169 : vector<8x128xf32> to vector<8x128xbf16>
    %cst_109 = arith.constant dense<0.000000e+00> : vector<128x128xf32>
    %176 = tpu.matmul %174, %175, %cst_109 {dimension_numbers = #tpu.dot_dimension_numbers<[0], [0], [1], [1], [0, 1, 1, 1], [], []>} : vector<8x128xbf16>, vector<8x128xbf16>, vector<128x128xf32> -> vector<128x128xf32>
    %177 = arith.index_cast %c2_i32 : i32 to index
    %c0_110 = arith.constant 0 : index
    %c0_111 = arith.constant 0 : index
    %178 = vector.load %arg8[%177, %c0_110, %c0_111] : memref<4x128x128xf32, #tpu.memory_space<vmem>>, vector<1x128x128xf32>
    %179 = vector.shape_cast %178 : vector<1x128x128xf32> to vector<128x128xf32>
    %180 = vector.shape_cast %176 : vector<128x128xf32> to vector<1x128x128xf32>
    tpu.vector_store %arg8[%177, %c0_110, %c0_111], %180 {strides = array<i32>} : memref<4x128x128xf32, #tpu.memory_space<vmem>>, vector<1x128x128xf32>,
    %181 = arith.truncf %173 : vector<8x128xf32> to vector<8x128xbf16>
    %cst_112 = arith.constant dense<0.000000e+00> : vector<128x128xf32>
    %182 = tpu.matmul %174, %181, %cst_112 {dimension_numbers = #tpu.dot_dimension_numbers<[0], [0], [1], [1], [0, 1, 1, 1], [], []>} : vector<8x128xbf16>, vector<8x128xbf16>, vector<128x128xf32> -> vector<128x128xf32>
    %183 = arith.index_cast %c2_i32 : i32 to index
    %c0_113 = arith.constant 0 : index
    %c0_114 = arith.constant 0 : index
    %184 = vector.load %arg9[%183, %c0_113, %c0_114] : memref<4x128x128xf32, #tpu.memory_space<vmem>>, vector<1x128x128xf32>
    %185 = vector.shape_cast %184 : vector<1x128x128xf32> to vector<128x128xf32>
    %186 = vector.shape_cast %182 : vector<128x128xf32> to vector<1x128x128xf32>
    tpu.vector_store %arg9[%183, %c0_113, %c0_114], %186 {strides = array<i32>} : memref<4x128x128xf32, #tpu.memory_space<vmem>>, vector<1x128x128xf32>,
    %187 = arith.index_cast %c2_i32 : i32 to index
    %c0_115 = arith.constant 0 : index
    %c0_116 = arith.constant 0 : index
    %188 = vector.load %arg7[%187, %c0_115, %c0_116] : memref<4x8x128xf32, #tpu.memory_space<vmem>>, vector<1x8x128xf32>
    %189 = vector.shape_cast %188 : vector<1x8x128xf32> to vector<8x128xf32>
    %190 = vector.shape_cast %145 : vector<8x128xf32> to vector<1x8x128xf32>
    tpu.vector_store %arg7[%187, %c0_115, %c0_116], %190 {strides = array<i32>} : memref<4x8x128xf32, #tpu.memory_space<vmem>>, vector<1x8x128xf32>,
    %c0_117 = arith.constant 0 : index
    %c0_118 = arith.constant 0 : index
    %191 = vector.load %arg12[%c0_117, %c0_118] : memref<8x128xf32, #tpu.memory_space<vmem>>, vector<8x128xf32>
    tpu.vector_store %arg12[%c0_117, %c0_118], %169 {strides = array<i32>} : memref<8x128xf32, #tpu.memory_space<vmem>>, vector<8x128xf32>,
    %c0_119 = arith.constant 0 : index
    %c0_120 = arith.constant 0 : index
    %192 = vector.load %arg13[%c0_119, %c0_120] : memref<8x128xf32, #tpu.memory_space<vmem>>, vector<8x128xf32>
    tpu.vector_store %arg13[%c0_119, %c0_120], %173 {strides = array<i32>} : memref<8x128xf32, #tpu.memory_space<vmem>>, vector<8x128xf32>,
    %193 = arith.addf %152, %145 : vector<8x128xf32>
    %c0_121 = arith.constant 0 : index
    %c0_122 = arith.constant 0 : index
    %194 = vector.load %arg14[%c0_121, %c0_122] : memref<8x128xf32, #tpu.memory_space<vmem>>, vector<8x128xf32>
    tpu.vector_store %arg14[%c0_121, %c0_122], %193 {strides = array<i32>} : memref<8x128xf32, #tpu.memory_space<vmem>>, vector<8x128xf32>,
    %c3_i32 = arith.constant 3 : i32
    %195 = arith.index_cast %c3_i32 : i32 to index
    %c0_123 = arith.constant 0 : index
    %c0_124 = arith.constant 0 : index
    %196 = vector.load %arg1[%195, %c0_123, %c0_124] : memref<4x8x128xf32, #tpu.memory_space<vmem>>, vector<1x8x128xf32>
    %197 = vector.shape_cast %196 : vector<1x8x128xf32> to vector<8x128xf32>
    %198 = arith.index_cast %c3_i32 : i32 to index
    %c0_125 = arith.constant 0 : index
    %c0_126 = arith.constant 0 : index
    %199 = vector.load %arg2[%198, %c0_125, %c0_126] : memref<4x8x128xf32, #tpu.memory_space<vmem>>, vector<1x8x128xf32>
    %200 = vector.shape_cast %199 : vector<1x8x128xf32> to vector<8x128xf32>
    %201 = arith.index_cast %c3_i32 : i32 to index
    %c0_127 = arith.constant 0 : index
    %c0_128 = arith.constant 0 : index
    %202 = vector.load %arg3[%201, %c0_127, %c0_128] : memref<4x8x128xf32, #tpu.memory_space<vmem>>, vector<1x8x128xf32>
    %203 = vector.shape_cast %202 : vector<1x8x128xf32> to vector<8x128xf32>
    %c0_129 = arith.constant 0 : index
    %c0_130 = arith.constant 0 : index
    %204 = vector.load %arg15[%c0_129, %c0_130] : memref<8x128xf32, #tpu.memory_space<vmem>>, vector<8x128xf32>
    %205 = arith.addf %204, %203 : vector<8x128xf32>
    %cst_131 = arith.constant 5.000000e-01 : f32
    %206 = vector.broadcast %cst_131 : f32 to vector<8x128xf32>
    %207 = arith.cmpf ogt, %205, %206 : vector<8x128xf32>
    %208 = arith.extui %207 : vector<8x128xi1> to vector<8x128xi32>
    %209 = arith.sitofp %208 : vector<8x128xi32> to vector<8x128xf32>
    %cst_132 = arith.constant 1.000000e+00 : f32
    %210 = vector.broadcast %cst_132 : f32 to vector<8x128xf32>
    %211 = arith.subf %210, %209 : vector<8x128xf32>
    %212 = arith.mulf %205, %211 : vector<8x128xf32>
    %c0_133 = arith.constant 0 : index
    %c0_134 = arith.constant 0 : index
    %213 = vector.load %arg15[%c0_133, %c0_134] : memref<8x128xf32, #tpu.memory_space<vmem>>, vector<8x128xf32>
    tpu.vector_store %arg15[%c0_133, %c0_134], %212 {strides = array<i32>} : memref<8x128xf32, #tpu.memory_space<vmem>>, vector<8x128xf32>,
    %c0_135 = arith.constant 0 : index
    %c0_136 = arith.constant 0 : index
    %214 = vector.load %arg14[%c0_135, %c0_136] : memref<8x128xf32, #tpu.memory_space<vmem>>, vector<8x128xf32>
    %cst_137 = arith.constant 9.900000e-01 : f32
    %215 = vector.broadcast %cst_137 : f32 to vector<8x128xf32>
    %216 = arith.mulf %214, %215 : vector<8x128xf32>
    %217 = arith.truncf %216 : vector<8x128xf32> to vector<8x128xbf16>
    %218 = arith.truncf %197 : vector<8x128xf32> to vector<8x128xbf16>
    %cst_138 = arith.constant dense<0.000000e+00> : vector<128x128xf32>
    %219 = tpu.matmul %217, %218, %cst_138 {dimension_numbers = #tpu.dot_dimension_numbers<[0], [0], [1], [1], [0, 1, 1, 1], [], []>} : vector<8x128xbf16>, vector<8x128xbf16>, vector<128x128xf32> -> vector<128x128xf32>
    %220 = arith.index_cast %c3_i32 : i32 to index
    %c0_139 = arith.constant 0 : index
    %c0_140 = arith.constant 0 : index
    %221 = vector.load %arg10[%220, %c0_139, %c0_140] : memref<4x128x128xf32, #tpu.memory_space<vmem>>, vector<1x128x128xf32>
    %222 = vector.shape_cast %221 : vector<1x128x128xf32> to vector<128x128xf32>
    %223 = vector.shape_cast %219 : vector<128x128xf32> to vector<1x128x128xf32>
    tpu.vector_store %arg10[%220, %c0_139, %c0_140], %223 {strides = array<i32>} : memref<4x128x128xf32, #tpu.memory_space<vmem>>, vector<1x128x128xf32>,
    %224 = arith.truncf %200 : vector<8x128xf32> to vector<8x128xbf16>
    %cst_141 = arith.constant dense<0.000000e+00> : vector<128x128xf32>
    %225 = tpu.matmul %217, %224, %cst_141 {dimension_numbers = #tpu.dot_dimension_numbers<[0], [0], [1], [1], [0, 1, 1, 1], [], []>} : vector<8x128xbf16>, vector<8x128xbf16>, vector<128x128xf32> -> vector<128x128xf32>
    %226 = arith.index_cast %c3_i32 : i32 to index
    %c0_142 = arith.constant 0 : index
    %c0_143 = arith.constant 0 : index
    %227 = vector.load %arg11[%226, %c0_142, %c0_143] : memref<4x128x128xf32, #tpu.memory_space<vmem>>, vector<1x128x128xf32>
    %228 = vector.shape_cast %227 : vector<1x128x128xf32> to vector<128x128xf32>
    %229 = vector.shape_cast %225 : vector<128x128xf32> to vector<1x128x128xf32>
    tpu.vector_store %arg11[%226, %c0_142, %c0_143], %229 {strides = array<i32>} : memref<4x128x128xf32, #tpu.memory_space<vmem>>, vector<1x128x128xf32>,
    %c0_144 = arith.constant 0 : index
    %c0_145 = arith.constant 0 : index
    %230 = vector.load %arg12[%c0_144, %c0_145] : memref<8x128xf32, #tpu.memory_space<vmem>>, vector<8x128xf32>
    %cst_146 = arith.constant 9.900000e-01 : f32
    %231 = vector.broadcast %cst_146 : f32 to vector<8x128xf32>
    %232 = arith.mulf %230, %231 : vector<8x128xf32>
    %233 = arith.addf %232, %197 : vector<8x128xf32>
    %c0_147 = arith.constant 0 : index
    %c0_148 = arith.constant 0 : index
    %234 = vector.load %arg13[%c0_147, %c0_148] : memref<8x128xf32, #tpu.memory_space<vmem>>, vector<8x128xf32>
    %cst_149 = arith.constant 9.900000e-01 : f32
    %235 = vector.broadcast %cst_149 : f32 to vector<8x128xf32>
    %236 = arith.mulf %234, %235 : vector<8x128xf32>
    %237 = arith.addf %236, %200 : vector<8x128xf32>
    %238 = arith.truncf %209 : vector<8x128xf32> to vector<8x128xbf16>
    %239 = arith.truncf %233 : vector<8x128xf32> to vector<8x128xbf16>
    %cst_150 = arith.constant dense<0.000000e+00> : vector<128x128xf32>
    %240 = tpu.matmul %238, %239, %cst_150 {dimension_numbers = #tpu.dot_dimension_numbers<[0], [0], [1], [1], [0, 1, 1, 1], [], []>} : vector<8x128xbf16>, vector<8x128xbf16>, vector<128x128xf32> -> vector<128x128xf32>
    %241 = arith.index_cast %c3_i32 : i32 to index
    %c0_151 = arith.constant 0 : index
    %c0_152 = arith.constant 0 : index
    %242 = vector.load %arg8[%241, %c0_151, %c0_152] : memref<4x128x128xf32, #tpu.memory_space<vmem>>, vector<1x128x128xf32>
    %243 = vector.shape_cast %242 : vector<1x128x128xf32> to vector<128x128xf32>
    %244 = vector.shape_cast %240 : vector<128x128xf32> to vector<1x128x128xf32>
    tpu.vector_store %arg8[%241, %c0_151, %c0_152], %244 {strides = array<i32>} : memref<4x128x128xf32, #tpu.memory_space<vmem>>, vector<1x128x128xf32>,
    %245 = arith.truncf %237 : vector<8x128xf32> to vector<8x128xbf16>
    %cst_153 = arith.constant dense<0.000000e+00> : vector<128x128xf32>
    %246 = tpu.matmul %238, %245, %cst_153 {dimension_numbers = #tpu.dot_dimension_numbers<[0], [0], [1], [1], [0, 1, 1, 1], [], []>} : vector<8x128xbf16>, vector<8x128xbf16>, vector<128x128xf32> -> vector<128x128xf32>
    %247 = arith.index_cast %c3_i32 : i32 to index
    %c0_154 = arith.constant 0 : index
    %c0_155 = arith.constant 0 : index
    %248 = vector.load %arg9[%247, %c0_154, %c0_155] : memref<4x128x128xf32, #tpu.memory_space<vmem>>, vector<1x128x128xf32>
    %249 = vector.shape_cast %248 : vector<1x128x128xf32> to vector<128x128xf32>
    %250 = vector.shape_cast %246 : vector<128x128xf32> to vector<1x128x128xf32>
    tpu.vector_store %arg9[%247, %c0_154, %c0_155], %250 {strides = array<i32>} : memref<4x128x128xf32, #tpu.memory_space<vmem>>, vector<1x128x128xf32>,
    %251 = arith.index_cast %c3_i32 : i32 to index
    %c0_156 = arith.constant 0 : index
    %c0_157 = arith.constant 0 : index
    %252 = vector.load %arg7[%251, %c0_156, %c0_157] : memref<4x8x128xf32, #tpu.memory_space<vmem>>, vector<1x8x128xf32>
    %253 = vector.shape_cast %252 : vector<1x8x128xf32> to vector<8x128xf32>
    %254 = vector.shape_cast %209 : vector<8x128xf32> to vector<1x8x128xf32>
    tpu.vector_store %arg7[%251, %c0_156, %c0_157], %254 {strides = array<i32>} : memref<4x8x128xf32, #tpu.memory_space<vmem>>, vector<1x8x128xf32>,
    %c0_158 = arith.constant 0 : index
    %c0_159 = arith.constant 0 : index
    %255 = vector.load %arg12[%c0_158, %c0_159] : memref<8x128xf32, #tpu.memory_space<vmem>>, vector<8x128xf32>
    tpu.vector_store %arg12[%c0_158, %c0_159], %233 {strides = array<i32>} : memref<8x128xf32, #tpu.memory_space<vmem>>, vector<8x128xf32>,
    %c0_160 = arith.constant 0 : index
    %c0_161 = arith.constant 0 : index
    %256 = vector.load %arg13[%c0_160, %c0_161] : memref<8x128xf32, #tpu.memory_space<vmem>>, vector<8x128xf32>
    tpu.vector_store %arg13[%c0_160, %c0_161], %237 {strides = array<i32>} : memref<8x128xf32, #tpu.memory_space<vmem>>, vector<8x128xf32>,
    %257 = arith.addf %216, %209 : vector<8x128xf32>
    %c0_162 = arith.constant 0 : index
    %c0_163 = arith.constant 0 : index
    %258 = vector.load %arg14[%c0_162, %c0_163] : memref<8x128xf32, #tpu.memory_space<vmem>>, vector<8x128xf32>
    tpu.vector_store %arg14[%c0_162, %c0_163], %257 {strides = array<i32>} : memref<8x128xf32, #tpu.memory_space<vmem>>, vector<8x128xf32>,
    %c4_i32 = arith.constant 4 : i32
    return
  }
  func.func @transform_0(%arg0: i32) -> (i32, i32, i32) {
    %c0_i32 = arith.constant 0 : i32
    %c0_i32_0 = arith.constant 0 : i32
    %c0_i32_1 = arith.constant 0 : i32
    return %arg0, %c0_i32, %c0_i32_0 : i32, i32, i32
  }
  func.func @transform_1(%arg0: i32) -> (i32, i32, i32) {
    %c0_i32 = arith.constant 0 : i32
    %c0_i32_0 = arith.constant 0 : i32
    %c0_i32_1 = arith.constant 0 : i32
    return %arg0, %c0_i32, %c0_i32_0 : i32, i32, i32
  }
  func.func @transform_2(%arg0: i32) -> (i32, i32, i32) {
    %c0_i32 = arith.constant 0 : i32
    %c0_i32_0 = arith.constant 0 : i32
    %c0_i32_1 = arith.constant 0 : i32
    return %arg0, %c0_i32, %c0_i32_0 : i32, i32, i32
  }
  func.func @transform_3(%arg0: i32) -> (i32, i32) {
    %c0_i32 = arith.constant 0 : i32
    %c0_i32_0 = arith.constant 0 : i32
    %c0_i32_1 = arith.constant 0 : i32
    return %c0_i32, %c0_i32_0 : i32, i32
  }
  func.func @transform_4(%arg0: i32) -> (i32, i32) {
    %c0_i32 = arith.constant 0 : i32
    %c0_i32_0 = arith.constant 0 : i32
    %c0_i32_1 = arith.constant 0 : i32
    return %c0_i32, %c0_i32_0 : i32, i32
  }
  func.func @transform_5(%arg0: i32) -> (i32, i32) {
    %c0_i32 = arith.constant 0 : i32
    %c0_i32_0 = arith.constant 0 : i32
    %c0_i32_1 = arith.constant 0 : i32
    return %c0_i32, %c0_i32_0 : i32, i32
  }
  func.func @transform_6(%arg0: i32) -> (i32, i32, i32) {
    %c0_i32 = arith.constant 0 : i32
    %c0_i32_0 = arith.constant 0 : i32
    %c0_i32_1 = arith.constant 0 : i32
    return %arg0, %c0_i32, %c0_i32_0 : i32, i32, i32
  }
  func.func @transform_7(%arg0: i32) -> (i32, i32, i32) {
    %c0_i32 = arith.constant 0 : i32
    %c0_i32_0 = arith.constant 0 : i32
    %c0_i32_1 = arith.constant 0 : i32
    return %arg0, %c0_i32, %c0_i32_0 : i32, i32, i32
  }
  func.func @transform_8(%arg0: i32) -> (i32, i32, i32) {
    %c0_i32 = arith.constant 0 : i32
    %c0_i32_0 = arith.constant 0 : i32
    %c0_i32_1 = arith.constant 0 : i32
    return %arg0, %c0_i32, %c0_i32_0 : i32, i32, i32
  }
  func.func @transform_9(%arg0: i32) -> (i32, i32, i32) {
    %c0_i32 = arith.constant 0 : i32
    %c0_i32_0 = arith.constant 0 : i32
    %c0_i32_1 = arith.constant 0 : i32
    return %arg0, %c0_i32, %c0_i32_0 : i32, i32, i32
  }
  func.func @transform_10(%arg0: i32) -> (i32, i32, i32) {
    %c0_i32 = arith.constant 0 : i32
    %c0_i32_0 = arith.constant 0 : i32
    %c0_i32_1 = arith.constant 0 : i32
    return %arg0, %c0_i32, %c0_i32_0 : i32, i32, i32
  }
  func.func @transform_11(%arg0: i32) -> (i32, i32) {
    %c0_i32 = arith.constant 0 : i32
    %c0_i32_0 = arith.constant 0 : i32
    %c0_i32_1 = arith.constant 0 : i32
    return %c0_i32, %c0_i32_0 : i32, i32
  }
  func.func @transform_12(%arg0: i32) -> (i32, i32) {
    %c0_i32 = arith.constant 0 : i32
    %c0_i32_0 = arith.constant 0 : i32
    %c0_i32_1 = arith.constant 0 : i32
    return %c0_i32, %c0_i32_0 : i32, i32
  }
  func.func @transform_13(%arg0: i32) -> (i32, i32) {
    %c0_i32 = arith.constant 0 : i32
    %c0_i32_0 = arith.constant 0 : i32
    %c0_i32_1 = arith.constant 0 : i32
    return %c0_i32, %c0_i32_0 : i32, i32
  }
}

</mosaic_0001>

<llo_original>
// kernel: full_stdp_forward.1
$region0: #{full_stdp_forward.1}
  #allocation0 [shape = 'u32[]', space=smem, size = 0x4, offset = 0x4, fixed_abs, tag = 'smem constant byte address 0x4 - core index']
  #allocation1 [shape = 'u32[144,128]{1,0:T(1,128)}', space=vmem, size = 0x12000, scoped, tag = 'internal scratch']
  #allocation2 [shape = 'f32[8,128]{1,0:T(8,128)}', space=vmem, size = 0x1000, scoped, tag = 'scratch operand']
  %s0 = inlined_call_operand.vmem [shape: f32[8,8,128], index: 0, kind: input, shape index: {}]
  %s1 = inlined_call_operand.vmem [shape: f32[8,8,128], index: 1, kind: input, shape index: {}]
  %s2 = inlined_call_operand.vmem [shape: f32[8,8,128], index: 2, kind: input, shape index: {}]
  %s3 = inlined_call_operand.hbm [shape: f32[8,128], index: 3, kind: input, shape index: {}, may-alias: {3,11}]
  %s4 = inlined_call_operand.hbm [shape: f32[8,128], index: 4, kind: input, shape index: {}, may-alias: {4,12}]
  %s5 = inlined_call_operand.hbm [shape: f32[8,128], index: 5, kind: input, shape index: {}, may-alias: {5,13}]
  %s6 = inlined_call_operand.hbm [shape: f32[8,8,128], index: 6, kind: output, shape index: {0}]
  %s7 = inlined_call_operand.hbm [shape: f32[8,128,128], index: 7, kind: output, shape index: {1}]
  %s8 = inlined_call_operand.hbm [shape: f32[8,128,128], index: 8, kind: output, shape index: {2}]
  %s9 = inlined_call_operand.hbm [shape: f32[8,128,128], index: 9, kind: output, shape index: {3}]
  %s10 = inlined_call_operand.hbm [shape: f32[8,128,128], index: 10, kind: output, shape index: {4}]
  %s11 = inlined_call_operand.hbm [shape: f32[8,128], index: 11, kind: output, shape index: {5}, may-alias: {3,11}]
  %s12 = inlined_call_operand.hbm [shape: f32[8,128], index: 12, kind: output, shape index: {6}, may-alias: {4,12}]
  %s13 = inlined_call_operand.hbm [shape: f32[8,128], index: 13, kind: output, shape index: {7}, may-alias: {5,13}]
  %14 = xla_tuple %s6, %s7, %s8, %s9, %s10, %s11, %s12, %s13
  %s15 = sld [smem:[#allocation0]]
  $region129: #{full_stdp_forward.1} parent=0
    _
  %s17 = ssub.s32 1, %s15
  %s18 = scalar_select 0, %s17, %s15
  $region1: #{full_stdp_forward.1} parent=0
    #allocation3 [shape = 'u8[4096]{0}', space=vmem, size = 0x1000, scoped, tag = 'input window, operand 3, single buffered']
    #allocation4 [shape = 's32[2]{0}', space=sflag, size = 0x8, scoped, tag = 'scoped memory for full_stdp_forward.1']
    #allocation5 [shape = 's32[2]{0}', space=sflag, size = 0x8, scoped, tag = 'scoped memory for full_stdp_forward.1']
    #allocation6 [shape = 'u8[4096]{0}', space=vmem, size = 0x1000, scoped, tag = 'input window, operand 4, single buffered']
    #allocation7 [shape = 's32[1]{0}', space=sflag, size = 0x4, scoped, tag = 'scoped memory for full_stdp_forward.1']
    #allocation8 [shape = 'u8[4096]{0}', space=vmem, size = 0x1000, scoped, tag = 'input window, operand 5, single buffered']
    #allocation9 [shape = 'u8[32768]{0}', space=vmem, size = 0x8000, scoped, tag = 'output window, operand 0']
    #allocation10 [shape = 'u8[524288]{0}', space=vmem, size = 0x80000, scoped, tag = 'output window, operand 1']
    #allocation11 [shape = 's32[2]{0}', space=sflag, size = 0x8, scoped, tag = 'scoped memory for full_stdp_forward.1']
    #allocation12 [shape = 'u8[524288]{0}', space=vmem, size = 0x80000, scoped, tag = 'output window, operand 2']
    #allocation13 [shape = 'u8[524288]{0}', space=vmem, size = 0x80000, scoped, tag = 'output window, operand 3']
    #allocation14 [shape = 's32[2]{0}', space=sflag, size = 0x8, scoped, tag = 'scoped memory for full_stdp_forward.1']
    #allocation15 [shape = 'u8[524288]{0}', space=vmem, size = 0x80000, scoped, tag = 'output window, operand 4']
    #allocation16 [shape = 'u8[4096]{0}', space=vmem, size = 0x1000, scoped, tag = 'output window, operand 5, single buffered']
    #allocation17 [shape = 's32[1]{0}', space=sflag, size = 0x4, scoped, tag = 'scoped memory for full_stdp_forward.1']
    #allocation18 [shape = 'u8[4096]{0}', space=vmem, size = 0x1000, scoped, tag = 'output window, operand 6, single buffered']
    #allocation19 [shape = 'u8[4096]{0}', space=vmem, size = 0x1000, scoped, tag = 'output window, operand 7, single buffered']
    #allocation20 [shape = 's32[1]{0}', space=sflag, size = 0x4, scoped, tag = 'scoped memory for full_stdp_forward.1']
    %19 = vsyncpa [#allocation4], 0
    %20 = vsyncpa [#allocation7], 0
    %21 = vsyncpa [#allocation5], 0
    %s22 = scalar_lea.sflag [#allocation5], 1
    %23 = vsyncpa %s22, 0
    %24 = vsyncpa [#allocation11], 0
    %s25 = scalar_lea.sflag [#allocation11], 1
    %26 = vsyncpa %s25, 0
    %27 = vsyncpa [#allocation14], 0
    %s28 = scalar_lea.sflag [#allocation14], 1
    %29 = vsyncpa %s28, 0
    %30 = vsyncpa [#allocation17], 0
    %31 = vsyncpa [#allocation20], 0
    loop: start=0, step=1, limit=4
    $region2: #{full_stdp_forward.1} parent=1 // loop_pre_header
      _
    $region3: #{full_stdp_forward.1} parent=1 // loop_header
      %s33 = sphi 0, %s37
      %p34 = scmp.ge.s32.totalorder %s33, 4
      %s43 = sphi 0, %s45
      %s46 = sphi 0, %s43
      %s47 = sphi 0, %s46
      %s63 = sphi 0, %s47
      %s69 = sphi 0, %s71
      %s72 = sphi 0, %s69
      %s73 = sphi 0, %s72
      %s89 = sphi 0, %s73
      %s95 = sphi 0, %s97
      %s98 = sphi 0, %s95
      %s99 = sphi 0, %s98
      %s115 = sphi 0, %s99
      %s119 = sphi 0, %s119
      %s121 = sphi 0, %s119
      %s122 = sphi 0, %s121
      %s136 = sphi 0, %s122
      %s140 = sphi 0, %s140
      %s142 = sphi 0, %s140
      %s143 = sphi 0, %s142
      %s157 = sphi 0, %s143
      %s161 = sphi 0, %s161
      %s163 = sphi 0, %s161
      %s164 = sphi 0, %s163
      %s178 = sphi 0, %s164
      %s184 = sphi 0, %s186
      %s187 = sphi 0, %s184
      %s188 = sphi 0, %s187
      %s204 = sphi 0, %s188
      %s210 = sphi 0, %s212
      %s213 = sphi 0, %s210
      %s214 = sphi 0, %s213
      %s230 = sphi 0, %s214
      %s236 = sphi 0, %s238
      %s239 = sphi 0, %s236
      %s240 = sphi 0, %s239
      %s256 = sphi 0, %s240
      %s262 = sphi 0, %s264
      %s265 = sphi 0, %s262
      %s266 = sphi 0, %s265
      %s282 = sphi 0, %s266
      %s288 = sphi 0, %s290
      %s291 = sphi 0, %s288
      %s292 = sphi 0, %s291
      %s308 = sphi 0, %s292
      %s312 = sphi 0, %s312
      %s314 = sphi 0, %s312
      %s315 = sphi 0, %s314
      %s329 = sphi 0, %s315
      %s333 = sphi 0, %s333
      %s335 = sphi 0, %s333
      %s336 = sphi 0, %s335
      %s350 = sphi 0, %s336
      %s354 = sphi 0, %s354
      %s356 = sphi 0, %s354
      %s357 = sphi 0, %s356
      %s371 = sphi 0, %s357
    $region4: #{full_stdp_forward.1} parent=1 // loop_header_branch
      %36 = sbr.rel (%p34) target = $region8
    $region5: #{full_stdp_forward.1} parent=1 // loop_body
      %s38 = ssub.s32 %s33, 1
      %s39 = ssub.s32 %s33, 2
      %s40 = sadd.s32 %s33, 1
      %s41 = ssub.s32 %s33, %s40
      %p42 = scmp.eq.s32.totalorder %s41, 0
      %s44 = sadd.s32 %s43, 1
      %s45 = scalar_select %p42, %s43, %s44
      %p48 = pneg %p42
      %p49 = scmp.eq.s32.totalorder %s33, 1
      %p50 = por %p48, %p49
      %p51 = scmp.ne.s32.totalorder %s43, %s46
      %p52 = scmp.eq.s32.totalorder %s33, 0
      %p53 = por %p51, %p52
      %p54 = scmp.ne.s32.totalorder %s43, %s46
      %p55 = scmp.eq.s32.totalorder %s38, 1
      %p56 = por %p54, %p55
      %p57 = scmp.ne.s32.totalorder %s46, %s47
      %p58 = scmp.eq.s32.totalorder %s38, 0
      %p59 = por %p57, %p58
      %p60 = scmp.ne.s32.totalorder %s46, %s47
      %p61 = scmp.eq.s32.totalorder %s39, 1
      %p62 = por %p60, %p61
      %p64 = scmp.ne.s32.totalorder %s47, %s63
      %p65 = scmp.eq.s32.totalorder %s39, 0
      %p66 = por %p64, %p65
      %s67 = ssub.s32 %s33, %s40
      %p68 = scmp.eq.s32.totalorder %s67, 0
      %s70 = sadd.s32 %s69, 1
      %s71 = scalar_select %p68, %s69, %s70
      %p74 = pneg %p68
      %p75 = scmp.eq.s32.totalorder %s33, 1
      %p76 = por %p74, %p75
      %p77 = scmp.ne.s32.totalorder %s69, %s72
      %p78 = scmp.eq.s32.totalorder %s33, 0
      %p79 = por %p77, %p78
      %p80 = scmp.ne.s32.totalorder %s69, %s72
      %p81 = scmp.eq.s32.totalorder %s38, 1
      %p82 = por %p80, %p81
      %p83 = scmp.ne.s32.totalorder %s72, %s73
      %p84 = scmp.eq.s32.totalorder %s38, 0
      %p85 = por %p83, %p84
      %p86 = scmp.ne.s32.totalorder %s72, %s73
      %p87 = scmp.eq.s32.totalorder %s39, 1
      %p88 = por %p86, %p87
      %p90 = scmp.ne.s32.totalorder %s73, %s89
      %p91 = scmp.eq.s32.totalorder %s39, 0
      %p92 = por %p90, %p91
      %s93 = ssub.s32 %s33, %s40
      %p94 = scmp.eq.s32.totalorder %s93, 0
      %s96 = sadd.s32 %s95, 1
      %s97 = scalar_select %p94, %s95, %s96
      %p100 = pneg %p94
      %p101 = scmp.eq.s32.totalorder %s33, 1
      %p102 = por %p100, %p101
      %p103 = scmp.ne.s32.totalorder %s95, %s98
      %p104 = scmp.eq.s32.totalorder %s33, 0
      %p105 = por %p103, %p104
      %p106 = scmp.ne.s32.totalorder %s95, %s98
      %p107 = scmp.eq.s32.totalorder %s38, 1
      %p108 = por %p106, %p107
      %p109 = scmp.ne.s32.totalorder %s98, %s99
      %p110 = scmp.eq.s32.totalorder %s38, 0
      %p111 = por %p109, %p110
      %p112 = scmp.ne.s32.totalorder %s98, %s99
      %p113 = scmp.eq.s32.totalorder %s39, 1
      %p114 = por %p112, %p113
      %p116 = scmp.ne.s32.totalorder %s99, %s115
      %p117 = scmp.eq.s32.totalorder %s39, 0
      %p118 = por %p116, %p117
      %s120 = sadd.s32 %s119, 1
      %p123 = scmp.eq.s32.totalorder %s33, 1
      %p124 = scmp.ne.s32.totalorder %s119, %s121
      %p125 = scmp.eq.s32.totalorder %s33, 0
      %p126 = por %p124, %p125
      %p127 = scmp.ne.s32.totalorder %s119, %s121
      %p128 = scmp.eq.s32.totalorder %s38, 1
      %p129 = por %p127, %p128
      %p130 = scmp.ne.s32.totalorder %s121, %s122
      %p131 = scmp.eq.s32.totalorder %s38, 0
      %p132 = por %p130, %p131
      %p133 = scmp.ne.s32.totalorder %s121, %s122
      %p134 = scmp.eq.s32.totalorder %s39, 1
      %p135 = por %p133, %p134
      %p137 = scmp.ne.s32.totalorder %s122, %s136
      %p138 = scmp.eq.s32.totalorder %s39, 0
      %p139 = por %p137, %p138
      %s141 = sadd.s32 %s140, 1
      %p144 = scmp.eq.s32.totalorder %s33, 1
      %p145 = scmp.ne.s32.totalorder %s140, %s142
      %p146 = scmp.eq.s32.totalorder %s33, 0
      %p147 = por %p145, %p146
      %p148 = scmp.ne.s32.totalorder %s140, %s142
      %p149 = scmp.eq.s32.totalorder %s38, 1
      %p150 = por %p148, %p149
      %p151 = scmp.ne.s32.totalorder %s142, %s143
      %p152 = scmp.eq.s32.totalorder %s38, 0
      %p153 = por %p151, %p152
      %p154 = scmp.ne.s32.totalorder %s142, %s143
      %p155 = scmp.eq.s32.totalorder %s39, 1
      %p156 = por %p154, %p155
      %p158 = scmp.ne.s32.totalorder %s143, %s157
      %p159 = scmp.eq.s32.totalorder %s39, 0
      %p160 = por %p158, %p159
      %s162 = sadd.s32 %s161, 1
      %p165 = scmp.eq.s32.totalorder %s33, 1
      %p166 = scmp.ne.s32.totalorder %s161, %s163
      %p167 = scmp.eq.s32.totalorder %s33, 0
      %p168 = por %p166, %p167
      %p169 = scmp.ne.s32.totalorder %s161, %s163
      %p170 = scmp.eq.s32.totalorder %s38, 1
      %p171 = por %p169, %p170
      %p172 = scmp.ne.s32.totalorder %s163, %s164
      %p173 = scmp.eq.s32.totalorder %s38, 0
      %p174 = por %p172, %p173
      %p175 = scmp.ne.s32.totalorder %s163, %s164
      %p176 = scmp.eq.s32.totalorder %s39, 1
      %p177 = por %p175, %p176
      %p179 = scmp.ne.s32.totalorder %s164, %s178
      %p180 = scmp.eq.s32.totalorder %s39, 0
      %p181 = por %p179, %p180
      %s182 = ssub.s32 %s33, %s40
      %p183 = scmp.eq.s32.totalorder %s182, 0
      %s185 = sadd.s32 %s184, 1
      %s186 = scalar_select %p183, %s184, %s185
      %p189 = pneg %p183
      %p190 = scmp.eq.s32.totalorder %s33, 1
      %p191 = por %p189, %p190
      %p192 = scmp.ne.s32.totalorder %s184, %s187
      %p193 = scmp.eq.s32.totalorder %s33, 0
      %p194 = por %p192, %p193
      %p195 = scmp.ne.s32.totalorder %s184, %s187
      %p196 = scmp.eq.s32.totalorder %s38, 1
      %p197 = por %p195, %p196
      %p198 = scmp.ne.s32.totalorder %s187, %s188
      %p199 = scmp.eq.s32.totalorder %s38, 0
      %p200 = por %p198, %p199
      %p201 = scmp.ne.s32.totalorder %s187, %s188
      %p202 = scmp.eq.s32.totalorder %s39, 1
      %p203 = por %p201, %p202
      %p205 = scmp.ne.s32.totalorder %s188, %s204
      %p206 = scmp.eq.s32.totalorder %s39, 0
      %p207 = por %p205, %p206
      %s208 = ssub.s32 %s33, %s40
      %p209 = scmp.eq.s32.totalorder %s208, 0
      %s211 = sadd.s32 %s210, 1
      %s212 = scalar_select %p209, %s210, %s211
      %p215 = pneg %p209
      %p216 = scmp.eq.s32.totalorder %s33, 1
      %p217 = por %p215, %p216
      %p218 = scmp.ne.s32.totalorder %s210, %s213
      %p219 = scmp.eq.s32.totalorder %s33, 0
      %p220 = por %p218, %p219
      %p221 = scmp.ne.s32.totalorder %s210, %s213
      %p222 = scmp.eq.s32.totalorder %s38, 1
      %p223 = por %p221, %p222
      %p224 = scmp.ne.s32.totalorder %s213, %s214
      %p225 = scmp.eq.s32.totalorder %s38, 0
      %p226 = por %p224, %p225
      %p227 = scmp.ne.s32.totalorder %s213, %s214
      %p228 = scmp.eq.s32.totalorder %s39, 1
      %p229 = por %p227, %p228
      %p231 = scmp.ne.s32.totalorder %s214, %s230
      %p232 = scmp.eq.s32.totalorder %s39, 0
      %p233 = por %p231, %p232
      %s234 = ssub.s32 %s33, %s40
      %p235 = scmp.eq.s32.totalorder %s234, 0
      %s237 = sadd.s32 %s236, 1
      %s238 = scalar_select %p235, %s236, %s237
      %p241 = pneg %p235
      %p242 = scmp.eq.s32.totalorder %s33, 1
      %p243 = por %p241, %p242
      %p244 = scmp.ne.s32.totalorder %s236, %s239
      %p245 = scmp.eq.s32.totalorder %s33, 0
      %p246 = por %p244, %p245
      %p247 = scmp.ne.s32.totalorder %s236, %s239
      %p248 = scmp.eq.s32.totalorder %s38, 1
      %p249 = por %p247, %p248
      %p250 = scmp.ne.s32.totalorder %s239, %s240
      %p251 = scmp.eq.s32.totalorder %s38, 0
      %p252 = por %p250, %p251
      %p253 = scmp.ne.s32.totalorder %s239, %s240
      %p254 = scmp.eq.s32.totalorder %s39, 1
      %p255 = por %p253, %p254
      %p257 = scmp.ne.s32.totalorder %s240, %s256
      %p258 = scmp.eq.s32.totalorder %s39, 0
      %p259 = por %p257, %p258
      %s260 = ssub.s32 %s33, %s40
      %p261 = scmp.eq.s32.totalorder %s260, 0
      %s263 = sadd.s32 %s262, 1
      %s264 = scalar_select %p261, %s262, %s263
      %p267 = pneg %p261
      %p268 = scmp.eq.s32.totalorder %s33, 1
      %p269 = por %p267, %p268
      %p270 = scmp.ne.s32.totalorder %s262, %s265
      %p271 = scmp.eq.s32.totalorder %s33, 0
      %p272 = por %p270, %p271
      %p273 = scmp.ne.s32.totalorder %s262, %s265
      %p274 = scmp.eq.s32.totalorder %s38, 1
      %p275 = por %p273, %p274
      %p276 = scmp.ne.s32.totalorder %s265, %s266
      %p277 = scmp.eq.s32.totalorder %s38, 0
      %p278 = por %p276, %p277
      %p279 = scmp.ne.s32.totalorder %s265, %s266
      %p280 = scmp.eq.s32.totalorder %s39, 1
      %p281 = por %p279, %p280
      %p283 = scmp.ne.s32.totalorder %s266, %s282
      %p284 = scmp.eq.s32.totalorder %s39, 0
      %p285 = por %p283, %p284
      %s286 = ssub.s32 %s33, %s40
      %p287 = scmp.eq.s32.totalorder %s286, 0
      %s289 = sadd.s32 %s288, 1
      %s290 = scalar_select %p287, %s288, %s289
      %p293 = pneg %p287
      %p294 = scmp.eq.s32.totalorder %s33, 1
      %p295 = por %p293, %p294
      %p296 = scmp.ne.s32.totalorder %s288, %s291
      %p297 = scmp.eq.s32.totalorder %s33, 0
      %p298 = por %p296, %p297
      %p299 = scmp.ne.s32.totalorder %s288, %s291
      %p300 = scmp.eq.s32.totalorder %s38, 1
      %p301 = por %p299, %p300
      %p302 = scmp.ne.s32.totalorder %s291, %s292
      %p303 = scmp.eq.s32.totalorder %s38, 0
      %p304 = por %p302, %p303
      %p305 = scmp.ne.s32.totalorder %s291, %s292
      %p306 = scmp.eq.s32.totalorder %s39, 1
      %p307 = por %p305, %p306
      %p309 = scmp.ne.s32.totalorder %s292, %s308
      %p310 = scmp.eq.s32.totalorder %s39, 0
      %p311 = por %p309, %p310
      %s313 = sadd.s32 %s312, 1
      %p316 = scmp.eq.s32.totalorder %s33, 1
      %p317 = scmp.ne.s32.totalorder %s312, %s314
      %p318 = scmp.eq.s32.totalorder %s33, 0
      %p319 = por %p317, %p318
      %p320 = scmp.ne.s32.totalorder %s312, %s314
      %p321 = scmp.eq.s32.totalorder %s38, 1
      %p322 = por %p320, %p321
      %p323 = scmp.ne.s32.totalorder %s314, %s315
      %p324 = scmp.eq.s32.totalorder %s38, 0
      %p325 = por %p323, %p324
      %p326 = scmp.ne.s32.totalorder %s314, %s315
      %p327 = scmp.eq.s32.totalorder %s39, 1
      %p328 = por %p326, %p327
      %p330 = scmp.ne.s32.totalorder %s315, %s329
      %p331 = scmp.eq.s32.totalorder %s39, 0
      %p332 = por %p330, %p331
      %s334 = sadd.s32 %s333, 1
      %p337 = scmp.eq.s32.totalorder %s33, 1
      %p338 = scmp.ne.s32.totalorder %s333, %s335
      %p339 = scmp.eq.s32.totalorder %s33, 0
      %p340 = por %p338, %p339
      %p341 = scmp.ne.s32.totalorder %s333, %s335
      %p342 = scmp.eq.s32.totalorder %s38, 1
      %p343 = por %p341, %p342
      %p344 = scmp.ne.s32.totalorder %s335, %s336
      %p345 = scmp.eq.s32.totalorder %s38, 0
      %p346 = por %p344, %p345
      %p347 = scmp.ne.s32.totalorder %s335, %s336
      %p348 = scmp.eq.s32.totalorder %s39, 1
      %p349 = por %p347, %p348
      %p351 = scmp.ne.s32.totalorder %s336, %s350
      %p352 = scmp.eq.s32.totalorder %s39, 0
      %p353 = por %p351, %p352
      %s355 = sadd.s32 %s354, 1
      %p358 = scmp.eq.s32.totalorder %s33, 1
      %p359 = scmp.ne.s32.totalorder %s354, %s356
      %p360 = scmp.eq.s32.totalorder %s33, 0
      %p361 = por %p359, %p360
      %p362 = scmp.ne.s32.totalorder %s354, %s356
      %p363 = scmp.eq.s32.totalorder %s38, 1
      %p364 = por %p362, %p363
      %p365 = scmp.ne.s32.totalorder %s356, %s357
      %p366 = scmp.eq.s32.totalorder %s38, 0
      %p367 = por %p365, %p366
      %p368 = scmp.ne.s32.totalorder %s356, %s357
      %p369 = scmp.eq.s32.totalorder %s39, 1
      %p370 = por %p368, %p369
      %p372 = scmp.ne.s32.totalorder %s357, %s371
      %p373 = scmp.eq.s32.totalorder %s39, 0
      %p374 = por %p372, %p373
      %p375 = scmp.le.s32.totalorder 1, %s33
      %p376 = scmp.lt.s32.totalorder %s33, 3
      %p377 = pnand %p375, %p376
      %p378 = pneg %p377
      // Predicated region
      $region9: #{full_stdp_forward.1} parent=5 // pred_check
        _
      $region10: #{full_stdp_forward.1} parent=5 // pred_check_branch
        %380 = sbr.rel (%p377) target = $region12
      $region11: #{full_stdp_forward.1} parent=5 // pred_region
        %s381 = ssub.s32 %s33, 1
        // Predicated region
        $region13: #{full_stdp_forward.1} parent=11 // pred_check
          %p382 = pneg %p132
        $region14: #{full_stdp_forward.1} parent=11 // pred_check_branch
          %384 = sbr.rel (%p382) target = $region16
        $region15: #{full_stdp_forward.1} parent=11 // pred_region
          %s386 = ssub.s32 128, 128
          %387 = vsyncadd [#allocation4], %s386
          %s389 = sshll.u32 [#allocation3], 4
          %s390 = int_to_ptr.vmem [resolvable:$true] %s389
          %392 = dma.hbm_to_vmem [thread:$0]  %s3, 128, %s390, [#allocation4]
        $region16: #{full_stdp_forward.1} parent=11 // pred_fallthru
          _
        // Predicated region
        $region17: #{full_stdp_forward.1} parent=11 // pred_check
          %p393 = pneg %p153
        $region18: #{full_stdp_forward.1} parent=11 // pred_check_branch
          %395 = sbr.rel (%p393) target = $region20
        $region19: #{full_stdp_forward.1} parent=11 // pred_region
          %s397 = ssub.s32 128, 128
          %398 = vsyncadd [#allocation7], %s397
          %s400 = sshll.u32 [#allocation6], 4
          %s401 = int_to_ptr.vmem [resolvable:$true] %s400
          %403 = dma.hbm_to_vmem [thread:$0]  %s4, 128, %s401, [#allocation7]
        $region20: #{full_stdp_forward.1} parent=11 // pred_fallthru
          _
        // Predicated region
        $region21: #{full_stdp_forward.1} parent=11 // pred_check
          %p404 = pneg %p174
        $region22: #{full_stdp_forward.1} parent=11 // pred_check_branch
          %406 = sbr.rel (%p404) target = $region24
        $region23: #{full_stdp_forward.1} parent=11 // pred_region
          %s408 = ssub.s32 128, 128
          %409 = vsyncadd [#allocation7], %s408
          %s411 = sshll.u32 [#allocation8], 4
          %s412 = int_to_ptr.vmem [resolvable:$true] %s411
          %414 = dma.hbm_to_vmem [thread:$0]  %s5, 128, %s412, [#allocation7]
        $region24: #{full_stdp_forward.1} parent=11 // pred_fallthru
          _
      $region12: #{full_stdp_forward.1} parent=5 // pred_fallthru
        _
      %p415 = scmp.lt.s32.totalorder %s33, 2
      // Predicated region
      $region25: #{full_stdp_forward.1} parent=5 // pred_check
        %p416 = pneg %p415
      $region26: #{full_stdp_forward.1} parent=5 // pred_check_branch
        %418 = sbr.rel (%p416) target = $region28
      $region27: #{full_stdp_forward.1} parent=5 // pred_region
        // Predicated region
        $region29: #{full_stdp_forward.1} parent=27 // pred_check
          %p419 = pneg %p53
        $region30: #{full_stdp_forward.1} parent=27 // pred_check_branch
          %421 = sbr.rel (%p419) target = $region32
        $region31: #{full_stdp_forward.1} parent=27 // pred_region
          %s422 = smul.u32 4, %s33
          %p423 = scmp.lt.s32.totalorder %s422, 7
          %s424 = scalar_select %p423, %s422, 7
          %s425 = smul.addr %s424, 8
          %s426 = scalar_lea.vmem %s0, %s425
          %s427 = smul.u32 4, %s33
        $region32: #{full_stdp_forward.1} parent=27 // pred_fallthru
          _
        // Predicated region
        $region33: #{full_stdp_forward.1} parent=27 // pred_check
          %p428 = pneg %p79
        $region34: #{full_stdp_forward.1} parent=27 // pred_check_branch
          %430 = sbr.rel (%p428) target = $region36
        $region35: #{full_stdp_forward.1} parent=27 // pred_region
          %s431 = smul.u32 4, %s33
          %p432 = scmp.lt.s32.totalorder %s431, 7
          %s433 = scalar_select %p432, %s431, 7
          %s434 = smul.addr %s433, 8
          %s435 = scalar_lea.vmem %s1, %s434
          %s436 = smul.u32 4, %s33
        $region36: #{full_stdp_forward.1} parent=27 // pred_fallthru
          _
        // Predicated region
        $region37: #{full_stdp_forward.1} parent=27 // pred_check
          %p437 = pneg %p105
        $region38: #{full_stdp_forward.1} parent=27 // pred_check_branch
          %439 = sbr.rel (%p437) target = $region40
        $region39: #{full_stdp_forward.1} parent=27 // pred_region
          %s440 = smul.u32 4, %s33
          %p441 = scmp.lt.s32.totalorder %s440, 7
          %s442 = scalar_select %p441, %s440, 7
          %s443 = smul.addr %s442, 8
          %s444 = scalar_lea.vmem %s2, %s443
          %s445 = smul.u32 4, %s33
        $region40: #{full_stdp_forward.1} parent=27 // pred_fallthru
          _
      $region28: #{full_stdp_forward.1} parent=5 // pred_fallthru
        _
      %p446 = scmp.le.s32.totalorder 1, %s33
      %p447 = scmp.lt.s32.totalorder %s33, 3
      %p448 = pnand %p446, %p447
      %p449 = pneg %p448
      // Predicated region
      $region41: #{full_stdp_forward.1} parent=5 // pred_check
        _
      $region42: #{full_stdp_forward.1} parent=5 // pred_check_branch
        %451 = sbr.rel (%p448) target = $region44
      $region43: #{full_stdp_forward.1} parent=5 // pred_region
        %s452 = ssub.s32 %s33, 1
        // Predicated region
        $region45: #{full_stdp_forward.1} parent=43 // pred_check
          %p453 = pneg %p132
        $region46: #{full_stdp_forward.1} parent=43 // pred_check_branch
          %455 = sbr.rel (%p453) target = $region48
        $region47: #{full_stdp_forward.1} parent=43 // pred_region
          %456 = dma.done [#allocation4], 128
        $region48: #{full_stdp_forward.1} parent=43 // pred_fallthru
          _
        // Predicated region
        $region49: #{full_stdp_forward.1} parent=43 // pred_check
          %p457 = pneg %p153
        $region50: #{full_stdp_forward.1} parent=43 // pred_check_branch
          %459 = sbr.rel (%p457) target = $region52
        $region51: #{full_stdp_forward.1} parent=43 // pred_region
          %460 = dma.done [#allocation7], 128
        $region52: #{full_stdp_forward.1} parent=43 // pred_fallthru
          _
        // Predicated region
        $region53: #{full_stdp_forward.1} parent=43 // pred_check
          %p461 = pneg %p174
        $region54: #{full_stdp_forward.1} parent=43 // pred_check_branch
          %463 = sbr.rel (%p461) target = $region56
        $region55: #{full_stdp_forward.1} parent=43 // pred_region
          %464 = dma.done [#allocation7], 128
        $region56: #{full_stdp_forward.1} parent=43 // pred_fallthru
          _
        %s465 = smul.u32 4, %s38
        %p466 = scmp.lt.s32.totalorder %s465, 7
        %s467 = scalar_select %p466, %s465, 7
        %s468 = smul.addr %s467, 8
        %s469 = scalar_lea.vmem %s0, %s468
        %p470 = pneg %p59
        %p471 = pneg %p56
        %s472 = smul.u32 4, %s38
        %p473 = scmp.lt.s32.totalorder %s472, 7
        %s474 = scalar_select %p473, %s472, 7
        %s475 = smul.addr %s474, 8
        %s476 = scalar_lea.vmem %s1, %s475
        %p477 = pneg %p85
        %p478 = pneg %p82
        %s479 = smul.u32 4, %s38
        %p480 = scmp.lt.s32.totalorder %s479, 7
        %s481 = scalar_select %p480, %s479, 7
        %s482 = smul.addr %s481, 8
        %s483 = scalar_lea.vmem %s2, %s482
        %p484 = pneg %p111
        %p485 = pneg %p108
        %p486 = pneg %p132
        %p487 = pneg %p129
        %p488 = pneg %p153
        %p489 = pneg %p150
        %p490 = pneg %p174
        %p491 = pneg %p171
        %p492 = pneg %p200
        %p493 = pneg %p197
        %s494 = sand.u32 %s187, 1
        %s495 = scalar_lea.sflag [#allocation5], %s494
        %s496 = sand.u32 %s187, 1
        %s497 = smul.addr %s496, 32
        %s498 = scalar_lea.vmem [#allocation9], %s497
        %p499 = pneg %p226
        %p500 = pneg %p223
        %s501 = sand.u32 %s38, 1
        %s502 = scalar_lea.sflag [#allocation11], %s501
        %s503 = sand.u32 %s213, 1
        %s504 = smul.addr %s503, 512
        %s505 = scalar_lea.vmem [#allocation10], %s504
        %p506 = pneg %p252
        %p507 = pneg %p249
        %s508 = sand.u32 %s38, 1
        %s509 = scalar_lea.sflag [#allocation11], %s508
        %s510 = sand.u32 %s239, 1
        %s511 = smul.addr %s510, 512
        %s512 = scalar_lea.vmem [#allocation12], %s511
        %p513 = pneg %p278
        %p514 = pneg %p275
        %s515 = sand.u32 %s38, 1
        %s516 = scalar_lea.sflag [#allocation14], %s515
        %s517 = sand.u32 %s265, 1
        %s518 = smul.addr %s517, 512
        %s519 = scalar_lea.vmem [#allocation13], %s518
        %p520 = pneg %p304
        %p521 = pneg %p301
        %s522 = sand.u32 %s38, 1
        %s523 = scalar_lea.sflag [#allocation14], %s522
        %s524 = sand.u32 %s291, 1
        %s525 = smul.addr %s524, 512
        %s526 = scalar_lea.vmem [#allocation15], %s525
        %p527 = pneg %p325
        %p528 = pneg %p322
        %p529 = pneg %p346
        %p530 = pneg %p343
        %p531 = pneg %p367
        %p532 = pneg %p364
        %s533 = smul.u32 4, %s38
        %p534 = scmp.lt.s32.totalorder %s533, 7
        %s535 = scalar_select %p534, %s533, 7
        %s536 = smul.addr %s535, 8
        %s537 = scalar_lea.vmem %s0, %s536
        %s538 = smul.u32 4, %s38
        %s539 = smul.u32 4, %s38
        %p540 = scmp.lt.s32.totalorder %s539, 7
        %s541 = scalar_select %p540, %s539, 7
        %s542 = smul.addr %s541, 8
        %s543 = scalar_lea.vmem %s1, %s542
        %s544 = smul.u32 4, %s38
        %s545 = smul.u32 4, %s38
        %p546 = scmp.lt.s32.totalorder %s545, 7
        %s547 = scalar_select %p546, %s545, 7
        %s548 = smul.addr %s547, 8
        %s549 = scalar_lea.vmem %s2, %s548
        %s550 = smul.u32 4, %s38
        %s551 = smul.u32 4, %s38
        %s552 = smul.u32 4, %s38
        %s553 = smul.u32 4, %s38
        %s554 = smul.u32 4, %s38
        %s555 = smul.u32 4, %s38
        %p557 = scmp.eq.s32.totalorder %s38, 0
        // Predicated region
        $region57: #{full_stdp_forward.1} parent=43 // pred_check
          %p558 = pneg %p557
        $region58: #{full_stdp_forward.1} parent=43 // pred_check_branch
          %560 = sbr.rel (%p558) target = $region60
        $region59: #{full_stdp_forward.1} parent=43 // pred_region
          %v561 = vld [vmem:[#allocation3] sm:$0xff]
          %562 = vst [vmem:[#allocation16] sm:$0xff] %v561
          %v563 = vld [vmem:[#allocation6] sm:$0xff]
          %564 = vst [vmem:[#allocation18] sm:$0xff] %v563
          %v565 = vld [vmem:[#allocation8] sm:$0xff]
          %566 = vst [vmem:[#allocation19] sm:$0xff] %v565
          %567 = vst [vmem:[#allocation2] sm:$0xff] 0.0
        $region60: #{full_stdp_forward.1} parent=43 // pred_fallthru
          _
        %v568 = vld [vmem:[%s537] sm:$0xff]
        %v569 = vld [vmem:[%s543] sm:$0xff]
        %v570 = vld [vmem:[%s549] sm:$0xff]
        %v571 = vld [vmem:[#allocation2] sm:$0xff]
        %v572 = vadd.f32 %v571, %v570
        %vm573 = vcmp.gt.f32.partialorder %v572, 0.5
        %v574 = vsel %vm573, 1, 0
        %v575 = vcvt.s32.f32 %v574
        %v576 = vsub.f32 1.0, %v575
        %v577 = vmul.f32 %v572, %v576
        %578 = vst [vmem:[#allocation2] sm:$0xff] %v577
        %v579 = vld [vmem:[#allocation19] sm:$0xff]
        %v580 = vmul.f32 %v579, 0.99
        %v581 = vpack.c.bf16 %v580, %v580
        %v582 = vpack.c.bf16 %v568, %v568
        %583 = vxpose.xlu0.c.b16.start [1/8] %v581, 128
        %584 = vxpose.xlu0.c.b16.cont [2/8] 0, 128
        %585 = vxpose.xlu0.c.b16.cont [3/8] 0, 128
        %586 = vxpose.xlu0.c.b16.cont [4/8] 0, 128
        %587 = vxpose.xlu0.c.b16.cont [5/8] 0, 128
        %588 = vxpose.xlu0.c.b16.cont [6/8] 0, 128
        %589 = vxpose.xlu0.c.b16.cont [7/8] 0, 128
        %590 = vxpose.xlu0.c.b16.end [8/8] 0, 128
        %v591 = vpop.trf.xlu0
        %v592 = vpop.trf.xlu0
        %v593 = vpop.trf.xlu0
        %v594 = vpop.trf.xlu0
        %v595 = vpop.trf.xlu0
        %v596 = vpop.trf.xlu0
        %v597 = vpop.trf.xlu0
        %v598 = vpop.trf.xlu0
        %vm599 = vcmask 64512
        %v601 = vsel %vm599, %v591, 0
        %v604 = vsel %vm599, %v592, 0
        %v607 = vsel %vm599, %v593, 0
        %v610 = vsel %vm599, %v594, 0
        %v613 = vsel %vm599, %v595, 0
        %v616 = vsel %vm599, %v596, 0
        %v619 = vsel %vm599, %v597, 0
        %v622 = vsel %vm599, %v598, 0
        %vm624 = vcmask 1043456
        %v626 = vsel %vm624, %v582, 0
        %628 = vmatprep.subr.bf16.mxu0 0
        %629 = vmatpush1.bf16.msra.mxu0 0
        %630 = vmatprep.subr.bf16.mxu0 0
        %631 = vmatpush1.bf16.msra.mxu0 0
        %632 = vmatprep.subr.bf16.mxu0 0
        %633 = vmatpush1.bf16.msra.mxu0 0
        %634 = vmatprep.subr.bf16.mxu0 0
        %635 = vmatpush1.bf16.msra.mxu0 0
        %636 = vmatprep.subr.bf16.mxu0 0
        %637 = vmatpush1.bf16.msra.mxu0 0
        %638 = vmatprep.subr.bf16.mxu0 0
        %639 = vmatpush1.bf16.msra.mxu0 0
        %640 = vmatprep.subr.bf16.mxu0 0
        %641 = vmatpush1.bf16.msra.mxu0 0
        %642 = vmatprep.subr.bf16.mxu0 0
        %643 = vmatpush1.bf16.msra.mxu0 %v626
        %644 = vmatprep.subr.bf16.mxu0 0
        %645 = vmatpush2.bf16.msra.mxu0 0
        %646 = vmatprep.subr.bf16.mxu0 0
        %647 = vmatpush2.bf16.msra.mxu0 0
        %648 = vmatprep.subr.bf16.mxu0 0
        %649 = vmatpush2.bf16.msra.mxu0 0
        %650 = vmatprep.subr.bf16.mxu0 0
        %651 = vmatpush2.bf16.msra.mxu0 0
        %652 = vmatprep.subr.bf16.mxu0 0
        %653 = vmatpush2.bf16.msra.mxu0 0
        %654 = vmatprep.subr.bf16.mxu0 0
        %655 = vmatpush2.bf16.msra.mxu0 0
        %656 = vmatprep.subr.bf16.mxu0 0
        %657 = vmatpush2.bf16.msra.mxu0 0
        %658 = vmatprep.subr.bf16.mxu0 0
        %659 = vmatpush2.bf16.msra.mxu0 0
        %660 = vmatprep.mubr.bf16.mxu0 0
        %661 = vmatmul.mubr.bf16.gmra.mxu0 %v601
        %v662 = vpop.f32.mrf.mxu0
        %v663 = vadd.f32 0.0, %v662
        %v664 = vpop.f32.mrf.mxu0
        %v665 = vpop.f32.mrf.mxu0
        %v666 = vadd.f32 0.0, %v665
        %v667 = vpop.f32.mrf.mxu0
        %668 = vmatprep.mubr.bf16.mxu0 0
        %669 = vmatmul.mubr.bf16.gmra.mxu0 %v604
        %v670 = vpop.f32.mrf.mxu0
        %v671 = vadd.f32 0.0, %v670
        %v672 = vpop.f32.mrf.mxu0
        %v673 = vpop.f32.mrf.mxu0
        %v674 = vadd.f32 0.0, %v673
        %v675 = vpop.f32.mrf.mxu0
        %676 = vmatprep.mubr.bf16.mxu0 0
        %677 = vmatmul.mubr.bf16.gmra.mxu0 %v607
        %v678 = vpop.f32.mrf.mxu0
        %v679 = vadd.f32 0.0, %v678
        %v680 = vpop.f32.mrf.mxu0
        %v681 = vpop.f32.mrf.mxu0
        %v682 = vadd.f32 0.0, %v681
        %v683 = vpop.f32.mrf.mxu0
        %684 = vmatprep.mubr.bf16.mxu0 0
        %685 = vmatmul.mubr.bf16.gmra.mxu0 %v610
        %v686 = vpop.f32.mrf.mxu0
        %v687 = vadd.f32 0.0, %v686
        %v688 = vpop.f32.mrf.mxu0
        %v689 = vpop.f32.mrf.mxu0
        %v690 = vadd.f32 0.0, %v689
        %v691 = vpop.f32.mrf.mxu0
        %692 = vmatprep.mubr.bf16.mxu0 0
        %693 = vmatmul.mubr.bf16.gmra.mxu0 %v613
        %v694 = vpop.f32.mrf.mxu0
        %v695 = vadd.f32 0.0, %v694
        %v696 = vpop.f32.mrf.mxu0
        %v697 = vpop.f32.mrf.mxu0
        %v698 = vadd.f32 0.0, %v697
        %v699 = vpop.f32.mrf.mxu0
        %700 = vmatprep.mubr.bf16.mxu0 0
        %701 = vmatmul.mubr.bf16.gmra.mxu0 %v616
        %v702 = vpop.f32.mrf.mxu0
        %v703 = vadd.f32 0.0, %v702
        %v704 = vpop.f32.mrf.mxu0
        %v705 = vpop.f32.mrf.mxu0
        %v706 = vadd.f32 0.0, %v705
        %v707 = vpop.f32.mrf.mxu0
        %708 = vmatprep.mubr.bf16.mxu0 0
        %709 = vmatmul.mubr.bf16.gmra.mxu0 %v619
        %v710 = vpop.f32.mrf.mxu0
        %v711 = vadd.f32 0.0, %v710
        %v712 = vpop.f32.mrf.mxu0
        %v713 = vpop.f32.mrf.mxu0
        %v714 = vadd.f32 0.0, %v713
        %v715 = vpop.f32.mrf.mxu0
        %716 = vmatprep.mubr.bf16.mxu0 0
        %717 = vmatmul.mubr.bf16.gmra.mxu0 %v622
        %v718 = vpop.f32.mrf.mxu0
        %v719 = vadd.f32 0.0, %v718
        %v720 = vpop.f32.mrf.mxu0
        %v721 = vpop.f32.mrf.mxu0
        %v722 = vadd.f32 0.0, %v721
        %v723 = vpop.f32.mrf.mxu0
        %724 = vdwg.mxu0
        %725 = vst [vmem:[%s519] sm:$0xff] %v663
        %726 = vst [vmem:[%s519 + $0x8] sm:$0xff] %v666
        %727 = vst [vmem:[%s519 + $0x10] sm:$0xff] %v671
        %728 = vst [vmem:[%s519 + $0x18] sm:$0xff] %v674
        %729 = vst [vmem:[%s519 + $0x20] sm:$0xff] %v679
        %730 = vst [vmem:[%s519 + $0x28] sm:$0xff] %v682
        %731 = vst [vmem:[%s519 + $0x30] sm:$0xff] %v687
        %732 = vst [vmem:[%s519 + $0x38] sm:$0xff] %v690
        %733 = vst [vmem:[%s519 + $0x40] sm:$0xff] %v695
        %734 = vst [vmem:[%s519 + $0x48] sm:$0xff] %v698
        %735 = vst [vmem:[%s519 + $0x50] sm:$0xff] %v703
        %736 = vst [vmem:[%s519 + $0x58] sm:$0xff] %v706
        %737 = vst [vmem:[%s519 + $0x60] sm:$0xff] %v711
        %738 = vst [vmem:[%s519 + $0x68] sm:$0xff] %v714
        %739 = vst [vmem:[%s519 + $0x70] sm:$0xff] %v719
        %740 = vst [vmem:[%s519 + $0x78] sm:$0xff] %v722
        %v741 = vpack.c.bf16 %v569, %v569
        %v743 = vsel %vm624, %v741, 0
        %745 = vmatprep.subr.bf16.mxu0 0
        %746 = vmatpush1.bf16.msra.mxu0 0
        %747 = vmatprep.subr.bf16.mxu0 0
        %748 = vmatpush1.bf16.msra.mxu0 0
        %749 = vmatprep.subr.bf16.mxu0 0
        %750 = vmatpush1.bf16.msra.mxu0 0
        %751 = vmatprep.subr.bf16.mxu0 0
        %752 = vmatpush1.bf16.msra.mxu0 0
        %753 = vmatprep.subr.bf16.mxu0 0
        %754 = vmatpush1.bf16.msra.mxu0 0
        %755 = vmatprep.subr.bf16.mxu0 0
        %756 = vmatpush1.bf16.msra.mxu0 0
        %757 = vmatprep.subr.bf16.mxu0 0
        %758 = vmatpush1.bf16.msra.mxu0 0
        %759 = vmatprep.subr.bf16.mxu0 0
        %760 = vmatpush1.bf16.msra.mxu0 %v743
        %761 = vmatprep.subr.bf16.mxu0 0
        %762 = vmatpush2.bf16.msra.mxu0 0
        %763 = vmatprep.subr.bf16.mxu0 0
        %764 = vmatpush2.bf16.msra.mxu0 0
        %765 = vmatprep.subr.bf16.mxu0 0
        %766 = vmatpush2.bf16.msra.mxu0 0
        %767 = vmatprep.subr.bf16.mxu0 0
        %768 = vmatpush2.bf16.msra.mxu0 0
        %769 = vmatprep.subr.bf16.mxu0 0
        %770 = vmatpush2.bf16.msra.mxu0 0
        %771 = vmatprep.subr.bf16.mxu0 0
        %772 = vmatpush2.bf16.msra.mxu0 0
        %773 = vmatprep.subr.bf16.mxu0 0
        %774 = vmatpush2.bf16.msra.mxu0 0
        %775 = vmatprep.subr.bf16.mxu0 0
        %776 = vmatpush2.bf16.msra.mxu0 0
        %777 = vmatprep.mubr.bf16.mxu0 0
        %778 = vmatmul.mubr.bf16.gmra.mxu0 %v601
        %v779 = vpop.f32.mrf.mxu0
        %v780 = vadd.f32 0.0, %v779
        %v781 = vpop.f32.mrf.mxu0
        %v782 = vpop.f32.mrf.mxu0
        %v783 = vadd.f32 0.0, %v782
        %v784 = vpop.f32.mrf.mxu0
        %785 = vmatprep.mubr.bf16.mxu0 0
        %786 = vmatmul.mubr.bf16.gmra.mxu0 %v604
        %v787 = vpop.f32.mrf.mxu0
        %v788 = vadd.f32 0.0, %v787
        %v789 = vpop.f32.mrf.mxu0
        %v790 = vpop.f32.mrf.mxu0
        %v791 = vadd.f32 0.0, %v790
        %v792 = vpop.f32.mrf.mxu0
        %793 = vmatprep.mubr.bf16.mxu0 0
        %794 = vmatmul.mubr.bf16.gmra.mxu0 %v607
        %v795 = vpop.f32.mrf.mxu0
        %v796 = vadd.f32 0.0, %v795
        %v797 = vpop.f32.mrf.mxu0
        %v798 = vpop.f32.mrf.mxu0
        %v799 = vadd.f32 0.0, %v798
        %v800 = vpop.f32.mrf.mxu0
        %801 = vmatprep.mubr.bf16.mxu0 0
        %802 = vmatmul.mubr.bf16.gmra.mxu0 %v610
        %v803 = vpop.f32.mrf.mxu0
        %v804 = vadd.f32 0.0, %v803
        %v805 = vpop.f32.mrf.mxu0
        %v806 = vpop.f32.mrf.mxu0
        %v807 = vadd.f32 0.0, %v806
        %v808 = vpop.f32.mrf.mxu0
        %809 = vmatprep.mubr.bf16.mxu0 0
        %810 = vmatmul.mubr.bf16.gmra.mxu0 %v613
        %v811 = vpop.f32.mrf.mxu0
        %v812 = vadd.f32 0.0, %v811
        %v813 = vpop.f32.mrf.mxu0
        %v814 = vpop.f32.mrf.mxu0
        %v815 = vadd.f32 0.0, %v814
        %v816 = vpop.f32.mrf.mxu0
        %817 = vmatprep.mubr.bf16.mxu0 0
        %818 = vmatmul.mubr.bf16.gmra.mxu0 %v616
        %v819 = vpop.f32.mrf.mxu0
        %v820 = vadd.f32 0.0, %v819
        %v821 = vpop.f32.mrf.mxu0
        %v822 = vpop.f32.mrf.mxu0
        %v823 = vadd.f32 0.0, %v822
        %v824 = vpop.f32.mrf.mxu0
        %825 = vmatprep.mubr.bf16.mxu0 0
        %826 = vmatmul.mubr.bf16.gmra.mxu0 %v619
        %v827 = vpop.f32.mrf.mxu0
        %v828 = vadd.f32 0.0, %v827
        %v829 = vpop.f32.mrf.mxu0
        %v830 = vpop.f32.mrf.mxu0
        %v831 = vadd.f32 0.0, %v830
        %v832 = vpop.f32.mrf.mxu0
        %833 = vmatprep.mubr.bf16.mxu0 0
        %834 = vmatmul.mubr.bf16.gmra.mxu0 %v622
        %v835 = vpop.f32.mrf.mxu0
        %v836 = vadd.f32 0.0, %v835
        %v837 = vpop.f32.mrf.mxu0
        %v838 = vpop.f32.mrf.mxu0
        %v839 = vadd.f32 0.0, %v838
        %v840 = vpop.f32.mrf.mxu0
        %841 = vdwg.mxu0
        %842 = vst [vmem:[%s526] sm:$0xff] %v780
        %843 = vst [vmem:[%s526 + $0x8] sm:$0xff] %v783
        %844 = vst [vmem:[%s526 + $0x10] sm:$0xff] %v788
        %845 = vst [vmem:[%s526 + $0x18] sm:$0xff] %v791
        %846 = vst [vmem:[%s526 + $0x20] sm:$0xff] %v796
        %847 = vst [vmem:[%s526 + $0x28] sm:$0xff] %v799
        %848 = vst [vmem:[%s526 + $0x30] sm:$0xff] %v804
        %849 = vst [vmem:[%s526 + $0x38] sm:$0xff] %v807
        %850 = vst [vmem:[%s526 + $0x40] sm:$0xff] %v812
        %851 = vst [vmem:[%s526 + $0x48] sm:$0xff] %v815
        %852 = vst [vmem:[%s526 + $0x50] sm:$0xff] %v820
        %853 = vst [vmem:[%s526 + $0x58] sm:$0xff] %v823
        %854 = vst [vmem:[%s526 + $0x60] sm:$0xff] %v828
        %855 = vst [vmem:[%s526 + $0x68] sm:$0xff] %v831
        %856 = vst [vmem:[%s526 + $0x70] sm:$0xff] %v836
        %857 = vst [vmem:[%s526 + $0x78] sm:$0xff] %v839
        %v858 = vld [vmem:[#allocation16] sm:$0xff]
        %v859 = vmul.f32 %v858, 0.99
        %v860 = vadd.f32 %v859, %v568
        %v861 = vld [vmem:[#allocation18] sm:$0xff]
        %v862 = vmul.f32 %v861, 0.99
        %v863 = vadd.f32 %v862, %v569
        %v864 = vpack.c.bf16 %v575, %v575
        %v865 = vpack.c.bf16 %v860, %v860
        %866 = vxpose.xlu0.c.b16.start [1/8] %v864, 128
        %867 = vxpose.xlu0.c.b16.cont [2/8] 0, 128
        %868 = vxpose.xlu0.c.b16.cont [3/8] 0, 128
        %869 = vxpose.xlu0.c.b16.cont [4/8] 0, 128
        %870 = vxpose.xlu0.c.b16.cont [5/8] 0, 128
        %871 = vxpose.xlu0.c.b16.cont [6/8] 0, 128
        %872 = vxpose.xlu0.c.b16.cont [7/8] 0, 128
        %873 = vxpose.xlu0.c.b16.end [8/8] 0, 128
        %v874 = vpop.trf.xlu0
        %v875 = vpop.trf.xlu0
        %v876 = vpop.trf.xlu0
        %v877 = vpop.trf.xlu0
        %v878 = vpop.trf.xlu0
        %v879 = vpop.trf.xlu0
        %v880 = vpop.trf.xlu0
        %v881 = vpop.trf.xlu0
        %v883 = vsel %vm599, %v874, 0
        %v886 = vsel %vm599, %v875, 0
        %v889 = vsel %vm599, %v876, 0
        %v892 = vsel %vm599, %v877, 0
        %v895 = vsel %vm599, %v878, 0
        %v898 = vsel %vm599, %v879, 0
        %v901 = vsel %vm599, %v880, 0
        %v904 = vsel %vm599, %v881, 0
        %v907 = vsel %vm624, %v865, 0
        %909 = vmatprep.subr.bf16.mxu0 0
        %910 = vmatpush1.bf16.msra.mxu0 0
        %911 = vmatprep.subr.bf16.mxu0 0
        %912 = vmatpush1.bf16.msra.mxu0 0
        %913 = vmatprep.subr.bf16.mxu0 0
        %914 = vmatpush1.bf16.msra.mxu0 0
        %915 = vmatprep.subr.bf16.mxu0 0
        %916 = vmatpush1.bf16.msra.mxu0 0
        %917 = vmatprep.subr.bf16.mxu0 0
        %918 = vmatpush1.bf16.msra.mxu0 0
        %919 = vmatprep.subr.bf16.mxu0 0
        %920 = vmatpush1.bf16.msra.mxu0 0
        %921 = vmatprep.subr.bf16.mxu0 0
        %922 = vmatpush1.bf16.msra.mxu0 0
        %923 = vmatprep.subr.bf16.mxu0 0
        %924 = vmatpush1.bf16.msra.mxu0 %v907
        %925 = vmatprep.subr.bf16.mxu0 0
        %926 = vmatpush2.bf16.msra.mxu0 0
        %927 = vmatprep.subr.bf16.mxu0 0
        %928 = vmatpush2.bf16.msra.mxu0 0
        %929 = vmatprep.subr.bf16.mxu0 0
        %930 = vmatpush2.bf16.msra.mxu0 0
        %931 = vmatprep.subr.bf16.mxu0 0
        %932 = vmatpush2.bf16.msra.mxu0 0
        %933 = vmatprep.subr.bf16.mxu0 0
        %934 = vmatpush2.bf16.msra.mxu0 0
        %935 = vmatprep.subr.bf16.mxu0 0
        %936 = vmatpush2.bf16.msra.mxu0 0
        %937 = vmatprep.subr.bf16.mxu0 0
        %938 = vmatpush2.bf16.msra.mxu0 0
        %939 = vmatprep.subr.bf16.mxu0 0
        %940 = vmatpush2.bf16.msra.mxu0 0
        %941 = vmatprep.mubr.bf16.mxu0 0
        %942 = vmatmul.mubr.bf16.gmra.mxu0 %v883
        %v943 = vpop.f32.mrf.mxu0
        %v944 = vadd.f32 0.0, %v943
        %v945 = vpop.f32.mrf.mxu0
        %v946 = vpop.f32.mrf.mxu0
        %v947 = vadd.f32 0.0, %v946
        %v948 = vpop.f32.mrf.mxu0
        %949 = vmatprep.mubr.bf16.mxu0 0
        %950 = vmatmul.mubr.bf16.gmra.mxu0 %v886
        %v951 = vpop.f32.mrf.mxu0
        %v952 = vadd.f32 0.0, %v951
        %v953 = vpop.f32.mrf.mxu0
        %v954 = vpop.f32.mrf.mxu0
        %v955 = vadd.f32 0.0, %v954
        %v956 = vpop.f32.mrf.mxu0
        %957 = vmatprep.mubr.bf16.mxu0 0
        %958 = vmatmul.mubr.bf16.gmra.mxu0 %v889
        %v959 = vpop.f32.mrf.mxu0
        %v960 = vadd.f32 0.0, %v959
        %v961 = vpop.f32.mrf.mxu0
        %v962 = vpop.f32.mrf.mxu0
        %v963 = vadd.f32 0.0, %v962
        %v964 = vpop.f32.mrf.mxu0
        %965 = vmatprep.mubr.bf16.mxu0 0
        %966 = vmatmul.mubr.bf16.gmra.mxu0 %v892
        %v967 = vpop.f32.mrf.mxu0
        %v968 = vadd.f32 0.0, %v967
        %v969 = vpop.f32.mrf.mxu0
        %v970 = vpop.f32.mrf.mxu0
        %v971 = vadd.f32 0.0, %v970
        %v972 = vpop.f32.mrf.mxu0
        %973 = vmatprep.mubr.bf16.mxu0 0
        %974 = vmatmul.mubr.bf16.gmra.mxu0 %v895
        %v975 = vpop.f32.mrf.mxu0
        %v976 = vadd.f32 0.0, %v975
        %v977 = vpop.f32.mrf.mxu0
        %v978 = vpop.f32.mrf.mxu0
        %v979 = vadd.f32 0.0, %v978
        %v980 = vpop.f32.mrf.mxu0
        %981 = vmatprep.mubr.bf16.mxu0 0
        %982 = vmatmul.mubr.bf16.gmra.mxu0 %v898
        %v983 = vpop.f32.mrf.mxu0
        %v984 = vadd.f32 0.0, %v983
        %v985 = vpop.f32.mrf.mxu0
        %v986 = vpop.f32.mrf.mxu0
        %v987 = vadd.f32 0.0, %v986
        %v988 = vpop.f32.mrf.mxu0
        %989 = vmatprep.mubr.bf16.mxu0 0
        %990 = vmatmul.mubr.bf16.gmra.mxu0 %v901
        %v991 = vpop.f32.mrf.mxu0
        %v992 = vadd.f32 0.0, %v991
        %v993 = vpop.f32.mrf.mxu0
        %v994 = vpop.f32.mrf.mxu0
        %v995 = vadd.f32 0.0, %v994
        %v996 = vpop.f32.mrf.mxu0
        %997 = vmatprep.mubr.bf16.mxu0 0
        %998 = vmatmul.mubr.bf16.gmra.mxu0 %v904
        %v999 = vpop.f32.mrf.mxu0
        %v1000 = vadd.f32 0.0, %v999
        %v1001 = vpop.f32.mrf.mxu0
        %v1002 = vpop.f32.mrf.mxu0
        %v1003 = vadd.f32 0.0, %v1002
        %v1004 = vpop.f32.mrf.mxu0
        %1005 = vdwg.mxu0
        %1006 = vst [vmem:[%s505] sm:$0xff] %v944
        %1007 = vst [vmem:[%s505 + $0x8] sm:$0xff] %v947
        %1008 = vst [vmem:[%s505 + $0x10] sm:$0xff] %v952
        %1009 = vst [vmem:[%s505 + $0x18] sm:$0xff] %v955
        %1010 = vst [vmem:[%s505 + $0x20] sm:$0xff] %v960
        %1011 = vst [vmem:[%s505 + $0x28] sm:$0xff] %v963
        %1012 = vst [vmem:[%s505 + $0x30] sm:$0xff] %v968
        %1013 = vst [vmem:[%s505 + $0x38] sm:$0xff] %v971
        %1014 = vst [vmem:[%s505 + $0x40] sm:$0xff] %v976
        %1015 = vst [vmem:[%s505 + $0x48] sm:$0xff] %v979
        %1016 = vst [vmem:[%s505 + $0x50] sm:$0xff] %v984
        %1017 = vst [vmem:[%s505 + $0x58] sm:$0xff] %v987
        %1018 = vst [vmem:[%s505 + $0x60] sm:$0xff] %v992
        %1019 = vst [vmem:[%s505 + $0x68] sm:$0xff] %v995
        %1020 = vst [vmem:[%s505 + $0x70] sm:$0xff] %v1000
        %1021 = vst [vmem:[%s505 + $0x78] sm:$0xff] %v1003
        %v1022 = vpack.c.bf16 %v863, %v863
        %v1024 = vsel %vm624, %v1022, 0
        %1026 = vmatprep.subr.bf16.mxu0 0
        %1027 = vmatpush1.bf16.msra.mxu0 0
        %1028 = vmatprep.subr.bf16.mxu0 0
        %1029 = vmatpush1.bf16.msra.mxu0 0
        %1030 = vmatprep.subr.bf16.mxu0 0
        %1031 = vmatpush1.bf16.msra.mxu0 0
        %1032 = vmatprep.subr.bf16.mxu0 0
        %1033 = vmatpush1.bf16.msra.mxu0 0
        %1034 = vmatprep.subr.bf16.mxu0 0
        %1035 = vmatpush1.bf16.msra.mxu0 0
        %1036 = vmatprep.subr.bf16.mxu0 0
        %1037 = vmatpush1.bf16.msra.mxu0 0
        %1038 = vmatprep.subr.bf16.mxu0 0
        %1039 = vmatpush1.bf16.msra.mxu0 0
        %1040 = vmatprep.subr.bf16.mxu0 0
        %1041 = vmatpush1.bf16.msra.mxu0 %v1024
        %1042 = vmatprep.subr.bf16.mxu0 0
        %1043 = vmatpush2.bf16.msra.mxu0 0
        %1044 = vmatprep.subr.bf16.mxu0 0
        %1045 = vmatpush2.bf16.msra.mxu0 0
        %1046 = vmatprep.subr.bf16.mxu0 0
        %1047 = vmatpush2.bf16.msra.mxu0 0
        %1048 = vmatprep.subr.bf16.mxu0 0
        %1049 = vmatpush2.bf16.msra.mxu0 0
        %1050 = vmatprep.subr.bf16.mxu0 0
        %1051 = vmatpush2.bf16.msra.mxu0 0
        %1052 = vmatprep.subr.bf16.mxu0 0
        %1053 = vmatpush2.bf16.msra.mxu0 0
        %1054 = vmatprep.subr.bf16.mxu0 0
        %1055 = vmatpush2.bf16.msra.mxu0 0
        %1056 = vmatprep.subr.bf16.mxu0 0
        %1057 = vmatpush2.bf16.msra.mxu0 0
        %1058 = vmatprep.mubr.bf16.mxu0 0
        %1059 = vmatmul.mubr.bf16.gmra.mxu0 %v883
        %v1060 = vpop.f32.mrf.mxu0
        %v1061 = vadd.f32 0.0, %v1060
        %v1062 = vpop.f32.mrf.mxu0
        %v1063 = vpop.f32.mrf.mxu0
        %v1064 = vadd.f32 0.0, %v1063
        %v1065 = vpop.f32.mrf.mxu0
        %1066 = vmatprep.mubr.bf16.mxu0 0
        %1067 = vmatmul.mubr.bf16.gmra.mxu0 %v886
        %v1068 = vpop.f32.mrf.mxu0
        %v1069 = vadd.f32 0.0, %v1068
        %v1070 = vpop.f32.mrf.mxu0
        %v1071 = vpop.f32.mrf.mxu0
        %v1072 = vadd.f32 0.0, %v1071
        %v1073 = vpop.f32.mrf.mxu0
        %1074 = vmatprep.mubr.bf16.mxu0 0
        %1075 = vmatmul.mubr.bf16.gmra.mxu0 %v889
        %v1076 = vpop.f32.mrf.mxu0
        %v1077 = vadd.f32 0.0, %v1076
        %v1078 = vpop.f32.mrf.mxu0
        %v1079 = vpop.f32.mrf.mxu0
        %v1080 = vadd.f32 0.0, %v1079
        %v1081 = vpop.f32.mrf.mxu0
        %1082 = vmatprep.mubr.bf16.mxu0 0
        %1083 = vmatmul.mubr.bf16.gmra.mxu0 %v892
        %v1084 = vpop.f32.mrf.mxu0
        %v1085 = vadd.f32 0.0, %v1084
        %v1086 = vpop.f32.mrf.mxu0
        %v1087 = vpop.f32.mrf.mxu0
        %v1088 = vadd.f32 0.0, %v1087
        %v1089 = vpop.f32.mrf.mxu0
        %1090 = vmatprep.mubr.bf16.mxu0 0
        %1091 = vmatmul.mubr.bf16.gmra.mxu0 %v895
        %v1092 = vpop.f32.mrf.mxu0
        %v1093 = vadd.f32 0.0, %v1092
        %v1094 = vpop.f32.mrf.mxu0
        %v1095 = vpop.f32.mrf.mxu0
        %v1096 = vadd.f32 0.0, %v1095
        %v1097 = vpop.f32.mrf.mxu0
        %1098 = vmatprep.mubr.bf16.mxu0 0
        %1099 = vmatmul.mubr.bf16.gmra.mxu0 %v898
        %v1100 = vpop.f32.mrf.mxu0
        %v1101 = vadd.f32 0.0, %v1100
        %v1102 = vpop.f32.mrf.mxu0
        %v1103 = vpop.f32.mrf.mxu0
        %v1104 = vadd.f32 0.0, %v1103
        %v1105 = vpop.f32.mrf.mxu0
        %1106 = vmatprep.mubr.bf16.mxu0 0
        %1107 = vmatmul.mubr.bf16.gmra.mxu0 %v901
        %v1108 = vpop.f32.mrf.mxu0
        %v1109 = vadd.f32 0.0, %v1108
        %v1110 = vpop.f32.mrf.mxu0
        %v1111 = vpop.f32.mrf.mxu0
        %v1112 = vadd.f32 0.0, %v1111
        %v1113 = vpop.f32.mrf.mxu0
        %1114 = vmatprep.mubr.bf16.mxu0 0
        %1115 = vmatmul.mubr.bf16.gmra.mxu0 %v904
        %v1116 = vpop.f32.mrf.mxu0
        %v1117 = vadd.f32 0.0, %v1116
        %v1118 = vpop.f32.mrf.mxu0
        %v1119 = vpop.f32.mrf.mxu0
        %v1120 = vadd.f32 0.0, %v1119
        %v1121 = vpop.f32.mrf.mxu0
        %1122 = vdwg.mxu0
        %1123 = vst [vmem:[%s512] sm:$0xff] %v1061
        %1124 = vst [vmem:[%s512 + $0x8] sm:$0xff] %v1064
        %1125 = vst [vmem:[%s512 + $0x10] sm:$0xff] %v1069
        %1126 = vst [vmem:[%s512 + $0x18] sm:$0xff] %v1072
        %1127 = vst [vmem:[%s512 + $0x20] sm:$0xff] %v1077
        %1128 = vst [vmem:[%s512 + $0x28] sm:$0xff] %v1080
        %1129 = vst [vmem:[%s512 + $0x30] sm:$0xff] %v1085
        %1130 = vst [vmem:[%s512 + $0x38] sm:$0xff] %v1088
        %1131 = vst [vmem:[%s512 + $0x40] sm:$0xff] %v1093
        %1132 = vst [vmem:[%s512 + $0x48] sm:$0xff] %v1096
        %1133 = vst [vmem:[%s512 + $0x50] sm:$0xff] %v1101
        %1134 = vst [vmem:[%s512 + $0x58] sm:$0xff] %v1104
        %1135 = vst [vmem:[%s512 + $0x60] sm:$0xff] %v1109
        %1136 = vst [vmem:[%s512 + $0x68] sm:$0xff] %v1112
        %1137 = vst [vmem:[%s512 + $0x70] sm:$0xff] %v1117
        %1138 = vst [vmem:[%s512 + $0x78] sm:$0xff] %v1120
        %1139 = vst [vmem:[%s498] sm:$0xff] %v575
        %1140 = vst [vmem:[#allocation16] sm:$0xff] %v860
        %1141 = vst [vmem:[#allocation18] sm:$0xff] %v863
        %v1142 = vadd.f32 %v580, %v575
        %1143 = vst [vmem:[#allocation19] sm:$0xff] %v1142
        %s1144 = scalar_lea.vmem %s537, 8
        %v1145 = vld [vmem:[%s1144] sm:$0xff]
        %s1146 = scalar_lea.vmem %s543, 8
        %v1147 = vld [vmem:[%s1146] sm:$0xff]
        %s1148 = scalar_lea.vmem %s549, 8
        %v1149 = vld [vmem:[%s1148] sm:$0xff]
        %v1150 = vld [vmem:[#allocation2] sm:$0xff]
        %v1151 = vadd.f32 %v1150, %v1149
        %vm1152 = vcmp.gt.f32.partialorder %v1151, 0.5
        %v1153 = vsel %vm1152, 1, 0
        %v1154 = vcvt.s32.f32 %v1153
        %v1155 = vsub.f32 1.0, %v1154
        %v1156 = vmul.f32 %v1151, %v1155
        %1157 = vst [vmem:[#allocation2] sm:$0xff] %v1156
        %v1158 = vld [vmem:[#allocation19] sm:$0xff]
        %v1159 = vmul.f32 %v1158, 0.99
        %v1160 = vpack.c.bf16 %v1159, %v1159
        %v1161 = vpack.c.bf16 %v1145, %v1145
        %1162 = vxpose.xlu0.c.b16.start [1/8] %v1160, 128
        %1163 = vxpose.xlu0.c.b16.cont [2/8] 0, 128
        %1164 = vxpose.xlu0.c.b16.cont [3/8] 0, 128
        %1165 = vxpose.xlu0.c.b16.cont [4/8] 0, 128
        %1166 = vxpose.xlu0.c.b16.cont [5/8] 0, 128
        %1167 = vxpose.xlu0.c.b16.cont [6/8] 0, 128
        %1168 = vxpose.xlu0.c.b16.cont [7/8] 0, 128
        %1169 = vxpose.xlu0.c.b16.end [8/8] 0, 128
        %v1170 = vpop.trf.xlu0
        %v1171 = vpop.trf.xlu0
        %v1172 = vpop.trf.xlu0
        %v1173 = vpop.trf.xlu0
        %v1174 = vpop.trf.xlu0
        %v1175 = vpop.trf.xlu0
        %v1176 = vpop.trf.xlu0
        %v1177 = vpop.trf.xlu0
        %v1179 = vsel %vm599, %v1170, 0
        %v1182 = vsel %vm599, %v1171, 0
        %v1185 = vsel %vm599, %v1172, 0
        %v1188 = vsel %vm599, %v1173, 0
        %v1191 = vsel %vm599, %v1174, 0
        %v1194 = vsel %vm599, %v1175, 0
        %v1197 = vsel %vm599, %v1176, 0
        %v1200 = vsel %vm599, %v1177, 0
        %v1203 = vsel %vm624, %v1161, 0
        %1205 = vmatprep.subr.bf16.mxu0 0
        %1206 = vmatpush1.bf16.msra.mxu0 0
        %1207 = vmatprep.subr.bf16.mxu0 0
        %1208 = vmatpush1.bf16.msra.mxu0 0
        %1209 = vmatprep.subr.bf16.mxu0 0
        %1210 = vmatpush1.bf16.msra.mxu0 0
        %1211 = vmatprep.subr.bf16.mxu0 0
        %1212 = vmatpush1.bf16.msra.mxu0 0
        %1213 = vmatprep.subr.bf16.mxu0 0
        %1214 = vmatpush1.bf16.msra.mxu0 0
        %1215 = vmatprep.subr.bf16.mxu0 0
        %1216 = vmatpush1.bf16.msra.mxu0 0
        %1217 = vmatprep.subr.bf16.mxu0 0
        %1218 = vmatpush1.bf16.msra.mxu0 0
        %1219 = vmatprep.subr.bf16.mxu0 0
        %1220 = vmatpush1.bf16.msra.mxu0 %v1203
        %1221 = vmatprep.subr.bf16.mxu0 0
        %1222 = vmatpush2.bf16.msra.mxu0 0
        %1223 = vmatprep.subr.bf16.mxu0 0
        %1224 = vmatpush2.bf16.msra.mxu0 0
        %1225 = vmatprep.subr.bf16.mxu0 0
        %1226 = vmatpush2.bf16.msra.mxu0 0
        %1227 = vmatprep.subr.bf16.mxu0 0
        %1228 = vmatpush2.bf16.msra.mxu0 0
        %1229 = vmatprep.subr.bf16.mxu0 0
        %1230 = vmatpush2.bf16.msra.mxu0 0
        %1231 = vmatprep.subr.bf16.mxu0 0
        %1232 = vmatpush2.bf16.msra.mxu0 0
        %1233 = vmatprep.subr.bf16.mxu0 0
        %1234 = vmatpush2.bf16.msra.mxu0 0
        %1235 = vmatprep.subr.bf16.mxu0 0
        %1236 = vmatpush2.bf16.msra.mxu0 0
        %1237 = vmatprep.mubr.bf16.mxu0 0
        %1238 = vmatmul.mubr.bf16.gmra.mxu0 %v1179
        %v1239 = vpop.f32.mrf.mxu0
        %v1240 = vadd.f32 0.0, %v1239
        %v1241 = vpop.f32.mrf.mxu0
        %v1242 = vpop.f32.mrf.mxu0
        %v1243 = vadd.f32 0.0, %v1242
        %v1244 = vpop.f32.mrf.mxu0
        %1245 = vmatprep.mubr.bf16.mxu0 0
        %1246 = vmatmul.mubr.bf16.gmra.mxu0 %v1182
        %v1247 = vpop.f32.mrf.mxu0
        %v1248 = vadd.f32 0.0, %v1247
        %v1249 = vpop.f32.mrf.mxu0
        %v1250 = vpop.f32.mrf.mxu0
        %v1251 = vadd.f32 0.0, %v1250
        %v1252 = vpop.f32.mrf.mxu0
        %1253 = vmatprep.mubr.bf16.mxu0 0
        %1254 = vmatmul.mubr.bf16.gmra.mxu0 %v1185
        %v1255 = vpop.f32.mrf.mxu0
        %v1256 = vadd.f32 0.0, %v1255
        %v1257 = vpop.f32.mrf.mxu0
        %v1258 = vpop.f32.mrf.mxu0
        %v1259 = vadd.f32 0.0, %v1258
        %v1260 = vpop.f32.mrf.mxu0
        %1261 = vmatprep.mubr.bf16.mxu0 0
        %1262 = vmatmul.mubr.bf16.gmra.mxu0 %v1188
        %v1263 = vpop.f32.mrf.mxu0
        %v1264 = vadd.f32 0.0, %v1263
        %v1265 = vpop.f32.mrf.mxu0
        %v1266 = vpop.f32.mrf.mxu0
        %v1267 = vadd.f32 0.0, %v1266
        %v1268 = vpop.f32.mrf.mxu0
        %1269 = vmatprep.mubr.bf16.mxu0 0
        %1270 = vmatmul.mubr.bf16.gmra.mxu0 %v1191
        %v1271 = vpop.f32.mrf.mxu0
        %v1272 = vadd.f32 0.0, %v1271
        %v1273 = vpop.f32.mrf.mxu0
        %v1274 = vpop.f32.mrf.mxu0
        %v1275 = vadd.f32 0.0, %v1274
        %v1276 = vpop.f32.mrf.mxu0
        %1277 = vmatprep.mubr.bf16.mxu0 0
        %1278 = vmatmul.mubr.bf16.gmra.mxu0 %v1194
        %v1279 = vpop.f32.mrf.mxu0
        %v1280 = vadd.f32 0.0, %v1279
        %v1281 = vpop.f32.mrf.mxu0
        %v1282 = vpop.f32.mrf.mxu0
        %v1283 = vadd.f32 0.0, %v1282
        %v1284 = vpop.f32.mrf.mxu0
        %1285 = vmatprep.mubr.bf16.mxu0 0
        %1286 = vmatmul.mubr.bf16.gmra.mxu0 %v1197
        %v1287 = vpop.f32.mrf.mxu0
        %v1288 = vadd.f32 0.0, %v1287
        %v1289 = vpop.f32.mrf.mxu0
        %v1290 = vpop.f32.mrf.mxu0
        %v1291 = vadd.f32 0.0, %v1290
        %v1292 = vpop.f32.mrf.mxu0
        %1293 = vmatprep.mubr.bf16.mxu0 0
        %1294 = vmatmul.mubr.bf16.gmra.mxu0 %v1200
        %v1295 = vpop.f32.mrf.mxu0
        %v1296 = vadd.f32 0.0, %v1295
        %v1297 = vpop.f32.mrf.mxu0
        %v1298 = vpop.f32.mrf.mxu0
        %v1299 = vadd.f32 0.0, %v1298
        %v1300 = vpop.f32.mrf.mxu0
        %1301 = vdwg.mxu0
        %s1302 = scalar_lea.vmem %s519, 128 [#allocation13]
        %1303 = vst [vmem:[%s1302] sm:$0xff] %v1240
        %1304 = vst [vmem:[%s1302 + $0x8] sm:$0xff] %v1243
        %1305 = vst [vmem:[%s1302 + $0x10] sm:$0xff] %v1248
        %1306 = vst [vmem:[%s1302 + $0x18] sm:$0xff] %v1251
        %1307 = vst [vmem:[%s1302 + $0x20] sm:$0xff] %v1256
        %1308 = vst [vmem:[%s1302 + $0x28] sm:$0xff] %v1259
        %1309 = vst [vmem:[%s1302 + $0x30] sm:$0xff] %v1264
        %1310 = vst [vmem:[%s1302 + $0x38] sm:$0xff] %v1267
        %1311 = vst [vmem:[%s1302 + $0x40] sm:$0xff] %v1272
        %1312 = vst [vmem:[%s1302 + $0x48] sm:$0xff] %v1275
        %1313 = vst [vmem:[%s1302 + $0x50] sm:$0xff] %v1280
        %1314 = vst [vmem:[%s1302 + $0x58] sm:$0xff] %v1283
        %1315 = vst [vmem:[%s1302 + $0x60] sm:$0xff] %v1288
        %1316 = vst [vmem:[%s1302 + $0x68] sm:$0xff] %v1291
        %1317 = vst [vmem:[%s1302 + $0x70] sm:$0xff] %v1296
        %1318 = vst [vmem:[%s1302 + $0x78] sm:$0xff] %v1299
        %v1319 = vpack.c.bf16 %v1147, %v1147
        %v1321 = vsel %vm624, %v1319, 0
        %1323 = vmatprep.subr.bf16.mxu0 0
        %1324 = vmatpush1.bf16.msra.mxu0 0
        %1325 = vmatprep.subr.bf16.mxu0 0
        %1326 = vmatpush1.bf16.msra.mxu0 0
        %1327 = vmatprep.subr.bf16.mxu0 0
        %1328 = vmatpush1.bf16.msra.mxu0 0
        %1329 = vmatprep.subr.bf16.mxu0 0
        %1330 = vmatpush1.bf16.msra.mxu0 0
        %1331 = vmatprep.subr.bf16.mxu0 0
        %1332 = vmatpush1.bf16.msra.mxu0 0
        %1333 = vmatprep.subr.bf16.mxu0 0
        %1334 = vmatpush1.bf16.msra.mxu0 0
        %1335 = vmatprep.subr.bf16.mxu0 0
        %1336 = vmatpush1.bf16.msra.mxu0 0
        %1337 = vmatprep.subr.bf16.mxu0 0
        %1338 = vmatpush1.bf16.msra.mxu0 %v1321
        %1339 = vmatprep.subr.bf16.mxu0 0
        %1340 = vmatpush2.bf16.msra.mxu0 0
        %1341 = vmatprep.subr.bf16.mxu0 0
        %1342 = vmatpush2.bf16.msra.mxu0 0
        %1343 = vmatprep.subr.bf16.mxu0 0
        %1344 = vmatpush2.bf16.msra.mxu0 0
        %1345 = vmatprep.subr.bf16.mxu0 0
        %1346 = vmatpush2.bf16.msra.mxu0 0
        %1347 = vmatprep.subr.bf16.mxu0 0
        %1348 = vmatpush2.bf16.msra.mxu0 0
        %1349 = vmatprep.subr.bf16.mxu0 0
        %1350 = vmatpush2.bf16.msra.mxu0 0
        %1351 = vmatprep.subr.bf16.mxu0 0
        %1352 = vmatpush2.bf16.msra.mxu0 0
        %1353 = vmatprep.subr.bf16.mxu0 0
        %1354 = vmatpush2.bf16.msra.mxu0 0
        %1355 = vmatprep.mubr.bf16.mxu0 0
        %1356 = vmatmul.mubr.bf16.gmra.mxu0 %v1179
        %v1357 = vpop.f32.mrf.mxu0
        %v1358 = vadd.f32 0.0, %v1357
        %v1359 = vpop.f32.mrf.mxu0
        %v1360 = vpop.f32.mrf.mxu0
        %v1361 = vadd.f32 0.0, %v1360
        %v1362 = vpop.f32.mrf.mxu0
        %1363 = vmatprep.mubr.bf16.mxu0 0
        %1364 = vmatmul.mubr.bf16.gmra.mxu0 %v1182
        %v1365 = vpop.f32.mrf.mxu0
        %v1366 = vadd.f32 0.0, %v1365
        %v1367 = vpop.f32.mrf.mxu0
        %v1368 = vpop.f32.mrf.mxu0
        %v1369 = vadd.f32 0.0, %v1368
        %v1370 = vpop.f32.mrf.mxu0
        %1371 = vmatprep.mubr.bf16.mxu0 0
        %1372 = vmatmul.mubr.bf16.gmra.mxu0 %v1185
        %v1373 = vpop.f32.mrf.mxu0
        %v1374 = vadd.f32 0.0, %v1373
        %v1375 = vpop.f32.mrf.mxu0
        %v1376 = vpop.f32.mrf.mxu0
        %v1377 = vadd.f32 0.0, %v1376
        %v1378 = vpop.f32.mrf.mxu0
        %1379 = vmatprep.mubr.bf16.mxu0 0
        %1380 = vmatmul.mubr.bf16.gmra.mxu0 %v1188
        %v1381 = vpop.f32.mrf.mxu0
        %v1382 = vadd.f32 0.0, %v1381
        %v1383 = vpop.f32.mrf.mxu0
        %v1384 = vpop.f32.mrf.mxu0
        %v1385 = vadd.f32 0.0, %v1384
        %v1386 = vpop.f32.mrf.mxu0
        %1387 = vmatprep.mubr.bf16.mxu0 0
        %1388 = vmatmul.mubr.bf16.gmra.mxu0 %v1191
        %v1389 = vpop.f32.mrf.mxu0
        %v1390 = vadd.f32 0.0, %v1389
        %v1391 = vpop.f32.mrf.mxu0
        %v1392 = vpop.f32.mrf.mxu0
        %v1393 = vadd.f32 0.0, %v1392
        %v1394 = vpop.f32.mrf.mxu0
        %1395 = vmatprep.mubr.bf16.mxu0 0
        %1396 = vmatmul.mubr.bf16.gmra.mxu0 %v1194
        %v1397 = vpop.f32.mrf.mxu0
        %v1398 = vadd.f32 0.0, %v1397
        %v1399 = vpop.f32.mrf.mxu0
        %v1400 = vpop.f32.mrf.mxu0
        %v1401 = vadd.f32 0.0, %v1400
        %v1402 = vpop.f32.mrf.mxu0
        %1403 = vmatprep.mubr.bf16.mxu0 0
        %1404 = vmatmul.mubr.bf16.gmra.mxu0 %v1197
        %v1405 = vpop.f32.mrf.mxu0
        %v1406 = vadd.f32 0.0, %v1405
        %v1407 = vpop.f32.mrf.mxu0
        %v1408 = vpop.f32.mrf.mxu0
        %v1409 = vadd.f32 0.0, %v1408
        %v1410 = vpop.f32.mrf.mxu0
        %1411 = vmatprep.mubr.bf16.mxu0 0
        %1412 = vmatmul.mubr.bf16.gmra.mxu0 %v1200
        %v1413 = vpop.f32.mrf.mxu0
        %v1414 = vadd.f32 0.0, %v1413
        %v1415 = vpop.f32.mrf.mxu0
        %v1416 = vpop.f32.mrf.mxu0
        %v1417 = vadd.f32 0.0, %v1416
        %v1418 = vpop.f32.mrf.mxu0
        %1419 = vdwg.mxu0
        %s1420 = scalar_lea.vmem %s526, 128 [#allocation15]
        %1421 = vst [vmem:[%s1420] sm:$0xff] %v1358
        %1422 = vst [vmem:[%s1420 + $0x8] sm:$0xff] %v1361
        %1423 = vst [vmem:[%s1420 + $0x10] sm:$0xff] %v1366
        %1424 = vst [vmem:[%s1420 + $0x18] sm:$0xff] %v1369
        %1425 = vst [vmem:[%s1420 + $0x20] sm:$0xff] %v1374
        %1426 = vst [vmem:[%s1420 + $0x28] sm:$0xff] %v1377
        %1427 = vst [vmem:[%s1420 + $0x30] sm:$0xff] %v1382
        %1428 = vst [vmem:[%s1420 + $0x38] sm:$0xff] %v1385
        %1429 = vst [vmem:[%s1420 + $0x40] sm:$0xff] %v1390
        %1430 = vst [vmem:[%s1420 + $0x48] sm:$0xff] %v1393
        %1431 = vst [vmem:[%s1420 + $0x50] sm:$0xff] %v1398
        %1432 = vst [vmem:[%s1420 + $0x58] sm:$0xff] %v1401
        %1433 = vst [vmem:[%s1420 + $0x60] sm:$0xff] %v1406
        %1434 = vst [vmem:[%s1420 + $0x68] sm:$0xff] %v1409
        %1435 = vst [vmem:[%s1420 + $0x70] sm:$0xff] %v1414
        %1436 = vst [vmem:[%s1420 + $0x78] sm:$0xff] %v1417
        %v1437 = vld [vmem:[#allocation16] sm:$0xff]
        %v1438 = vmul.f32 %v1437, 0.99
        %v1439 = vadd.f32 %v1438, %v1145
        %v1440 = vld [vmem:[#allocation18] sm:$0xff]
        %v1441 = vmul.f32 %v1440, 0.99
        %v1442 = vadd.f32 %v1441, %v1147
        %v1443 = vpack.c.bf16 %v1154, %v1154
        %v1444 = vpack.c.bf16 %v1439, %v1439
        %1445 = vxpose.xlu0.c.b16.start [1/8] %v1443, 128
        %1446 = vxpose.xlu0.c.b16.cont [2/8] 0, 128
        %1447 = vxpose.xlu0.c.b16.cont [3/8] 0, 128
        %1448 = vxpose.xlu0.c.b16.cont [4/8] 0, 128
        %1449 = vxpose.xlu0.c.b16.cont [5/8] 0, 128
        %1450 = vxpose.xlu0.c.b16.cont [6/8] 0, 128
        %1451 = vxpose.xlu0.c.b16.cont [7/8] 0, 128
        %1452 = vxpose.xlu0.c.b16.end [8/8] 0, 128
        %v1453 = vpop.trf.xlu0
        %v1454 = vpop.trf.xlu0
        %v1455 = vpop.trf.xlu0
        %v1456 = vpop.trf.xlu0
        %v1457 = vpop.trf.xlu0
        %v1458 = vpop.trf.xlu0
        %v1459 = vpop.trf.xlu0
        %v1460 = vpop.trf.xlu0
        %v1462 = vsel %vm599, %v1453, 0
        %v1465 = vsel %vm599, %v1454, 0
        %v1468 = vsel %vm599, %v1455, 0
        %v1471 = vsel %vm599, %v1456, 0
        %v1474 = vsel %vm599, %v1457, 0
        %v1477 = vsel %vm599, %v1458, 0
        %v1480 = vsel %vm599, %v1459, 0
        %v1483 = vsel %vm599, %v1460, 0
        %v1486 = vsel %vm624, %v1444, 0
        %1488 = vmatprep.subr.bf16.mxu0 0
        %1489 = vmatpush1.bf16.msra.mxu0 0
        %1490 = vmatprep.subr.bf16.mxu0 0
        %1491 = vmatpush1.bf16.msra.mxu0 0
        %1492 = vmatprep.subr.bf16.mxu0 0
        %1493 = vmatpush1.bf16.msra.mxu0 0
        %1494 = vmatprep.subr.bf16.mxu0 0
        %1495 = vmatpush1.bf16.msra.mxu0 0
        %1496 = vmatprep.subr.bf16.mxu0 0
        %1497 = vmatpush1.bf16.msra.mxu0 0
        %1498 = vmatprep.subr.bf16.mxu0 0
        %1499 = vmatpush1.bf16.msra.mxu0 0
        %1500 = vmatprep.subr.bf16.mxu0 0
        %1501 = vmatpush1.bf16.msra.mxu0 0
        %1502 = vmatprep.subr.bf16.mxu0 0
        %1503 = vmatpush1.bf16.msra.mxu0 %v1486
        %1504 = vmatprep.subr.bf16.mxu0 0
        %1505 = vmatpush2.bf16.msra.mxu0 0
        %1506 = vmatprep.subr.bf16.mxu0 0
        %1507 = vmatpush2.bf16.msra.mxu0 0
        %1508 = vmatprep.subr.bf16.mxu0 0
        %1509 = vmatpush2.bf16.msra.mxu0 0
        %1510 = vmatprep.subr.bf16.mxu0 0
        %1511 = vmatpush2.bf16.msra.mxu0 0
        %1512 = vmatprep.subr.bf16.mxu0 0
        %1513 = vmatpush2.bf16.msra.mxu0 0
        %1514 = vmatprep.subr.bf16.mxu0 0
        %1515 = vmatpush2.bf16.msra.mxu0 0
        %1516 = vmatprep.subr.bf16.mxu0 0
        %1517 = vmatpush2.bf16.msra.mxu0 0
        %1518 = vmatprep.subr.bf16.mxu0 0
        %1519 = vmatpush2.bf16.msra.mxu0 0
        %1520 = vmatprep.mubr.bf16.mxu0 0
        %1521 = vmatmul.mubr.bf16.gmra.mxu0 %v1462
        %v1522 = vpop.f32.mrf.mxu0
        %v1523 = vadd.f32 0.0, %v1522
        %v1524 = vpop.f32.mrf.mxu0
        %v1525 = vpop.f32.mrf.mxu0
        %v1526 = vadd.f32 0.0, %v1525
        %v1527 = vpop.f32.mrf.mxu0
        %1528 = vmatprep.mubr.bf16.mxu0 0
        %1529 = vmatmul.mubr.bf16.gmra.mxu0 %v1465
        %v1530 = vpop.f32.mrf.mxu0
        %v1531 = vadd.f32 0.0, %v1530
        %v1532 = vpop.f32.mrf.mxu0
        %v1533 = vpop.f32.mrf.mxu0
        %v1534 = vadd.f32 0.0, %v1533
        %v1535 = vpop.f32.mrf.mxu0
        %1536 = vmatprep.mubr.bf16.mxu0 0
        %1537 = vmatmul.mubr.bf16.gmra.mxu0 %v1468
        %v1538 = vpop.f32.mrf.mxu0
        %v1539 = vadd.f32 0.0, %v1538
        %v1540 = vpop.f32.mrf.mxu0
        %v1541 = vpop.f32.mrf.mxu0
        %v1542 = vadd.f32 0.0, %v1541
        %v1543 = vpop.f32.mrf.mxu0
        %1544 = vmatprep.mubr.bf16.mxu0 0
        %1545 = vmatmul.mubr.bf16.gmra.mxu0 %v1471
        %v1546 = vpop.f32.mrf.mxu0
        %v1547 = vadd.f32 0.0, %v1546
        %v1548 = vpop.f32.mrf.mxu0
        %v1549 = vpop.f32.mrf.mxu0
        %v1550 = vadd.f32 0.0, %v1549
        %v1551 = vpop.f32.mrf.mxu0
        %1552 = vmatprep.mubr.bf16.mxu0 0
        %1553 = vmatmul.mubr.bf16.gmra.mxu0 %v1474
        %v1554 = vpop.f32.mrf.mxu0
        %v1555 = vadd.f32 0.0, %v1554
        %v1556 = vpop.f32.mrf.mxu0
        %v1557 = vpop.f32.mrf.mxu0
        %v1558 = vadd.f32 0.0, %v1557
        %v1559 = vpop.f32.mrf.mxu0
        %1560 = vmatprep.mubr.bf16.mxu0 0
        %1561 = vmatmul.mubr.bf16.gmra.mxu0 %v1477
        %v1562 = vpop.f32.mrf.mxu0
        %v1563 = vadd.f32 0.0, %v1562
        %v1564 = vpop.f32.mrf.mxu0
        %v1565 = vpop.f32.mrf.mxu0
        %v1566 = vadd.f32 0.0, %v1565
        %v1567 = vpop.f32.mrf.mxu0
        %1568 = vmatprep.mubr.bf16.mxu0 0
        %1569 = vmatmul.mubr.bf16.gmra.mxu0 %v1480
        %v1570 = vpop.f32.mrf.mxu0
        %v1571 = vadd.f32 0.0, %v1570
        %v1572 = vpop.f32.mrf.mxu0
        %v1573 = vpop.f32.mrf.mxu0
        %v1574 = vadd.f32 0.0, %v1573
        %v1575 = vpop.f32.mrf.mxu0
        %1576 = vmatprep.mubr.bf16.mxu0 0
        %1577 = vmatmul.mubr.bf16.gmra.mxu0 %v1483
        %v1578 = vpop.f32.mrf.mxu0
        %v1579 = vadd.f32 0.0, %v1578
        %v1580 = vpop.f32.mrf.mxu0
        %v1581 = vpop.f32.mrf.mxu0
        %v1582 = vadd.f32 0.0, %v1581
        %v1583 = vpop.f32.mrf.mxu0
        %1584 = vdwg.mxu0
        %s1585 = scalar_lea.vmem %s505, 128 [#allocation10]
        %1586 = vst [vmem:[%s1585] sm:$0xff] %v1523
        %1587 = vst [vmem:[%s1585 + $0x8] sm:$0xff] %v1526
        %1588 = vst [vmem:[%s1585 + $0x10] sm:$0xff] %v1531
        %1589 = vst [vmem:[%s1585 + $0x18] sm:$0xff] %v1534
        %1590 = vst [vmem:[%s1585 + $0x20] sm:$0xff] %v1539
        %1591 = vst [vmem:[%s1585 + $0x28] sm:$0xff] %v1542
        %1592 = vst [vmem:[%s1585 + $0x30] sm:$0xff] %v1547
        %1593 = vst [vmem:[%s1585 + $0x38] sm:$0xff] %v1550
        %1594 = vst [vmem:[%s1585 + $0x40] sm:$0xff] %v1555
        %1595 = vst [vmem:[%s1585 + $0x48] sm:$0xff] %v1558
        %1596 = vst [vmem:[%s1585 + $0x50] sm:$0xff] %v1563
        %1597 = vst [vmem:[%s1585 + $0x58] sm:$0xff] %v1566
        %1598 = vst [vmem:[%s1585 + $0x60] sm:$0xff] %v1571
        %1599 = vst [vmem:[%s1585 + $0x68] sm:$0xff] %v1574
        %1600 = vst [vmem:[%s1585 + $0x70] sm:$0xff] %v1579
        %1601 = vst [vmem:[%s1585 + $0x78] sm:$0xff] %v1582
        %v1602 = vpack.c.bf16 %v1442, %v1442
        %v1604 = vsel %vm624, %v1602, 0
        %1606 = vmatprep.subr.bf16.mxu0 0
        %1607 = vmatpush1.bf16.msra.mxu0 0
        %1608 = vmatprep.subr.bf16.mxu0 0
        %1609 = vmatpush1.bf16.msra.mxu0 0
        %1610 = vmatprep.subr.bf16.mxu0 0
        %1611 = vmatpush1.bf16.msra.mxu0 0
        %1612 = vmatprep.subr.bf16.mxu0 0
        %1613 = vmatpush1.bf16.msra.mxu0 0
        %1614 = vmatprep.subr.bf16.mxu0 0
        %1615 = vmatpush1.bf16.msra.mxu0 0
        %1616 = vmatprep.subr.bf16.mxu0 0
        %1617 = vmatpush1.bf16.msra.mxu0 0
        %1618 = vmatprep.subr.bf16.mxu0 0
        %1619 = vmatpush1.bf16.msra.mxu0 0
        %1620 = vmatprep.subr.bf16.mxu0 0
        %1621 = vmatpush1.bf16.msra.mxu0 %v1604
        %1622 = vmatprep.subr.bf16.mxu0 0
        %1623 = vmatpush2.bf16.msra.mxu0 0
        %1624 = vmatprep.subr.bf16.mxu0 0
        %1625 = vmatpush2.bf16.msra.mxu0 0
        %1626 = vmatprep.subr.bf16.mxu0 0
        %1627 = vmatpush2.bf16.msra.mxu0 0
        %1628 = vmatprep.subr.bf16.mxu0 0
        %1629 = vmatpush2.bf16.msra.mxu0 0
        %1630 = vmatprep.subr.bf16.mxu0 0
        %1631 = vmatpush2.bf16.msra.mxu0 0
        %1632 = vmatprep.subr.bf16.mxu0 0
        %1633 = vmatpush2.bf16.msra.mxu0 0
        %1634 = vmatprep.subr.bf16.mxu0 0
        %1635 = vmatpush2.bf16.msra.mxu0 0
        %1636 = vmatprep.subr.bf16.mxu0 0
        %1637 = vmatpush2.bf16.msra.mxu0 0
        %1638 = vmatprep.mubr.bf16.mxu0 0
        %1639 = vmatmul.mubr.bf16.gmra.mxu0 %v1462
        %v1640 = vpop.f32.mrf.mxu0
        %v1641 = vadd.f32 0.0, %v1640
        %v1642 = vpop.f32.mrf.mxu0
        %v1643 = vpop.f32.mrf.mxu0
        %v1644 = vadd.f32 0.0, %v1643
        %v1645 = vpop.f32.mrf.mxu0
        %1646 = vmatprep.mubr.bf16.mxu0 0
        %1647 = vmatmul.mubr.bf16.gmra.mxu0 %v1465
        %v1648 = vpop.f32.mrf.mxu0
        %v1649 = vadd.f32 0.0, %v1648
        %v1650 = vpop.f32.mrf.mxu0
        %v1651 = vpop.f32.mrf.mxu0
        %v1652 = vadd.f32 0.0, %v1651
        %v1653 = vpop.f32.mrf.mxu0
        %1654 = vmatprep.mubr.bf16.mxu0 0
        %1655 = vmatmul.mubr.bf16.gmra.mxu0 %v1468
        %v1656 = vpop.f32.mrf.mxu0
        %v1657 = vadd.f32 0.0, %v1656
        %v1658 = vpop.f32.mrf.mxu0
        %v1659 = vpop.f32.mrf.mxu0
        %v1660 = vadd.f32 0.0, %v1659
        %v1661 = vpop.f32.mrf.mxu0
        %1662 = vmatprep.mubr.bf16.mxu0 0
        %1663 = vmatmul.mubr.bf16.gmra.mxu0 %v1471
        %v1664 = vpop.f32.mrf.mxu0
        %v1665 = vadd.f32 0.0, %v1664
        %v1666 = vpop.f32.mrf.mxu0
        %v1667 = vpop.f32.mrf.mxu0
        %v1668 = vadd.f32 0.0, %v1667
        %v1669 = vpop.f32.mrf.mxu0
        %1670 = vmatprep.mubr.bf16.mxu0 0
        %1671 = vmatmul.mubr.bf16.gmra.mxu0 %v1474
        %v1672 = vpop.f32.mrf.mxu0
        %v1673 = vadd.f32 0.0, %v1672
        %v1674 = vpop.f32.mrf.mxu0
        %v1675 = vpop.f32.mrf.mxu0
        %v1676 = vadd.f32 0.0, %v1675
        %v1677 = vpop.f32.mrf.mxu0
        %1678 = vmatprep.mubr.bf16.mxu0 0
        %1679 = vmatmul.mubr.bf16.gmra.mxu0 %v1477
        %v1680 = vpop.f32.mrf.mxu0
        %v1681 = vadd.f32 0.0, %v1680
        %v1682 = vpop.f32.mrf.mxu0
        %v1683 = vpop.f32.mrf.mxu0
        %v1684 = vadd.f32 0.0, %v1683
        %v1685 = vpop.f32.mrf.mxu0
        %1686 = vmatprep.mubr.bf16.mxu0 0
        %1687 = vmatmul.mubr.bf16.gmra.mxu0 %v1480
        %v1688 = vpop.f32.mrf.mxu0
        %v1689 = vadd.f32 0.0, %v1688
        %v1690 = vpop.f32.mrf.mxu0
        %v1691 = vpop.f32.mrf.mxu0
        %v1692 = vadd.f32 0.0, %v1691
        %v1693 = vpop.f32.mrf.mxu0
        %1694 = vmatprep.mubr.bf16.mxu0 0
        %1695 = vmatmul.mubr.bf16.gmra.mxu0 %v1483
        %v1696 = vpop.f32.mrf.mxu0
        %v1697 = vadd.f32 0.0, %v1696
        %v1698 = vpop.f32.mrf.mxu0
        %v1699 = vpop.f32.mrf.mxu0
        %v1700 = vadd.f32 0.0, %v1699
        %v1701 = vpop.f32.mrf.mxu0
        %1702 = vdwg.mxu0
        %s1703 = scalar_lea.vmem %s512, 128 [#allocation12]
        %1704 = vst [vmem:[%s1703] sm:$0xff] %v1641
        %1705 = vst [vmem:[%s1703 + $0x8] sm:$0xff] %v1644
        %1706 = vst [vmem:[%s1703 + $0x10] sm:$0xff] %v1649
        %1707 = vst [vmem:[%s1703 + $0x18] sm:$0xff] %v1652
        %1708 = vst [vmem:[%s1703 + $0x20] sm:$0xff] %v1657
        %1709 = vst [vmem:[%s1703 + $0x28] sm:$0xff] %v1660
        %1710 = vst [vmem:[%s1703 + $0x30] sm:$0xff] %v1665
        %1711 = vst [vmem:[%s1703 + $0x38] sm:$0xff] %v1668
        %1712 = vst [vmem:[%s1703 + $0x40] sm:$0xff] %v1673
        %1713 = vst [vmem:[%s1703 + $0x48] sm:$0xff] %v1676
        %1714 = vst [vmem:[%s1703 + $0x50] sm:$0xff] %v1681
        %1715 = vst [vmem:[%s1703 + $0x58] sm:$0xff] %v1684
        %1716 = vst [vmem:[%s1703 + $0x60] sm:$0xff] %v1689
        %1717 = vst [vmem:[%s1703 + $0x68] sm:$0xff] %v1692
        %1718 = vst [vmem:[%s1703 + $0x70] sm:$0xff] %v1697
        %1719 = vst [vmem:[%s1703 + $0x78] sm:$0xff] %v1700
        %s1720 = scalar_lea.vmem %s498, 8 [#allocation9]
        %1721 = vst [vmem:[%s1720] sm:$0xff] %v1154
        %1722 = vst [vmem:[#allocation16] sm:$0xff] %v1439
        %1723 = vst [vmem:[#allocation18] sm:$0xff] %v1442
        %v1724 = vadd.f32 %v1159, %v1154
        %1725 = vst [vmem:[#allocation19] sm:$0xff] %v1724
        %s1726 = scalar_lea.vmem %s537, 16
        %v1727 = vld [vmem:[%s1726] sm:$0xff]
        %s1728 = scalar_lea.vmem %s543, 16
        %v1729 = vld [vmem:[%s1728] sm:$0xff]
        %s1730 = scalar_lea.vmem %s549, 16
        %v1731 = vld [vmem:[%s1730] sm:$0xff]
        %v1732 = vld [vmem:[#allocation2] sm:$0xff]
        %v1733 = vadd.f32 %v1732, %v1731
        %vm1734 = vcmp.gt.f32.partialorder %v1733, 0.5
        %v1735 = vsel %vm1734, 1, 0
        %v1736 = vcvt.s32.f32 %v1735
        %v1737 = vsub.f32 1.0, %v1736
        %v1738 = vmul.f32 %v1733, %v1737
        %1739 = vst [vmem:[#allocation2] sm:$0xff] %v1738
        %v1740 = vld [vmem:[#allocation19] sm:$0xff]
        %v1741 = vmul.f32 %v1740, 0.99
        %v1742 = vpack.c.bf16 %v1741, %v1741
        %v1743 = vpack.c.bf16 %v1727, %v1727
        %1744 = vxpose.xlu0.c.b16.start [1/8] %v1742, 128
        %1745 = vxpose.xlu0.c.b16.cont [2/8] 0, 128
        %1746 = vxpose.xlu0.c.b16.cont [3/8] 0, 128
        %1747 = vxpose.xlu0.c.b16.cont [4/8] 0, 128
        %1748 = vxpose.xlu0.c.b16.cont [5/8] 0, 128
        %1749 = vxpose.xlu0.c.b16.cont [6/8] 0, 128
        %1750 = vxpose.xlu0.c.b16.cont [7/8] 0, 128
        %1751 = vxpose.xlu0.c.b16.end [8/8] 0, 128
        %v1752 = vpop.trf.xlu0
        %v1753 = vpop.trf.xlu0
        %v1754 = vpop.trf.xlu0
        %v1755 = vpop.trf.xlu0
        %v1756 = vpop.trf.xlu0
        %v1757 = vpop.trf.xlu0
        %v1758 = vpop.trf.xlu0
        %v1759 = vpop.trf.xlu0
        %v1761 = vsel %vm599, %v1752, 0
        %v1764 = vsel %vm599, %v1753, 0
        %v1767 = vsel %vm599, %v1754, 0
        %v1770 = vsel %vm599, %v1755, 0
        %v1773 = vsel %vm599, %v1756, 0
        %v1776 = vsel %vm599, %v1757, 0
        %v1779 = vsel %vm599, %v1758, 0
        %v1782 = vsel %vm599, %v1759, 0
        %v1785 = vsel %vm624, %v1743, 0
        %1787 = vmatprep.subr.bf16.mxu0 0
        %1788 = vmatpush1.bf16.msra.mxu0 0
        %1789 = vmatprep.subr.bf16.mxu0 0
        %1790 = vmatpush1.bf16.msra.mxu0 0
        %1791 = vmatprep.subr.bf16.mxu0 0
        %1792 = vmatpush1.bf16.msra.mxu0 0
        %1793 = vmatprep.subr.bf16.mxu0 0
        %1794 = vmatpush1.bf16.msra.mxu0 0
        %1795 = vmatprep.subr.bf16.mxu0 0
        %1796 = vmatpush1.bf16.msra.mxu0 0
        %1797 = vmatprep.subr.bf16.mxu0 0
        %1798 = vmatpush1.bf16.msra.mxu0 0
        %1799 = vmatprep.subr.bf16.mxu0 0
        %1800 = vmatpush1.bf16.msra.mxu0 0
        %1801 = vmatprep.subr.bf16.mxu0 0
        %1802 = vmatpush1.bf16.msra.mxu0 %v1785
        %1803 = vmatprep.subr.bf16.mxu0 0
        %1804 = vmatpush2.bf16.msra.mxu0 0
        %1805 = vmatprep.subr.bf16.mxu0 0
        %1806 = vmatpush2.bf16.msra.mxu0 0
        %1807 = vmatprep.subr.bf16.mxu0 0
        %1808 = vmatpush2.bf16.msra.mxu0 0
        %1809 = vmatprep.subr.bf16.mxu0 0
        %1810 = vmatpush2.bf16.msra.mxu0 0
        %1811 = vmatprep.subr.bf16.mxu0 0
        %1812 = vmatpush2.bf16.msra.mxu0 0
        %1813 = vmatprep.subr.bf16.mxu0 0
        %1814 = vmatpush2.bf16.msra.mxu0 0
        %1815 = vmatprep.subr.bf16.mxu0 0
        %1816 = vmatpush2.bf16.msra.mxu0 0
        %1817 = vmatprep.subr.bf16.mxu0 0
        %1818 = vmatpush2.bf16.msra.mxu0 0
        %1819 = vmatprep.mubr.bf16.mxu0 0
        %1820 = vmatmul.mubr.bf16.gmra.mxu0 %v1761
        %v1821 = vpop.f32.mrf.mxu0
        %v1822 = vadd.f32 0.0, %v1821
        %v1823 = vpop.f32.mrf.mxu0
        %v1824 = vpop.f32.mrf.mxu0
        %v1825 = vadd.f32 0.0, %v1824
        %v1826 = vpop.f32.mrf.mxu0
        %1827 = vmatprep.mubr.bf16.mxu0 0
        %1828 = vmatmul.mubr.bf16.gmra.mxu0 %v1764
        %v1829 = vpop.f32.mrf.mxu0
        %v1830 = vadd.f32 0.0, %v1829
        %v1831 = vpop.f32.mrf.mxu0
        %v1832 = vpop.f32.mrf.mxu0
        %v1833 = vadd.f32 0.0, %v1832
        %v1834 = vpop.f32.mrf.mxu0
        %1835 = vmatprep.mubr.bf16.mxu0 0
        %1836 = vmatmul.mubr.bf16.gmra.mxu0 %v1767
        %v1837 = vpop.f32.mrf.mxu0
        %v1838 = vadd.f32 0.0, %v1837
        %v1839 = vpop.f32.mrf.mxu0
        %v1840 = vpop.f32.mrf.mxu0
        %v1841 = vadd.f32 0.0, %v1840
        %v1842 = vpop.f32.mrf.mxu0
        %1843 = vmatprep.mubr.bf16.mxu0 0
        %1844 = vmatmul.mubr.bf16.gmra.mxu0 %v1770
        %v1845 = vpop.f32.mrf.mxu0
        %v1846 = vadd.f32 0.0, %v1845
        %v1847 = vpop.f32.mrf.mxu0
        %v1848 = vpop.f32.mrf.mxu0
        %v1849 = vadd.f32 0.0, %v1848
        %v1850 = vpop.f32.mrf.mxu0
        %1851 = vmatprep.mubr.bf16.mxu0 0
        %1852 = vmatmul.mubr.bf16.gmra.mxu0 %v1773
        %v1853 = vpop.f32.mrf.mxu0
        %v1854 = vadd.f32 0.0, %v1853
        %v1855 = vpop.f32.mrf.mxu0
        %v1856 = vpop.f32.mrf.mxu0
        %v1857 = vadd.f32 0.0, %v1856
        %v1858 = vpop.f32.mrf.mxu0
        %1859 = vmatprep.mubr.bf16.mxu0 0
        %1860 = vmatmul.mubr.bf16.gmra.mxu0 %v1776
        %v1861 = vpop.f32.mrf.mxu0
        %v1862 = vadd.f32 0.0, %v1861
        %v1863 = vpop.f32.mrf.mxu0
        %v1864 = vpop.f32.mrf.mxu0
        %v1865 = vadd.f32 0.0, %v1864
        %v1866 = vpop.f32.mrf.mxu0
        %1867 = vmatprep.mubr.bf16.mxu0 0
        %1868 = vmatmul.mubr.bf16.gmra.mxu0 %v1779
        %v1869 = vpop.f32.mrf.mxu0
        %v1870 = vadd.f32 0.0, %v1869
        %v1871 = vpop.f32.mrf.mxu0
        %v1872 = vpop.f32.mrf.mxu0
        %v1873 = vadd.f32 0.0, %v1872
        %v1874 = vpop.f32.mrf.mxu0
        %1875 = vmatprep.mubr.bf16.mxu0 0
        %1876 = vmatmul.mubr.bf16.gmra.mxu0 %v1782
        %v1877 = vpop.f32.mrf.mxu0
        %v1878 = vadd.f32 0.0, %v1877
        %v1879 = vpop.f32.mrf.mxu0
        %v1880 = vpop.f32.mrf.mxu0
        %v1881 = vadd.f32 0.0, %v1880
        %v1882 = vpop.f32.mrf.mxu0
        %1883 = vdwg.mxu0
        %s1884 = scalar_lea.vmem %s519, 256 [#allocation13]
        %1885 = vst [vmem:[%s1884] sm:$0xff] %v1822
        %1886 = vst [vmem:[%s1884 + $0x8] sm:$0xff] %v1825
        %1887 = vst [vmem:[%s1884 + $0x10] sm:$0xff] %v1830
        %1888 = vst [vmem:[%s1884 + $0x18] sm:$0xff] %v1833
        %1889 = vst [vmem:[%s1884 + $0x20] sm:$0xff] %v1838
        %1890 = vst [vmem:[%s1884 + $0x28] sm:$0xff] %v1841
        %1891 = vst [vmem:[%s1884 + $0x30] sm:$0xff] %v1846
        %1892 = vst [vmem:[%s1884 + $0x38] sm:$0xff] %v1849
        %1893 = vst [vmem:[%s1884 + $0x40] sm:$0xff] %v1854
        %1894 = vst [vmem:[%s1884 + $0x48] sm:$0xff] %v1857
        %1895 = vst [vmem:[%s1884 + $0x50] sm:$0xff] %v1862
        %1896 = vst [vmem:[%s1884 + $0x58] sm:$0xff] %v1865
        %1897 = vst [vmem:[%s1884 + $0x60] sm:$0xff] %v1870
        %1898 = vst [vmem:[%s1884 + $0x68] sm:$0xff] %v1873
        %1899 = vst [vmem:[%s1884 + $0x70] sm:$0xff] %v1878
        %1900 = vst [vmem:[%s1884 + $0x78] sm:$0xff] %v1881
        %v1901 = vpack.c.bf16 %v1729, %v1729
        %v1903 = vsel %vm624, %v1901, 0
        %1905 = vmatprep.subr.bf16.mxu0 0
        %1906 = vmatpush1.bf16.msra.mxu0 0
        %1907 = vmatprep.subr.bf16.mxu0 0
        %1908 = vmatpush1.bf16.msra.mxu0 0
        %1909 = vmatprep.subr.bf16.mxu0 0
        %1910 = vmatpush1.bf16.msra.mxu0 0
        %1911 = vmatprep.subr.bf16.mxu0 0
        %1912 = vmatpush1.bf16.msra.mxu0 0
        %1913 = vmatprep.subr.bf16.mxu0 0
        %1914 = vmatpush1.bf16.msra.mxu0 0
        %1915 = vmatprep.subr.bf16.mxu0 0
        %1916 = vmatpush1.bf16.msra.mxu0 0
        %1917 = vmatprep.subr.bf16.mxu0 0
        %1918 = vmatpush1.bf16.msra.mxu0 0
        %1919 = vmatprep.subr.bf16.mxu0 0
        %1920 = vmatpush1.bf16.msra.mxu0 %v1903
        %1921 = vmatprep.subr.bf16.mxu0 0
        %1922 = vmatpush2.bf16.msra.mxu0 0
        %1923 = vmatprep.subr.bf16.mxu0 0
        %1924 = vmatpush2.bf16.msra.mxu0 0
        %1925 = vmatprep.subr.bf16.mxu0 0
        %1926 = vmatpush2.bf16.msra.mxu0 0
        %1927 = vmatprep.subr.bf16.mxu0 0
        %1928 = vmatpush2.bf16.msra.mxu0 0
        %1929 = vmatprep.subr.bf16.mxu0 0
        %1930 = vmatpush2.bf16.msra.mxu0 0
        %1931 = vmatprep.subr.bf16.mxu0 0
        %1932 = vmatpush2.bf16.msra.mxu0 0
        %1933 = vmatprep.subr.bf16.mxu0 0
        %1934 = vmatpush2.bf16.msra.mxu0 0
        %1935 = vmatprep.subr.bf16.mxu0 0
        %1936 = vmatpush2.bf16.msra.mxu0 0
        %1937 = vmatprep.mubr.bf16.mxu0 0
        %1938 = vmatmul.mubr.bf16.gmra.mxu0 %v1761
        %v1939 = vpop.f32.mrf.mxu0
        %v1940 = vadd.f32 0.0, %v1939
        %v1941 = vpop.f32.mrf.mxu0
        %v1942 = vpop.f32.mrf.mxu0
        %v1943 = vadd.f32 0.0, %v1942
        %v1944 = vpop.f32.mrf.mxu0
        %1945 = vmatprep.mubr.bf16.mxu0 0
        %1946 = vmatmul.mubr.bf16.gmra.mxu0 %v1764
        %v1947 = vpop.f32.mrf.mxu0
        %v1948 = vadd.f32 0.0, %v1947
        %v1949 = vpop.f32.mrf.mxu0
        %v1950 = vpop.f32.mrf.mxu0
        %v1951 = vadd.f32 0.0, %v1950
        %v1952 = vpop.f32.mrf.mxu0
        %1953 = vmatprep.mubr.bf16.mxu0 0
        %1954 = vmatmul.mubr.bf16.gmra.mxu0 %v1767
        %v1955 = vpop.f32.mrf.mxu0
        %v1956 = vadd.f32 0.0, %v1955
        %v1957 = vpop.f32.mrf.mxu0
        %v1958 = vpop.f32.mrf.mxu0
        %v1959 = vadd.f32 0.0, %v1958
        %v1960 = vpop.f32.mrf.mxu0
        %1961 = vmatprep.mubr.bf16.mxu0 0
        %1962 = vmatmul.mubr.bf16.gmra.mxu0 %v1770
        %v1963 = vpop.f32.mrf.mxu0
        %v1964 = vadd.f32 0.0, %v1963
        %v1965 = vpop.f32.mrf.mxu0
        %v1966 = vpop.f32.mrf.mxu0
        %v1967 = vadd.f32 0.0, %v1966
        %v1968 = vpop.f32.mrf.mxu0
        %1969 = vmatprep.mubr.bf16.mxu0 0
        %1970 = vmatmul.mubr.bf16.gmra.mxu0 %v1773
        %v1971 = vpop.f32.mrf.mxu0
        %v1972 = vadd.f32 0.0, %v1971
        %v1973 = vpop.f32.mrf.mxu0
        %v1974 = vpop.f32.mrf.mxu0
        %v1975 = vadd.f32 0.0, %v1974
        %v1976 = vpop.f32.mrf.mxu0
        %1977 = vmatprep.mubr.bf16.mxu0 0
        %1978 = vmatmul.mubr.bf16.gmra.mxu0 %v1776
        %v1979 = vpop.f32.mrf.mxu0
        %v1980 = vadd.f32 0.0, %v1979
        %v1981 = vpop.f32.mrf.mxu0
        %v1982 = vpop.f32.mrf.mxu0
        %v1983 = vadd.f32 0.0, %v1982
        %v1984 = vpop.f32.mrf.mxu0
        %1985 = vmatprep.mubr.bf16.mxu0 0
        %1986 = vmatmul.mubr.bf16.gmra.mxu0 %v1779
        %v1987 = vpop.f32.mrf.mxu0
        %v1988 = vadd.f32 0.0, %v1987
        %v1989 = vpop.f32.mrf.mxu0
        %v1990 = vpop.f32.mrf.mxu0
        %v1991 = vadd.f32 0.0, %v1990
        %v1992 = vpop.f32.mrf.mxu0
        %1993 = vmatprep.mubr.bf16.mxu0 0
        %1994 = vmatmul.mubr.bf16.gmra.mxu0 %v1782
        %v1995 = vpop.f32.mrf.mxu0
        %v1996 = vadd.f32 0.0, %v1995
        %v1997 = vpop.f32.mrf.mxu0
        %v1998 = vpop.f32.mrf.mxu0
        %v1999 = vadd.f32 0.0, %v1998
        %v2000 = vpop.f32.mrf.mxu0
        %2001 = vdwg.mxu0
        %s2002 = scalar_lea.vmem %s526, 256 [#allocation15]
        %2003 = vst [vmem:[%s2002] sm:$0xff] %v1940
        %2004 = vst [vmem:[%s2002 + $0x8] sm:$0xff] %v1943
        %2005 = vst [vmem:[%s2002 + $0x10] sm:$0xff] %v1948
        %2006 = vst [vmem:[%s2002 + $0x18] sm:$0xff] %v1951
        %2007 = vst [vmem:[%s2002 + $0x20] sm:$0xff] %v1956
        %2008 = vst [vmem:[%s2002 + $0x28] sm:$0xff] %v1959
        %2009 = vst [vmem:[%s2002 + $0x30] sm:$0xff] %v1964
        %2010 = vst [vmem:[%s2002 + $0x38] sm:$0xff] %v1967
        %2011 = vst [vmem:[%s2002 + $0x40] sm:$0xff] %v1972
        %2012 = vst [vmem:[%s2002 + $0x48] sm:$0xff] %v1975
        %2013 = vst [vmem:[%s2002 + $0x50] sm:$0xff] %v1980
        %2014 = vst [vmem:[%s2002 + $0x58] sm:$0xff] %v1983
        %2015 = vst [vmem:[%s2002 + $0x60] sm:$0xff] %v1988
        %2016 = vst [vmem:[%s2002 + $0x68] sm:$0xff] %v1991
        %2017 = vst [vmem:[%s2002 + $0x70] sm:$0xff] %v1996
        %2018 = vst [vmem:[%s2002 + $0x78] sm:$0xff] %v1999
        %v2019 = vld [vmem:[#allocation16] sm:$0xff]
        %v2020 = vmul.f32 %v2019, 0.99
        %v2021 = vadd.f32 %v2020, %v1727
        %v2022 = vld [vmem:[#allocation18] sm:$0xff]
        %v2023 = vmul.f32 %v2022, 0.99
        %v2024 = vadd.f32 %v2023, %v1729
        %v2025 = vpack.c.bf16 %v1736, %v1736
        %v2026 = vpack.c.bf16 %v2021, %v2021
        %2027 = vxpose.xlu0.c.b16.start [1/8] %v2025, 128
        %2028 = vxpose.xlu0.c.b16.cont [2/8] 0, 128
        %2029 = vxpose.xlu0.c.b16.cont [3/8] 0, 128
        %2030 = vxpose.xlu0.c.b16.cont [4/8] 0, 128
        %2031 = vxpose.xlu0.c.b16.cont [5/8] 0, 128
        %2032 = vxpose.xlu0.c.b16.cont [6/8] 0, 128
        %2033 = vxpose.xlu0.c.b16.cont [7/8] 0, 128
        %2034 = vxpose.xlu0.c.b16.end [8/8] 0, 128
        %v2035 = vpop.trf.xlu0
        %v2036 = vpop.trf.xlu0
        %v2037 = vpop.trf.xlu0
        %v2038 = vpop.trf.xlu0
        %v2039 = vpop.trf.xlu0
        %v2040 = vpop.trf.xlu0
        %v2041 = vpop.trf.xlu0
        %v2042 = vpop.trf.xlu0
        %v2044 = vsel %vm599, %v2035, 0
        %v2047 = vsel %vm599, %v2036, 0
        %v2050 = vsel %vm599, %v2037, 0
        %v2053 = vsel %vm599, %v2038, 0
        %v2056 = vsel %vm599, %v2039, 0
        %v2059 = vsel %vm599, %v2040, 0
        %v2062 = vsel %vm599, %v2041, 0
        %v2065 = vsel %vm599, %v2042, 0
        %v2068 = vsel %vm624, %v2026, 0
        %2070 = vmatprep.subr.bf16.mxu0 0
        %2071 = vmatpush1.bf16.msra.mxu0 0
        %2072 = vmatprep.subr.bf16.mxu0 0
        %2073 = vmatpush1.bf16.msra.mxu0 0
        %2074 = vmatprep.subr.bf16.mxu0 0
        %2075 = vmatpush1.bf16.msra.mxu0 0
        %2076 = vmatprep.subr.bf16.mxu0 0
        %2077 = vmatpush1.bf16.msra.mxu0 0
        %2078 = vmatprep.subr.bf16.mxu0 0
        %2079 = vmatpush1.bf16.msra.mxu0 0
        %2080 = vmatprep.subr.bf16.mxu0 0
        %2081 = vmatpush1.bf16.msra.mxu0 0
        %2082 = vmatprep.subr.bf16.mxu0 0
        %2083 = vmatpush1.bf16.msra.mxu0 0
        %2084 = vmatprep.subr.bf16.mxu0 0
        %2085 = vmatpush1.bf16.msra.mxu0 %v2068
        %2086 = vmatprep.subr.bf16.mxu0 0
        %2087 = vmatpush2.bf16.msra.mxu0 0
        %2088 = vmatprep.subr.bf16.mxu0 0
        %2089 = vmatpush2.bf16.msra.mxu0 0
        %2090 = vmatprep.subr.bf16.mxu0 0
        %2091 = vmatpush2.bf16.msra.mxu0 0
        %2092 = vmatprep.subr.bf16.mxu0 0
        %2093 = vmatpush2.bf16.msra.mxu0 0
        %2094 = vmatprep.subr.bf16.mxu0 0
        %2095 = vmatpush2.bf16.msra.mxu0 0
        %2096 = vmatprep.subr.bf16.mxu0 0
        %2097 = vmatpush2.bf16.msra.mxu0 0
        %2098 = vmatprep.subr.bf16.mxu0 0
        %2099 = vmatpush2.bf16.msra.mxu0 0
        %2100 = vmatprep.subr.bf16.mxu0 0
        %2101 = vmatpush2.bf16.msra.mxu0 0
        %2102 = vmatprep.mubr.bf16.mxu0 0
        %2103 = vmatmul.mubr.bf16.gmra.mxu0 %v2044
        %v2104 = vpop.f32.mrf.mxu0
        %v2105 = vadd.f32 0.0, %v2104
        %v2106 = vpop.f32.mrf.mxu0
        %v2107 = vpop.f32.mrf.mxu0
        %v2108 = vadd.f32 0.0, %v2107
        %v2109 = vpop.f32.mrf.mxu0
        %2110 = vmatprep.mubr.bf16.mxu0 0
        %2111 = vmatmul.mubr.bf16.gmra.mxu0 %v2047
        %v2112 = vpop.f32.mrf.mxu0
        %v2113 = vadd.f32 0.0, %v2112
        %v2114 = vpop.f32.mrf.mxu0
        %v2115 = vpop.f32.mrf.mxu0
        %v2116 = vadd.f32 0.0, %v2115
        %v2117 = vpop.f32.mrf.mxu0
        %2118 = vmatprep.mubr.bf16.mxu0 0
        %2119 = vmatmul.mubr.bf16.gmra.mxu0 %v2050
        %v2120 = vpop.f32.mrf.mxu0
        %v2121 = vadd.f32 0.0, %v2120
        %v2122 = vpop.f32.mrf.mxu0
        %v2123 = vpop.f32.mrf.mxu0
        %v2124 = vadd.f32 0.0, %v2123
        %v2125 = vpop.f32.mrf.mxu0
        %2126 = vmatprep.mubr.bf16.mxu0 0
        %2127 = vmatmul.mubr.bf16.gmra.mxu0 %v2053
        %v2128 = vpop.f32.mrf.mxu0
        %v2129 = vadd.f32 0.0, %v2128
        %v2130 = vpop.f32.mrf.mxu0
        %v2131 = vpop.f32.mrf.mxu0
        %v2132 = vadd.f32 0.0, %v2131
        %v2133 = vpop.f32.mrf.mxu0
        %2134 = vmatprep.mubr.bf16.mxu0 0
        %2135 = vmatmul.mubr.bf16.gmra.mxu0 %v2056
        %v2136 = vpop.f32.mrf.mxu0
        %v2137 = vadd.f32 0.0, %v2136
        %v2138 = vpop.f32.mrf.mxu0
        %v2139 = vpop.f32.mrf.mxu0
        %v2140 = vadd.f32 0.0, %v2139
        %v2141 = vpop.f32.mrf.mxu0
        %2142 = vmatprep.mubr.bf16.mxu0 0
        %2143 = vmatmul.mubr.bf16.gmra.mxu0 %v2059
        %v2144 = vpop.f32.mrf.mxu0
        %v2145 = vadd.f32 0.0, %v2144
        %v2146 = vpop.f32.mrf.mxu0
        %v2147 = vpop.f32.mrf.mxu0
        %v2148 = vadd.f32 0.0, %v2147
        %v2149 = vpop.f32.mrf.mxu0
        %2150 = vmatprep.mubr.bf16.mxu0 0
        %2151 = vmatmul.mubr.bf16.gmra.mxu0 %v2062
        %v2152 = vpop.f32.mrf.mxu0
        %v2153 = vadd.f32 0.0, %v2152
        %v2154 = vpop.f32.mrf.mxu0
        %v2155 = vpop.f32.mrf.mxu0
        %v2156 = vadd.f32 0.0, %v2155
        %v2157 = vpop.f32.mrf.mxu0
        %2158 = vmatprep.mubr.bf16.mxu0 0
        %2159 = vmatmul.mubr.bf16.gmra.mxu0 %v2065
        %v2160 = vpop.f32.mrf.mxu0
        %v2161 = vadd.f32 0.0, %v2160
        %v2162 = vpop.f32.mrf.mxu0
        %v2163 = vpop.f32.mrf.mxu0
        %v2164 = vadd.f32 0.0, %v2163
        %v2165 = vpop.f32.mrf.mxu0
        %2166 = vdwg.mxu0
        %s2167 = scalar_lea.vmem %s505, 256 [#allocation10]
        %2168 = vst [vmem:[%s2167] sm:$0xff] %v2105
        %2169 = vst [vmem:[%s2167 + $0x8] sm:$0xff] %v2108
        %2170 = vst [vmem:[%s2167 + $0x10] sm:$0xff] %v2113
        %2171 = vst [vmem:[%s2167 + $0x18] sm:$0xff] %v2116
        %2172 = vst [vmem:[%s2167 + $0x20] sm:$0xff] %v2121
        %2173 = vst [vmem:[%s2167 + $0x28] sm:$0xff] %v2124
        %2174 = vst [vmem:[%s2167 + $0x30] sm:$0xff] %v2129
        %2175 = vst [vmem:[%s2167 + $0x38] sm:$0xff] %v2132
        %2176 = vst [vmem:[%s2167 + $0x40] sm:$0xff] %v2137
        %2177 = vst [vmem:[%s2167 + $0x48] sm:$0xff] %v2140
        %2178 = vst [vmem:[%s2167 + $0x50] sm:$0xff] %v2145
        %2179 = vst [vmem:[%s2167 + $0x58] sm:$0xff] %v2148
        %2180 = vst [vmem:[%s2167 + $0x60] sm:$0xff] %v2153
        %2181 = vst [vmem:[%s2167 + $0x68] sm:$0xff] %v2156
        %2182 = vst [vmem:[%s2167 + $0x70] sm:$0xff] %v2161
        %2183 = vst [vmem:[%s2167 + $0x78] sm:$0xff] %v2164
        %v2184 = vpack.c.bf16 %v2024, %v2024
        %v2186 = vsel %vm624, %v2184, 0
        %2188 = vmatprep.subr.bf16.mxu0 0
        %2189 = vmatpush1.bf16.msra.mxu0 0
        %2190 = vmatprep.subr.bf16.mxu0 0
        %2191 = vmatpush1.bf16.msra.mxu0 0
        %2192 = vmatprep.subr.bf16.mxu0 0
        %2193 = vmatpush1.bf16.msra.mxu0 0
        %2194 = vmatprep.subr.bf16.mxu0 0
        %2195 = vmatpush1.bf16.msra.mxu0 0
        %2196 = vmatprep.subr.bf16.mxu0 0
        %2197 = vmatpush1.bf16.msra.mxu0 0
        %2198 = vmatprep.subr.bf16.mxu0 0
        %2199 = vmatpush1.bf16.msra.mxu0 0
        %2200 = vmatprep.subr.bf16.mxu0 0
        %2201 = vmatpush1.bf16.msra.mxu0 0
        %2202 = vmatprep.subr.bf16.mxu0 0
        %2203 = vmatpush1.bf16.msra.mxu0 %v2186
        %2204 = vmatprep.subr.bf16.mxu0 0
        %2205 = vmatpush2.bf16.msra.mxu0 0
        %2206 = vmatprep.subr.bf16.mxu0 0
        %2207 = vmatpush2.bf16.msra.mxu0 0
        %2208 = vmatprep.subr.bf16.mxu0 0
        %2209 = vmatpush2.bf16.msra.mxu0 0
        %2210 = vmatprep.subr.bf16.mxu0 0
        %2211 = vmatpush2.bf16.msra.mxu0 0
        %2212 = vmatprep.subr.bf16.mxu0 0
        %2213 = vmatpush2.bf16.msra.mxu0 0
        %2214 = vmatprep.subr.bf16.mxu0 0
        %2215 = vmatpush2.bf16.msra.mxu0 0
        %2216 = vmatprep.subr.bf16.mxu0 0
        %2217 = vmatpush2.bf16.msra.mxu0 0
        %2218 = vmatprep.subr.bf16.mxu0 0
        %2219 = vmatpush2.bf16.msra.mxu0 0
        %2220 = vmatprep.mubr.bf16.mxu0 0
        %2221 = vmatmul.mubr.bf16.gmra.mxu0 %v2044
        %v2222 = vpop.f32.mrf.mxu0
        %v2223 = vadd.f32 0.0, %v2222
        %v2224 = vpop.f32.mrf.mxu0
        %v2225 = vpop.f32.mrf.mxu0
        %v2226 = vadd.f32 0.0, %v2225
        %v2227 = vpop.f32.mrf.mxu0
        %2228 = vmatprep.mubr.bf16.mxu0 0
        %2229 = vmatmul.mubr.bf16.gmra.mxu0 %v2047
        %v2230 = vpop.f32.mrf.mxu0
        %v2231 = vadd.f32 0.0, %v2230
        %v2232 = vpop.f32.mrf.mxu0
        %v2233 = vpop.f32.mrf.mxu0
        %v2234 = vadd.f32 0.0, %v2233
        %v2235 = vpop.f32.mrf.mxu0
        %2236 = vmatprep.mubr.bf16.mxu0 0
        %2237 = vmatmul.mubr.bf16.gmra.mxu0 %v2050
        %v2238 = vpop.f32.mrf.mxu0
        %v2239 = vadd.f32 0.0, %v2238
        %v2240 = vpop.f32.mrf.mxu0
        %v2241 = vpop.f32.mrf.mxu0
        %v2242 = vadd.f32 0.0, %v2241
        %v2243 = vpop.f32.mrf.mxu0
        %2244 = vmatprep.mubr.bf16.mxu0 0
        %2245 = vmatmul.mubr.bf16.gmra.mxu0 %v2053
        %v2246 = vpop.f32.mrf.mxu0
        %v2247 = vadd.f32 0.0, %v2246
        %v2248 = vpop.f32.mrf.mxu0
        %v2249 = vpop.f32.mrf.mxu0
        %v2250 = vadd.f32 0.0, %v2249
        %v2251 = vpop.f32.mrf.mxu0
        %2252 = vmatprep.mubr.bf16.mxu0 0
        %2253 = vmatmul.mubr.bf16.gmra.mxu0 %v2056
        %v2254 = vpop.f32.mrf.mxu0
        %v2255 = vadd.f32 0.0, %v2254
        %v2256 = vpop.f32.mrf.mxu0
        %v2257 = vpop.f32.mrf.mxu0
        %v2258 = vadd.f32 0.0, %v2257
        %v2259 = vpop.f32.mrf.mxu0
        %2260 = vmatprep.mubr.bf16.mxu0 0
        %2261 = vmatmul.mubr.bf16.gmra.mxu0 %v2059
        %v2262 = vpop.f32.mrf.mxu0
        %v2263 = vadd.f32 0.0, %v2262
        %v2264 = vpop.f32.mrf.mxu0
        %v2265 = vpop.f32.mrf.mxu0
        %v2266 = vadd.f32 0.0, %v2265
        %v2267 = vpop.f32.mrf.mxu0
        %2268 = vmatprep.mubr.bf16.mxu0 0
        %2269 = vmatmul.mubr.bf16.gmra.mxu0 %v2062
        %v2270 = vpop.f32.mrf.mxu0
        %v2271 = vadd.f32 0.0, %v2270
        %v2272 = vpop.f32.mrf.mxu0
        %v2273 = vpop.f32.mrf.mxu0
        %v2274 = vadd.f32 0.0, %v2273
        %v2275 = vpop.f32.mrf.mxu0
        %2276 = vmatprep.mubr.bf16.mxu0 0
        %2277 = vmatmul.mubr.bf16.gmra.mxu0 %v2065
        %v2278 = vpop.f32.mrf.mxu0
        %v2279 = vadd.f32 0.0, %v2278
        %v2280 = vpop.f32.mrf.mxu0
        %v2281 = vpop.f32.mrf.mxu0
        %v2282 = vadd.f32 0.0, %v2281
        %v2283 = vpop.f32.mrf.mxu0
        %2284 = vdwg.mxu0
        %s2285 = scalar_lea.vmem %s512, 256 [#allocation12]
        %2286 = vst [vmem:[%s2285] sm:$0xff] %v2223
        %2287 = vst [vmem:[%s2285 + $0x8] sm:$0xff] %v2226
        %2288 = vst [vmem:[%s2285 + $0x10] sm:$0xff] %v2231
        %2289 = vst [vmem:[%s2285 + $0x18] sm:$0xff] %v2234
        %2290 = vst [vmem:[%s2285 + $0x20] sm:$0xff] %v2239
        %2291 = vst [vmem:[%s2285 + $0x28] sm:$0xff] %v2242
        %2292 = vst [vmem:[%s2285 + $0x30] sm:$0xff] %v2247
        %2293 = vst [vmem:[%s2285 + $0x38] sm:$0xff] %v2250
        %2294 = vst [vmem:[%s2285 + $0x40] sm:$0xff] %v2255
        %2295 = vst [vmem:[%s2285 + $0x48] sm:$0xff] %v2258
        %2296 = vst [vmem:[%s2285 + $0x50] sm:$0xff] %v2263
        %2297 = vst [vmem:[%s2285 + $0x58] sm:$0xff] %v2266
        %2298 = vst [vmem:[%s2285 + $0x60] sm:$0xff] %v2271
        %2299 = vst [vmem:[%s2285 + $0x68] sm:$0xff] %v2274
        %2300 = vst [vmem:[%s2285 + $0x70] sm:$0xff] %v2279
        %2301 = vst [vmem:[%s2285 + $0x78] sm:$0xff] %v2282
        %s2302 = scalar_lea.vmem %s498, 16 [#allocation9]
        %2303 = vst [vmem:[%s2302] sm:$0xff] %v1736
        %2304 = vst [vmem:[#allocation16] sm:$0xff] %v2021
        %2305 = vst [vmem:[#allocation18] sm:$0xff] %v2024
        %v2306 = vadd.f32 %v1741, %v1736
        %2307 = vst [vmem:[#allocation19] sm:$0xff] %v2306
        %s2308 = scalar_lea.vmem %s537, 24
        %v2309 = vld [vmem:[%s2308] sm:$0xff]
        %s2310 = scalar_lea.vmem %s543, 24
        %v2311 = vld [vmem:[%s2310] sm:$0xff]
        %s2312 = scalar_lea.vmem %s549, 24
        %v2313 = vld [vmem:[%s2312] sm:$0xff]
        %v2314 = vld [vmem:[#allocation2] sm:$0xff]
        %v2315 = vadd.f32 %v2314, %v2313
        %vm2316 = vcmp.gt.f32.partialorder %v2315, 0.5
        %v2317 = vsel %vm2316, 1, 0
        %v2318 = vcvt.s32.f32 %v2317
        %v2319 = vsub.f32 1.0, %v2318
        %v2320 = vmul.f32 %v2315, %v2319
        %2321 = vst [vmem:[#allocation2] sm:$0xff] %v2320
        %v2322 = vld [vmem:[#allocation19] sm:$0xff]
        %v2323 = vmul.f32 %v2322, 0.99
        %v2324 = vpack.c.bf16 %v2323, %v2323
        %v2325 = vpack.c.bf16 %v2309, %v2309
        %2326 = vxpose.xlu0.c.b16.start [1/8] %v2324, 128
        %2327 = vxpose.xlu0.c.b16.cont [2/8] 0, 128
        %2328 = vxpose.xlu0.c.b16.cont [3/8] 0, 128
        %2329 = vxpose.xlu0.c.b16.cont [4/8] 0, 128
        %2330 = vxpose.xlu0.c.b16.cont [5/8] 0, 128
        %2331 = vxpose.xlu0.c.b16.cont [6/8] 0, 128
        %2332 = vxpose.xlu0.c.b16.cont [7/8] 0, 128
        %2333 = vxpose.xlu0.c.b16.end [8/8] 0, 128
        %v2334 = vpop.trf.xlu0
        %v2335 = vpop.trf.xlu0
        %v2336 = vpop.trf.xlu0
        %v2337 = vpop.trf.xlu0
        %v2338 = vpop.trf.xlu0
        %v2339 = vpop.trf.xlu0
        %v2340 = vpop.trf.xlu0
        %v2341 = vpop.trf.xlu0
        %v2343 = vsel %vm599, %v2334, 0
        %v2346 = vsel %vm599, %v2335, 0
        %v2349 = vsel %vm599, %v2336, 0
        %v2352 = vsel %vm599, %v2337, 0
        %v2355 = vsel %vm599, %v2338, 0
        %v2358 = vsel %vm599, %v2339, 0
        %v2361 = vsel %vm599, %v2340, 0
        %v2364 = vsel %vm599, %v2341, 0
        %v2367 = vsel %vm624, %v2325, 0
        %2369 = vmatprep.subr.bf16.mxu0 0
        %2370 = vmatpush1.bf16.msra.mxu0 0
        %2371 = vmatprep.subr.bf16.mxu0 0
        %2372 = vmatpush1.bf16.msra.mxu0 0
        %2373 = vmatprep.subr.bf16.mxu0 0
        %2374 = vmatpush1.bf16.msra.mxu0 0
        %2375 = vmatprep.subr.bf16.mxu0 0
        %2376 = vmatpush1.bf16.msra.mxu0 0
        %2377 = vmatprep.subr.bf16.mxu0 0
        %2378 = vmatpush1.bf16.msra.mxu0 0
        %2379 = vmatprep.subr.bf16.mxu0 0
        %2380 = vmatpush1.bf16.msra.mxu0 0
        %2381 = vmatprep.subr.bf16.mxu0 0
        %2382 = vmatpush1.bf16.msra.mxu0 0
        %2383 = vmatprep.subr.bf16.mxu0 0
        %2384 = vmatpush1.bf16.msra.mxu0 %v2367
        %2385 = vmatprep.subr.bf16.mxu0 0
        %2386 = vmatpush2.bf16.msra.mxu0 0
        %2387 = vmatprep.subr.bf16.mxu0 0
        %2388 = vmatpush2.bf16.msra.mxu0 0
        %2389 = vmatprep.subr.bf16.mxu0 0
        %2390 = vmatpush2.bf16.msra.mxu0 0
        %2391 = vmatprep.subr.bf16.mxu0 0
        %2392 = vmatpush2.bf16.msra.mxu0 0
        %2393 = vmatprep.subr.bf16.mxu0 0
        %2394 = vmatpush2.bf16.msra.mxu0 0
        %2395 = vmatprep.subr.bf16.mxu0 0
        %2396 = vmatpush2.bf16.msra.mxu0 0
        %2397 = vmatprep.subr.bf16.mxu0 0
        %2398 = vmatpush2.bf16.msra.mxu0 0
        %2399 = vmatprep.subr.bf16.mxu0 0
        %2400 = vmatpush2.bf16.msra.mxu0 0
        %2401 = vmatprep.mubr.bf16.mxu0 0
        %2402 = vmatmul.mubr.bf16.gmra.mxu0 %v2343
        %v2403 = vpop.f32.mrf.mxu0
        %v2404 = vadd.f32 0.0, %v2403
        %v2405 = vpop.f32.mrf.mxu0
        %v2406 = vpop.f32.mrf.mxu0
        %v2407 = vadd.f32 0.0, %v2406
        %v2408 = vpop.f32.mrf.mxu0
        %2409 = vmatprep.mubr.bf16.mxu0 0
        %2410 = vmatmul.mubr.bf16.gmra.mxu0 %v2346
        %v2411 = vpop.f32.mrf.mxu0
        %v2412 = vadd.f32 0.0, %v2411
        %v2413 = vpop.f32.mrf.mxu0
        %v2414 = vpop.f32.mrf.mxu0
        %v2415 = vadd.f32 0.0, %v2414
        %v2416 = vpop.f32.mrf.mxu0
        %2417 = vmatprep.mubr.bf16.mxu0 0
        %2418 = vmatmul.mubr.bf16.gmra.mxu0 %v2349
        %v2419 = vpop.f32.mrf.mxu0
        %v2420 = vadd.f32 0.0, %v2419
        %v2421 = vpop.f32.mrf.mxu0
        %v2422 = vpop.f32.mrf.mxu0
        %v2423 = vadd.f32 0.0, %v2422
        %v2424 = vpop.f32.mrf.mxu0
        %2425 = vmatprep.mubr.bf16.mxu0 0
        %2426 = vmatmul.mubr.bf16.gmra.mxu0 %v2352
        %v2427 = vpop.f32.mrf.mxu0
        %v2428 = vadd.f32 0.0, %v2427
        %v2429 = vpop.f32.mrf.mxu0
        %v2430 = vpop.f32.mrf.mxu0
        %v2431 = vadd.f32 0.0, %v2430
        %v2432 = vpop.f32.mrf.mxu0
        %2433 = vmatprep.mubr.bf16.mxu0 0
        %2434 = vmatmul.mubr.bf16.gmra.mxu0 %v2355
        %v2435 = vpop.f32.mrf.mxu0
        %v2436 = vadd.f32 0.0, %v2435
        %v2437 = vpop.f32.mrf.mxu0
        %v2438 = vpop.f32.mrf.mxu0
        %v2439 = vadd.f32 0.0, %v2438
        %v2440 = vpop.f32.mrf.mxu0
        %2441 = vmatprep.mubr.bf16.mxu0 0
        %2442 = vmatmul.mubr.bf16.gmra.mxu0 %v2358
        %v2443 = vpop.f32.mrf.mxu0
        %v2444 = vadd.f32 0.0, %v2443
        %v2445 = vpop.f32.mrf.mxu0
        %v2446 = vpop.f32.mrf.mxu0
        %v2447 = vadd.f32 0.0, %v2446
        %v2448 = vpop.f32.mrf.mxu0
        %2449 = vmatprep.mubr.bf16.mxu0 0
        %2450 = vmatmul.mubr.bf16.gmra.mxu0 %v2361
        %v2451 = vpop.f32.mrf.mxu0
        %v2452 = vadd.f32 0.0, %v2451
        %v2453 = vpop.f32.mrf.mxu0
        %v2454 = vpop.f32.mrf.mxu0
        %v2455 = vadd.f32 0.0, %v2454
        %v2456 = vpop.f32.mrf.mxu0
        %2457 = vmatprep.mubr.bf16.mxu0 0
        %2458 = vmatmul.mubr.bf16.gmra.mxu0 %v2364
        %v2459 = vpop.f32.mrf.mxu0
        %v2460 = vadd.f32 0.0, %v2459
        %v2461 = vpop.f32.mrf.mxu0
        %v2462 = vpop.f32.mrf.mxu0
        %v2463 = vadd.f32 0.0, %v2462
        %v2464 = vpop.f32.mrf.mxu0
        %2465 = vdwg.mxu0
        %s2466 = scalar_lea.vmem %s519, 384 [#allocation13]
        %2467 = vst [vmem:[%s2466] sm:$0xff] %v2404
        %2468 = vst [vmem:[%s2466 + $0x8] sm:$0xff] %v2407
        %2469 = vst [vmem:[%s2466 + $0x10] sm:$0xff] %v2412
        %2470 = vst [vmem:[%s2466 + $0x18] sm:$0xff] %v2415
        %2471 = vst [vmem:[%s2466 + $0x20] sm:$0xff] %v2420
        %2472 = vst [vmem:[%s2466 + $0x28] sm:$0xff] %v2423
        %2473 = vst [vmem:[%s2466 + $0x30] sm:$0xff] %v2428
        %2474 = vst [vmem:[%s2466 + $0x38] sm:$0xff] %v2431
        %2475 = vst [vmem:[%s2466 + $0x40] sm:$0xff] %v2436
        %2476 = vst [vmem:[%s2466 + $0x48] sm:$0xff] %v2439
        %2477 = vst [vmem:[%s2466 + $0x50] sm:$0xff] %v2444
        %2478 = vst [vmem:[%s2466 + $0x58] sm:$0xff] %v2447
        %2479 = vst [vmem:[%s2466 + $0x60] sm:$0xff] %v2452
        %2480 = vst [vmem:[%s2466 + $0x68] sm:$0xff] %v2455
        %2481 = vst [vmem:[%s2466 + $0x70] sm:$0xff] %v2460
        %2482 = vst [vmem:[%s2466 + $0x78] sm:$0xff] %v2463
        %v2483 = vpack.c.bf16 %v2311, %v2311
        %v2485 = vsel %vm624, %v2483, 0
        %2487 = vmatprep.subr.bf16.mxu0 0
        %2488 = vmatpush1.bf16.msra.mxu0 0
        %2489 = vmatprep.subr.bf16.mxu0 0
        %2490 = vmatpush1.bf16.msra.mxu0 0
        %2491 = vmatprep.subr.bf16.mxu0 0
        %2492 = vmatpush1.bf16.msra.mxu0 0
        %2493 = vmatprep.subr.bf16.mxu0 0
        %2494 = vmatpush1.bf16.msra.mxu0 0
        %2495 = vmatprep.subr.bf16.mxu0 0
        %2496 = vmatpush1.bf16.msra.mxu0 0
        %2497 = vmatprep.subr.bf16.mxu0 0
        %2498 = vmatpush1.bf16.msra.mxu0 0
        %2499 = vmatprep.subr.bf16.mxu0 0
        %2500 = vmatpush1.bf16.msra.mxu0 0
        %2501 = vmatprep.subr.bf16.mxu0 0
        %2502 = vmatpush1.bf16.msra.mxu0 %v2485
        %2503 = vmatprep.subr.bf16.mxu0 0
        %2504 = vmatpush2.bf16.msra.mxu0 0
        %2505 = vmatprep.subr.bf16.mxu0 0
        %2506 = vmatpush2.bf16.msra.mxu0 0
        %2507 = vmatprep.subr.bf16.mxu0 0
        %2508 = vmatpush2.bf16.msra.mxu0 0
        %2509 = vmatprep.subr.bf16.mxu0 0
        %2510 = vmatpush2.bf16.msra.mxu0 0
        %2511 = vmatprep.subr.bf16.mxu0 0
        %2512 = vmatpush2.bf16.msra.mxu0 0
        %2513 = vmatprep.subr.bf16.mxu0 0
        %2514 = vmatpush2.bf16.msra.mxu0 0
        %2515 = vmatprep.subr.bf16.mxu0 0
        %2516 = vmatpush2.bf16.msra.mxu0 0
        %2517 = vmatprep.subr.bf16.mxu0 0
        %2518 = vmatpush2.bf16.msra.mxu0 0
        %2519 = vmatprep.mubr.bf16.mxu0 0
        %2520 = vmatmul.mubr.bf16.gmra.mxu0 %v2343
        %v2521 = vpop.f32.mrf.mxu0
        %v2522 = vadd.f32 0.0, %v2521
        %v2523 = vpop.f32.mrf.mxu0
        %v2524 = vpop.f32.mrf.mxu0
        %v2525 = vadd.f32 0.0, %v2524
        %v2526 = vpop.f32.mrf.mxu0
        %2527 = vmatprep.mubr.bf16.mxu0 0
        %2528 = vmatmul.mubr.bf16.gmra.mxu0 %v2346
        %v2529 = vpop.f32.mrf.mxu0
        %v2530 = vadd.f32 0.0, %v2529
        %v2531 = vpop.f32.mrf.mxu0
        %v2532 = vpop.f32.mrf.mxu0
        %v2533 = vadd.f32 0.0, %v2532
        %v2534 = vpop.f32.mrf.mxu0
        %2535 = vmatprep.mubr.bf16.mxu0 0
        %2536 = vmatmul.mubr.bf16.gmra.mxu0 %v2349
        %v2537 = vpop.f32.mrf.mxu0
        %v2538 = vadd.f32 0.0, %v2537
        %v2539 = vpop.f32.mrf.mxu0
        %v2540 = vpop.f32.mrf.mxu0
        %v2541 = vadd.f32 0.0, %v2540
        %v2542 = vpop.f32.mrf.mxu0
        %2543 = vmatprep.mubr.bf16.mxu0 0
        %2544 = vmatmul.mubr.bf16.gmra.mxu0 %v2352
        %v2545 = vpop.f32.mrf.mxu0
        %v2546 = vadd.f32 0.0, %v2545
        %v2547 = vpop.f32.mrf.mxu0
        %v2548 = vpop.f32.mrf.mxu0
        %v2549 = vadd.f32 0.0, %v2548
        %v2550 = vpop.f32.mrf.mxu0
        %2551 = vmatprep.mubr.bf16.mxu0 0
        %2552 = vmatmul.mubr.bf16.gmra.mxu0 %v2355
        %v2553 = vpop.f32.mrf.mxu0
        %v2554 = vadd.f32 0.0, %v2553
        %v2555 = vpop.f32.mrf.mxu0
        %v2556 = vpop.f32.mrf.mxu0
        %v2557 = vadd.f32 0.0, %v2556
        %v2558 = vpop.f32.mrf.mxu0
        %2559 = vmatprep.mubr.bf16.mxu0 0
        %2560 = vmatmul.mubr.bf16.gmra.mxu0 %v2358
        %v2561 = vpop.f32.mrf.mxu0
        %v2562 = vadd.f32 0.0, %v2561
        %v2563 = vpop.f32.mrf.mxu0
        %v2564 = vpop.f32.mrf.mxu0
        %v2565 = vadd.f32 0.0, %v2564
        %v2566 = vpop.f32.mrf.mxu0
        %2567 = vmatprep.mubr.bf16.mxu0 0
        %2568 = vmatmul.mubr.bf16.gmra.mxu0 %v2361
        %v2569 = vpop.f32.mrf.mxu0
        %v2570 = vadd.f32 0.0, %v2569
        %v2571 = vpop.f32.mrf.mxu0
        %v2572 = vpop.f32.mrf.mxu0
        %v2573 = vadd.f32 0.0, %v2572
        %v2574 = vpop.f32.mrf.mxu0
        %2575 = vmatprep.mubr.bf16.mxu0 0
        %2576 = vmatmul.mubr.bf16.gmra.mxu0 %v2364
        %v2577 = vpop.f32.mrf.mxu0
        %v2578 = vadd.f32 0.0, %v2577
        %v2579 = vpop.f32.mrf.mxu0
        %v2580 = vpop.f32.mrf.mxu0
        %v2581 = vadd.f32 0.0, %v2580
        %v2582 = vpop.f32.mrf.mxu0
        %2583 = vdwg.mxu0
        %s2584 = scalar_lea.vmem %s526, 384 [#allocation15]
        %2585 = vst [vmem:[%s2584] sm:$0xff] %v2522
        %2586 = vst [vmem:[%s2584 + $0x8] sm:$0xff] %v2525
        %2587 = vst [vmem:[%s2584 + $0x10] sm:$0xff] %v2530
        %2588 = vst [vmem:[%s2584 + $0x18] sm:$0xff] %v2533
        %2589 = vst [vmem:[%s2584 + $0x20] sm:$0xff] %v2538
        %2590 = vst [vmem:[%s2584 + $0x28] sm:$0xff] %v2541
        %2591 = vst [vmem:[%s2584 + $0x30] sm:$0xff] %v2546
        %2592 = vst [vmem:[%s2584 + $0x38] sm:$0xff] %v2549
        %2593 = vst [vmem:[%s2584 + $0x40] sm:$0xff] %v2554
        %2594 = vst [vmem:[%s2584 + $0x48] sm:$0xff] %v2557
        %2595 = vst [vmem:[%s2584 + $0x50] sm:$0xff] %v2562
        %2596 = vst [vmem:[%s2584 + $0x58] sm:$0xff] %v2565
        %2597 = vst [vmem:[%s2584 + $0x60] sm:$0xff] %v2570
        %2598 = vst [vmem:[%s2584 + $0x68] sm:$0xff] %v2573
        %2599 = vst [vmem:[%s2584 + $0x70] sm:$0xff] %v2578
        %2600 = vst [vmem:[%s2584 + $0x78] sm:$0xff] %v2581
        %v2601 = vld [vmem:[#allocation16] sm:$0xff]
        %v2602 = vmul.f32 %v2601, 0.99
        %v2603 = vadd.f32 %v2602, %v2309
        %v2604 = vld [vmem:[#allocation18] sm:$0xff]
        %v2605 = vmul.f32 %v2604, 0.99
        %v2606 = vadd.f32 %v2605, %v2311
        %v2607 = vpack.c.bf16 %v2318, %v2318
        %v2608 = vpack.c.bf16 %v2603, %v2603
        %2609 = vxpose.xlu0.c.b16.start [1/8] %v2607, 128
        %2610 = vxpose.xlu0.c.b16.cont [2/8] 0, 128
        %2611 = vxpose.xlu0.c.b16.cont [3/8] 0, 128
        %2612 = vxpose.xlu0.c.b16.cont [4/8] 0, 128
        %2613 = vxpose.xlu0.c.b16.cont [5/8] 0, 128
        %2614 = vxpose.xlu0.c.b16.cont [6/8] 0, 128
        %2615 = vxpose.xlu0.c.b16.cont [7/8] 0, 128
        %2616 = vxpose.xlu0.c.b16.end [8/8] 0, 128
        %v2617 = vpop.trf.xlu0
        %v2618 = vpop.trf.xlu0
        %v2619 = vpop.trf.xlu0
        %v2620 = vpop.trf.xlu0
        %v2621 = vpop.trf.xlu0
        %v2622 = vpop.trf.xlu0
        %v2623 = vpop.trf.xlu0
        %v2624 = vpop.trf.xlu0
        %v2626 = vsel %vm599, %v2617, 0
        %v2629 = vsel %vm599, %v2618, 0
        %v2632 = vsel %vm599, %v2619, 0
        %v2635 = vsel %vm599, %v2620, 0
        %v2638 = vsel %vm599, %v2621, 0
        %v2641 = vsel %vm599, %v2622, 0
        %v2644 = vsel %vm599, %v2623, 0
        %v2647 = vsel %vm599, %v2624, 0
        %v2650 = vsel %vm624, %v2608, 0
        %2652 = vmatprep.subr.bf16.mxu0 0
        %2653 = vmatpush1.bf16.msra.mxu0 0
        %2654 = vmatprep.subr.bf16.mxu0 0
        %2655 = vmatpush1.bf16.msra.mxu0 0
        %2656 = vmatprep.subr.bf16.mxu0 0
        %2657 = vmatpush1.bf16.msra.mxu0 0
        %2658 = vmatprep.subr.bf16.mxu0 0
        %2659 = vmatpush1.bf16.msra.mxu0 0
        %2660 = vmatprep.subr.bf16.mxu0 0
        %2661 = vmatpush1.bf16.msra.mxu0 0
        %2662 = vmatprep.subr.bf16.mxu0 0
        %2663 = vmatpush1.bf16.msra.mxu0 0
        %2664 = vmatprep.subr.bf16.mxu0 0
        %2665 = vmatpush1.bf16.msra.mxu0 0
        %2666 = vmatprep.subr.bf16.mxu0 0
        %2667 = vmatpush1.bf16.msra.mxu0 %v2650
        %2668 = vmatprep.subr.bf16.mxu0 0
        %2669 = vmatpush2.bf16.msra.mxu0 0
        %2670 = vmatprep.subr.bf16.mxu0 0
        %2671 = vmatpush2.bf16.msra.mxu0 0
        %2672 = vmatprep.subr.bf16.mxu0 0
        %2673 = vmatpush2.bf16.msra.mxu0 0
        %2674 = vmatprep.subr.bf16.mxu0 0
        %2675 = vmatpush2.bf16.msra.mxu0 0
        %2676 = vmatprep.subr.bf16.mxu0 0
        %2677 = vmatpush2.bf16.msra.mxu0 0
        %2678 = vmatprep.subr.bf16.mxu0 0
        %2679 = vmatpush2.bf16.msra.mxu0 0
        %2680 = vmatprep.subr.bf16.mxu0 0
        %2681 = vmatpush2.bf16.msra.mxu0 0
        %2682 = vmatprep.subr.bf16.mxu0 0
        %2683 = vmatpush2.bf16.msra.mxu0 0
        %2684 = vmatprep.mubr.bf16.mxu0 0
        %2685 = vmatmul.mubr.bf16.gmra.mxu0 %v2626
        %v2686 = vpop.f32.mrf.mxu0
        %v2687 = vadd.f32 0.0, %v2686
        %v2688 = vpop.f32.mrf.mxu0
        %v2689 = vpop.f32.mrf.mxu0
        %v2690 = vadd.f32 0.0, %v2689
        %v2691 = vpop.f32.mrf.mxu0
        %2692 = vmatprep.mubr.bf16.mxu0 0
        %2693 = vmatmul.mubr.bf16.gmra.mxu0 %v2629
        %v2694 = vpop.f32.mrf.mxu0
        %v2695 = vadd.f32 0.0, %v2694
        %v2696 = vpop.f32.mrf.mxu0
        %v2697 = vpop.f32.mrf.mxu0
        %v2698 = vadd.f32 0.0, %v2697
        %v2699 = vpop.f32.mrf.mxu0
        %2700 = vmatprep.mubr.bf16.mxu0 0
        %2701 = vmatmul.mubr.bf16.gmra.mxu0 %v2632
        %v2702 = vpop.f32.mrf.mxu0
        %v2703 = vadd.f32 0.0, %v2702
        %v2704 = vpop.f32.mrf.mxu0
        %v2705 = vpop.f32.mrf.mxu0
        %v2706 = vadd.f32 0.0, %v2705
        %v2707 = vpop.f32.mrf.mxu0
        %2708 = vmatprep.mubr.bf16.mxu0 0
        %2709 = vmatmul.mubr.bf16.gmra.mxu0 %v2635
        %v2710 = vpop.f32.mrf.mxu0
        %v2711 = vadd.f32 0.0, %v2710
        %v2712 = vpop.f32.mrf.mxu0
        %v2713 = vpop.f32.mrf.mxu0
        %v2714 = vadd.f32 0.0, %v2713
        %v2715 = vpop.f32.mrf.mxu0
        %2716 = vmatprep.mubr.bf16.mxu0 0
        %2717 = vmatmul.mubr.bf16.gmra.mxu0 %v2638
        %v2718 = vpop.f32.mrf.mxu0
        %v2719 = vadd.f32 0.0, %v2718
        %v2720 = vpop.f32.mrf.mxu0
        %v2721 = vpop.f32.mrf.mxu0
        %v2722 = vadd.f32 0.0, %v2721
        %v2723 = vpop.f32.mrf.mxu0
        %2724 = vmatprep.mubr.bf16.mxu0 0
        %2725 = vmatmul.mubr.bf16.gmra.mxu0 %v2641
        %v2726 = vpop.f32.mrf.mxu0
        %v2727 = vadd.f32 0.0, %v2726
        %v2728 = vpop.f32.mrf.mxu0
        %v2729 = vpop.f32.mrf.mxu0
        %v2730 = vadd.f32 0.0, %v2729
        %v2731 = vpop.f32.mrf.mxu0
        %2732 = vmatprep.mubr.bf16.mxu0 0
        %2733 = vmatmul.mubr.bf16.gmra.mxu0 %v2644
        %v2734 = vpop.f32.mrf.mxu0
        %v2735 = vadd.f32 0.0, %v2734
        %v2736 = vpop.f32.mrf.mxu0
        %v2737 = vpop.f32.mrf.mxu0
        %v2738 = vadd.f32 0.0, %v2737
        %v2739 = vpop.f32.mrf.mxu0
        %2740 = vmatprep.mubr.bf16.mxu0 0
        %2741 = vmatmul.mubr.bf16.gmra.mxu0 %v2647
        %v2742 = vpop.f32.mrf.mxu0
        %v2743 = vadd.f32 0.0, %v2742
        %v2744 = vpop.f32.mrf.mxu0
        %v2745 = vpop.f32.mrf.mxu0
        %v2746 = vadd.f32 0.0, %v2745
        %v2747 = vpop.f32.mrf.mxu0
        %2748 = vdwg.mxu0
        %s2749 = scalar_lea.vmem %s505, 384 [#allocation10]
        %2750 = vst [vmem:[%s2749] sm:$0xff] %v2687
        %2751 = vst [vmem:[%s2749 + $0x8] sm:$0xff] %v2690
        %2752 = vst [vmem:[%s2749 + $0x10] sm:$0xff] %v2695
        %2753 = vst [vmem:[%s2749 + $0x18] sm:$0xff] %v2698
        %2754 = vst [vmem:[%s2749 + $0x20] sm:$0xff] %v2703
        %2755 = vst [vmem:[%s2749 + $0x28] sm:$0xff] %v2706
        %2756 = vst [vmem:[%s2749 + $0x30] sm:$0xff] %v2711
        %2757 = vst [vmem:[%s2749 + $0x38] sm:$0xff] %v2714
        %2758 = vst [vmem:[%s2749 + $0x40] sm:$0xff] %v2719
        %2759 = vst [vmem:[%s2749 + $0x48] sm:$0xff] %v2722
        %2760 = vst [vmem:[%s2749 + $0x50] sm:$0xff] %v2727
        %2761 = vst [vmem:[%s2749 + $0x58] sm:$0xff] %v2730
        %2762 = vst [vmem:[%s2749 + $0x60] sm:$0xff] %v2735
        %2763 = vst [vmem:[%s2749 + $0x68] sm:$0xff] %v2738
        %2764 = vst [vmem:[%s2749 + $0x70] sm:$0xff] %v2743
        %2765 = vst [vmem:[%s2749 + $0x78] sm:$0xff] %v2746
        %v2766 = vpack.c.bf16 %v2606, %v2606
        %v2768 = vsel %vm624, %v2766, 0
        %2770 = vmatprep.subr.bf16.mxu0 0
        %2771 = vmatpush1.bf16.msra.mxu0 0
        %2772 = vmatprep.subr.bf16.mxu0 0
        %2773 = vmatpush1.bf16.msra.mxu0 0
        %2774 = vmatprep.subr.bf16.mxu0 0
        %2775 = vmatpush1.bf16.msra.mxu0 0
        %2776 = vmatprep.subr.bf16.mxu0 0
        %2777 = vmatpush1.bf16.msra.mxu0 0
        %2778 = vmatprep.subr.bf16.mxu0 0
        %2779 = vmatpush1.bf16.msra.mxu0 0
        %2780 = vmatprep.subr.bf16.mxu0 0
        %2781 = vmatpush1.bf16.msra.mxu0 0
        %2782 = vmatprep.subr.bf16.mxu0 0
        %2783 = vmatpush1.bf16.msra.mxu0 0
        %2784 = vmatprep.subr.bf16.mxu0 0
        %2785 = vmatpush1.bf16.msra.mxu0 %v2768
        %2786 = vmatprep.subr.bf16.mxu0 0
        %2787 = vmatpush2.bf16.msra.mxu0 0
        %2788 = vmatprep.subr.bf16.mxu0 0
        %2789 = vmatpush2.bf16.msra.mxu0 0
        %2790 = vmatprep.subr.bf16.mxu0 0
        %2791 = vmatpush2.bf16.msra.mxu0 0
        %2792 = vmatprep.subr.bf16.mxu0 0
        %2793 = vmatpush2.bf16.msra.mxu0 0
        %2794 = vmatprep.subr.bf16.mxu0 0
        %2795 = vmatpush2.bf16.msra.mxu0 0
        %2796 = vmatprep.subr.bf16.mxu0 0
        %2797 = vmatpush2.bf16.msra.mxu0 0
        %2798 = vmatprep.subr.bf16.mxu0 0
        %2799 = vmatpush2.bf16.msra.mxu0 0
        %2800 = vmatprep.subr.bf16.mxu0 0
        %2801 = vmatpush2.bf16.msra.mxu0 0
        %2802 = vmatprep.mubr.bf16.mxu0 0
        %2803 = vmatmul.mubr.bf16.gmra.mxu0 %v2626
        %v2804 = vpop.f32.mrf.mxu0
        %v2805 = vadd.f32 0.0, %v2804
        %v2806 = vpop.f32.mrf.mxu0
        %v2807 = vpop.f32.mrf.mxu0
        %v2808 = vadd.f32 0.0, %v2807
        %v2809 = vpop.f32.mrf.mxu0
        %2810 = vmatprep.mubr.bf16.mxu0 0
        %2811 = vmatmul.mubr.bf16.gmra.mxu0 %v2629
        %v2812 = vpop.f32.mrf.mxu0
        %v2813 = vadd.f32 0.0, %v2812
        %v2814 = vpop.f32.mrf.mxu0
        %v2815 = vpop.f32.mrf.mxu0
        %v2816 = vadd.f32 0.0, %v2815
        %v2817 = vpop.f32.mrf.mxu0
        %2818 = vmatprep.mubr.bf16.mxu0 0
        %2819 = vmatmul.mubr.bf16.gmra.mxu0 %v2632
        %v2820 = vpop.f32.mrf.mxu0
        %v2821 = vadd.f32 0.0, %v2820
        %v2822 = vpop.f32.mrf.mxu0
        %v2823 = vpop.f32.mrf.mxu0
        %v2824 = vadd.f32 0.0, %v2823
        %v2825 = vpop.f32.mrf.mxu0
        %2826 = vmatprep.mubr.bf16.mxu0 0
        %2827 = vmatmul.mubr.bf16.gmra.mxu0 %v2635
        %v2828 = vpop.f32.mrf.mxu0
        %v2829 = vadd.f32 0.0, %v2828
        %v2830 = vpop.f32.mrf.mxu0
        %v2831 = vpop.f32.mrf.mxu0
        %v2832 = vadd.f32 0.0, %v2831
        %v2833 = vpop.f32.mrf.mxu0
        %2834 = vmatprep.mubr.bf16.mxu0 0
        %2835 = vmatmul.mubr.bf16.gmra.mxu0 %v2638
        %v2836 = vpop.f32.mrf.mxu0
        %v2837 = vadd.f32 0.0, %v2836
        %v2838 = vpop.f32.mrf.mxu0
        %v2839 = vpop.f32.mrf.mxu0
        %v2840 = vadd.f32 0.0, %v2839
        %v2841 = vpop.f32.mrf.mxu0
        %2842 = vmatprep.mubr.bf16.mxu0 0
        %2843 = vmatmul.mubr.bf16.gmra.mxu0 %v2641
        %v2844 = vpop.f32.mrf.mxu0
        %v2845 = vadd.f32 0.0, %v2844
        %v2846 = vpop.f32.mrf.mxu0
        %v2847 = vpop.f32.mrf.mxu0
        %v2848 = vadd.f32 0.0, %v2847
        %v2849 = vpop.f32.mrf.mxu0
        %2850 = vmatprep.mubr.bf16.mxu0 0
        %2851 = vmatmul.mubr.bf16.gmra.mxu0 %v2644
        %v2852 = vpop.f32.mrf.mxu0
        %v2853 = vadd.f32 0.0, %v2852
        %v2854 = vpop.f32.mrf.mxu0
        %v2855 = vpop.f32.mrf.mxu0
        %v2856 = vadd.f32 0.0, %v2855
        %v2857 = vpop.f32.mrf.mxu0
        %2858 = vmatprep.mubr.bf16.mxu0 0
        %2859 = vmatmul.mubr.bf16.gmra.mxu0 %v2647
        %v2860 = vpop.f32.mrf.mxu0
        %v2861 = vadd.f32 0.0, %v2860
        %v2862 = vpop.f32.mrf.mxu0
        %v2863 = vpop.f32.mrf.mxu0
        %v2864 = vadd.f32 0.0, %v2863
        %v2865 = vpop.f32.mrf.mxu0
        %2866 = vdwg.mxu0
        %s2867 = scalar_lea.vmem %s512, 384 [#allocation12]
        %2868 = vst [vmem:[%s2867] sm:$0xff] %v2805
        %2869 = vst [vmem:[%s2867 + $0x8] sm:$0xff] %v2808
        %2870 = vst [vmem:[%s2867 + $0x10] sm:$0xff] %v2813
        %2871 = vst [vmem:[%s2867 + $0x18] sm:$0xff] %v2816
        %2872 = vst [vmem:[%s2867 + $0x20] sm:$0xff] %v2821
        %2873 = vst [vmem:[%s2867 + $0x28] sm:$0xff] %v2824
        %2874 = vst [vmem:[%s2867 + $0x30] sm:$0xff] %v2829
        %2875 = vst [vmem:[%s2867 + $0x38] sm:$0xff] %v2832
        %2876 = vst [vmem:[%s2867 + $0x40] sm:$0xff] %v2837
        %2877 = vst [vmem:[%s2867 + $0x48] sm:$0xff] %v2840
        %2878 = vst [vmem:[%s2867 + $0x50] sm:$0xff] %v2845
        %2879 = vst [vmem:[%s2867 + $0x58] sm:$0xff] %v2848
        %2880 = vst [vmem:[%s2867 + $0x60] sm:$0xff] %v2853
        %2881 = vst [vmem:[%s2867 + $0x68] sm:$0xff] %v2856
        %2882 = vst [vmem:[%s2867 + $0x70] sm:$0xff] %v2861
        %2883 = vst [vmem:[%s2867 + $0x78] sm:$0xff] %v2864
        %s2884 = scalar_lea.vmem %s498, 24 [#allocation9]
        %2885 = vst [vmem:[%s2884] sm:$0xff] %v2318
        %2886 = vst [vmem:[#allocation16] sm:$0xff] %v2603
        %2887 = vst [vmem:[#allocation18] sm:$0xff] %v2606
        %v2888 = vadd.f32 %v2323, %v2318
        %2889 = vst [vmem:[#allocation19] sm:$0xff] %v2888
        %s2890 = sand.u32 %s187, 1
        %s2891 = scalar_lea.sflag [#allocation5], %s2890
        %s2892 = sand.u32 %s187, 1
        %s2893 = smul.addr %s2892, 32
        %s2894 = scalar_lea.vmem [#allocation9], %s2893
        %s2895 = sand.u32 %s38, 1
        %s2896 = scalar_lea.sflag [#allocation11], %s2895
        %s2897 = sand.u32 %s213, 1
        %s2898 = smul.addr %s2897, 512
        %s2899 = scalar_lea.vmem [#allocation10], %s2898
        %s2900 = sand.u32 %s38, 1
        %s2901 = scalar_lea.sflag [#allocation11], %s2900
        %s2902 = sand.u32 %s239, 1
        %s2903 = smul.addr %s2902, 512
        %s2904 = scalar_lea.vmem [#allocation12], %s2903
        %s2905 = sand.u32 %s38, 1
        %s2906 = scalar_lea.sflag [#allocation14], %s2905
        %s2907 = sand.u32 %s265, 1
        %s2908 = smul.addr %s2907, 512
        %s2909 = scalar_lea.vmem [#allocation13], %s2908
        %s2910 = sand.u32 %s38, 1
        %s2911 = scalar_lea.sflag [#allocation14], %s2910
        %s2912 = sand.u32 %s291, 1
        %s2913 = smul.addr %s2912, 512
        %s2914 = scalar_lea.vmem [#allocation15], %s2913
        // Predicated region
        $region61: #{full_stdp_forward.1} parent=43 // pred_check
          %p2915 = pneg %p197
        $region62: #{full_stdp_forward.1} parent=43 // pred_check_branch
          %2917 = sbr.rel (%p2915) target = $region64
        $region63: #{full_stdp_forward.1} parent=43 // pred_region
          %s2918 = smul.u32 4, %s38
          %s2920 = ssub.s32 512, 512
          %2921 = vsyncadd %s2891, %s2920
          %s2922 = smul.addr %s2918, 128
          %s2923 = scalar_lea.hbm %s6, %s2922
          %s2924 = sshll.u32 %s2894, 4
          %s2925 = int_to_ptr.vmem [resolvable:$true] %s2924
          %2930 = dma.vmem_to_hbm [thread:$0]  %s2925, 512, %s2923, %s2891, 128, 128, 8
        $region64: #{full_stdp_forward.1} parent=43 // pred_fallthru
          _
        // Predicated region
        $region65: #{full_stdp_forward.1} parent=43 // pred_check
          %p2931 = pneg %p223
        $region66: #{full_stdp_forward.1} parent=43 // pred_check_branch
          %2933 = sbr.rel (%p2931) target = $region68
        $region67: #{full_stdp_forward.1} parent=43 // pred_region
          %s2934 = smul.u32 4, %s38
          %s2936 = ssub.s32 8192, 8192
          %2937 = vsyncadd %s2896, %s2936
          %s2938 = smul.addr %s2934, 16
          %s2939 = smul.addr %s2938, 128
          %s2940 = scalar_lea.hbm %s7, %s2939
          %s2941 = sshll.u32 %s2899, 4
          %s2942 = int_to_ptr.vmem [resolvable:$true] %s2941
          %2947 = dma.vmem_to_hbm [thread:$0]  %s2942, 8192, %s2940, %s2896, 128, 128, 8
        $region68: #{full_stdp_forward.1} parent=43 // pred_fallthru
          _
        // Predicated region
        $region69: #{full_stdp_forward.1} parent=43 // pred_check
          %p2948 = pneg %p249
        $region70: #{full_stdp_forward.1} parent=43 // pred_check_branch
          %2950 = sbr.rel (%p2948) target = $region72
        $region71: #{full_stdp_forward.1} parent=43 // pred_region
          %s2951 = smul.u32 4, %s38
          %s2953 = ssub.s32 8192, 8192
          %2954 = vsyncadd %s2901, %s2953
          %s2955 = smul.addr %s2951, 16
          %s2956 = smul.addr %s2955, 128
          %s2957 = scalar_lea.hbm %s8, %s2956
          %s2958 = sshll.u32 %s2904, 4
          %s2959 = int_to_ptr.vmem [resolvable:$true] %s2958
          %2964 = dma.vmem_to_hbm [thread:$0]  %s2959, 8192, %s2957, %s2901, 128, 128, 8
        $region72: #{full_stdp_forward.1} parent=43 // pred_fallthru
          _
        // Predicated region
        $region73: #{full_stdp_forward.1} parent=43 // pred_check
          %p2965 = pneg %p275
        $region74: #{full_stdp_forward.1} parent=43 // pred_check_branch
          %2967 = sbr.rel (%p2965) target = $region76
        $region75: #{full_stdp_forward.1} parent=43 // pred_region
          %s2968 = smul.u32 4, %s38
          %s2970 = ssub.s32 8192, 8192
          %2971 = vsyncadd %s2906, %s2970
          %s2972 = smul.addr %s2968, 16
          %s2973 = smul.addr %s2972, 128
          %s2974 = scalar_lea.hbm %s9, %s2973
          %s2975 = sshll.u32 %s2909, 4
          %s2976 = int_to_ptr.vmem [resolvable:$true] %s2975
          %2981 = dma.vmem_to_hbm [thread:$0]  %s2976, 8192, %s2974, %s2906, 128, 128, 8
        $region76: #{full_stdp_forward.1} parent=43 // pred_fallthru
          _
        // Predicated region
        $region77: #{full_stdp_forward.1} parent=43 // pred_check
          %p2982 = pneg %p301
        $region78: #{full_stdp_forward.1} parent=43 // pred_check_branch
          %2984 = sbr.rel (%p2982) target = $region80
        $region79: #{full_stdp_forward.1} parent=43 // pred_region
          %s2985 = smul.u32 4, %s38
          %s2987 = ssub.s32 8192, 8192
          %2988 = vsyncadd %s2911, %s2987
          %s2989 = smul.addr %s2985, 16
          %s2990 = smul.addr %s2989, 128
          %s2991 = scalar_lea.hbm %s10, %s2990
          %s2992 = sshll.u32 %s2914, 4
          %s2993 = int_to_ptr.vmem [resolvable:$true] %s2992
          %2998 = dma.vmem_to_hbm [thread:$0]  %s2993, 8192, %s2991, %s2911, 128, 128, 8
        $region80: #{full_stdp_forward.1} parent=43 // pred_fallthru
          _
        // Predicated region
        $region81: #{full_stdp_forward.1} parent=43 // pred_check
          %p2999 = pneg %p322
        $region82: #{full_stdp_forward.1} parent=43 // pred_check_branch
          %3001 = sbr.rel (%p2999) target = $region84
        $region83: #{full_stdp_forward.1} parent=43 // pred_region
          %s3003 = ssub.s32 128, 128
          %3004 = vsyncadd [#allocation17], %s3003
          %s3006 = sshll.u32 [#allocation16], 4
          %s3007 = int_to_ptr.vmem [resolvable:$true] %s3006
          %3009 = dma.vmem_to_hbm [thread:$0]  %s3007, 128, %s11, [#allocation17]
        $region84: #{full_stdp_forward.1} parent=43 // pred_fallthru
          _
        // Predicated region
        $region85: #{full_stdp_forward.1} parent=43 // pred_check
          %p3010 = pneg %p343
        $region86: #{full_stdp_forward.1} parent=43 // pred_check_branch
          %3012 = sbr.rel (%p3010) target = $region88
        $region87: #{full_stdp_forward.1} parent=43 // pred_region
          %s3014 = ssub.s32 128, 128
          %3015 = vsyncadd [#allocation17], %s3014
          %s3017 = sshll.u32 [#allocation18], 4
          %s3018 = int_to_ptr.vmem [resolvable:$true] %s3017
          %3020 = dma.vmem_to_hbm [thread:$0]  %s3018, 128, %s12, [#allocation17]
        $region88: #{full_stdp_forward.1} parent=43 // pred_fallthru
          _
        // Predicated region
        $region89: #{full_stdp_forward.1} parent=43 // pred_check
          %p3021 = pneg %p364
        $region90: #{full_stdp_forward.1} parent=43 // pred_check_branch
          %3023 = sbr.rel (%p3021) target = $region92
        $region91: #{full_stdp_forward.1} parent=43 // pred_region
          %s3025 = ssub.s32 128, 128
          %3026 = vsyncadd [#allocation20], %s3025
          %s3028 = sshll.u32 [#allocation19], 4
          %s3029 = int_to_ptr.vmem [resolvable:$true] %s3028
          %3031 = dma.vmem_to_hbm [thread:$0]  %s3029, 128, %s13, [#allocation20]
        $region92: #{full_stdp_forward.1} parent=43 // pred_fallthru
          _
        // Predicated region
        $region93: #{full_stdp_forward.1} parent=43 // pred_check
          %p3032 = pneg %p322
        $region94: #{full_stdp_forward.1} parent=43 // pred_check_branch
          %3034 = sbr.rel (%p3032) target = $region96
        $region95: #{full_stdp_forward.1} parent=43 // pred_region
          %3035 = dma.done [#allocation17], 128
        $region96: #{full_stdp_forward.1} parent=43 // pred_fallthru
          _
        // Predicated region
        $region97: #{full_stdp_forward.1} parent=43 // pred_check
          %p3036 = pneg %p343
        $region98: #{full_stdp_forward.1} parent=43 // pred_check_branch
          %3038 = sbr.rel (%p3036) target = $region100
        $region99: #{full_stdp_forward.1} parent=43 // pred_region
          %3039 = dma.done [#allocation17], 128
        $region100: #{full_stdp_forward.1} parent=43 // pred_fallthru
          _
        // Predicated region
        $region101: #{full_stdp_forward.1} parent=43 // pred_check
          %p3040 = pneg %p364
        $region102: #{full_stdp_forward.1} parent=43 // pred_check_branch
          %3042 = sbr.rel (%p3040) target = $region104
        $region103: #{full_stdp_forward.1} parent=43 // pred_region
          %3043 = dma.done [#allocation20], 128
        $region104: #{full_stdp_forward.1} parent=43 // pred_fallthru
          _
      $region44: #{full_stdp_forward.1} parent=5 // pred_fallthru
        _
      %p3044 = scmp.le.s32.totalorder 2, %s33
      // Predicated region
      $region105: #{full_stdp_forward.1} parent=5 // pred_check
        %p3045 = pneg %p3044
      $region106: #{full_stdp_forward.1} parent=5 // pred_check_branch
        %3047 = sbr.rel (%p3045) target = $region108
      $region107: #{full_stdp_forward.1} parent=5 // pred_region
        %s3048 = ssub.s32 %s33, 2
        // Predicated region
        $region109: #{full_stdp_forward.1} parent=107 // pred_check
          %p3049 = pneg %p203
        $region110: #{full_stdp_forward.1} parent=107 // pred_check_branch
          %3051 = sbr.rel (%p3049) target = $region112
        $region111: #{full_stdp_forward.1} parent=107 // pred_region
          %s3052 = sand.u32 %s188, 1
          %s3053 = scalar_lea.sflag [#allocation5], %s3052
          %s3054 = sand.u32 %s188, 1
          %s3055 = smul.addr %s3054, 32
          %s3056 = scalar_lea.vmem [#allocation9], %s3055
          %3057 = dma.done %s3053, 512
        $region112: #{full_stdp_forward.1} parent=107 // pred_fallthru
          _
        // Predicated region
        $region113: #{full_stdp_forward.1} parent=107 // pred_check
          %p3058 = pneg %p229
        $region114: #{full_stdp_forward.1} parent=107 // pred_check_branch
          %3060 = sbr.rel (%p3058) target = $region116
        $region115: #{full_stdp_forward.1} parent=107 // pred_region
          %s3061 = sand.u32 %s39, 1
          %s3062 = scalar_lea.sflag [#allocation11], %s3061
          %s3063 = sand.u32 %s214, 1
          %s3064 = smul.addr %s3063, 512
          %s3065 = scalar_lea.vmem [#allocation10], %s3064
          %3066 = dma.done %s3062, 8192
        $region116: #{full_stdp_forward.1} parent=107 // pred_fallthru
          _
        // Predicated region
        $region117: #{full_stdp_forward.1} parent=107 // pred_check
          %p3067 = pneg %p255
        $region118: #{full_stdp_forward.1} parent=107 // pred_check_branch
          %3069 = sbr.rel (%p3067) target = $region120
        $region119: #{full_stdp_forward.1} parent=107 // pred_region
          %s3070 = sand.u32 %s39, 1
          %s3071 = scalar_lea.sflag [#allocation11], %s3070
          %s3072 = sand.u32 %s240, 1
          %s3073 = smul.addr %s3072, 512
          %s3074 = scalar_lea.vmem [#allocation12], %s3073
          %3075 = dma.done %s3071, 8192
        $region120: #{full_stdp_forward.1} parent=107 // pred_fallthru
          _
        // Predicated region
        $region121: #{full_stdp_forward.1} parent=107 // pred_check
          %p3076 = pneg %p281
        $region122: #{full_stdp_forward.1} parent=107 // pred_check_branch
          %3078 = sbr.rel (%p3076) target = $region124
        $region123: #{full_stdp_forward.1} parent=107 // pred_region
          %s3079 = sand.u32 %s39, 1
          %s3080 = scalar_lea.sflag [#allocation14], %s3079
          %s3081 = sand.u32 %s266, 1
          %s3082 = smul.addr %s3081, 512
          %s3083 = scalar_lea.vmem [#allocation13], %s3082
          %3084 = dma.done %s3080, 8192
        $region124: #{full_stdp_forward.1} parent=107 // pred_fallthru
          _
        // Predicated region
        $region125: #{full_stdp_forward.1} parent=107 // pred_check
          %p3085 = pneg %p307
        $region126: #{full_stdp_forward.1} parent=107 // pred_check_branch
          %3087 = sbr.rel (%p3085) target = $region128
        $region127: #{full_stdp_forward.1} parent=107 // pred_region
          %s3088 = sand.u32 %s39, 1
          %s3089 = scalar_lea.sflag [#allocation14], %s3088
          %s3090 = sand.u32 %s292, 1
          %s3091 = smul.addr %s3090, 512
          %s3092 = scalar_lea.vmem [#allocation15], %s3091
          %3093 = dma.done %s3089, 8192
        $region128: #{full_stdp_forward.1} parent=107 // pred_fallthru
          _
      $region108: #{full_stdp_forward.1} parent=5 // pred_fallthru
        _
    $region6: #{full_stdp_forward.1} parent=1 // loop_footer
      %s37 = sadd.s32 1, %s33
    $region7: #{full_stdp_forward.1} parent=1 // loop_footer_branch
      %32 = sbr.rel target = $region3
    $region8: #{full_stdp_forward.1} parent=1 // loop_exit
      _
    %3094 = vsyncpa [#allocation4], 1
    %s3095 = scalar_lea.sflag [#allocation4], 1
    %3096 = vsyncpa %s3095, 1
    %3097 = vsyncpa [#allocation7], 1
    %3098 = vsyncpa [#allocation5], 1
    %s3099 = scalar_lea.sflag [#allocation5], 1
    %3100 = vsyncpa %s3099, 1
    %3101 = vsyncpa [#allocation11], 1
    %s3102 = scalar_lea.sflag [#allocation11], 1
    %3103 = vsyncpa %s3102, 1
    %3104 = vsyncpa [#allocation14], 1
    %s3105 = scalar_lea.sflag [#allocation14], 1
    %3106 = vsyncpa %s3105, 1
    %3107 = vsyncpa [#allocation17], 1
    %3108 = vsyncpa [#allocation20], 1

</llo_original>
